<compile_context>
chip_gen: v7x
topology: tpu7x:2x2x1
jax: 0.10.0
libtpu: 0.0.40
codegen_flags: <defaults>
</compile_context>

<pallas_src>
import functools

import jax
import jax.numpy as jnp
from jax.experimental import pallas as pl
from jax.experimental.pallas import tpu as pltpu


def _round_up(x, m):
    return (x + m - 1) // m * m


# ----------------------------------------------------------------------------- kernel
def _conv_matmul_kernel(p_ref, w_ref, b_ref, o_ref, acc_ref, *,
                        negative_slope, apply_act, apply_sigmoid):
    """One (tm, tn) output tile of act(P @ W + b), accumulated over the K grid axis."""
    k = pl.program_id(2)

    @pl.when(k == 0)
    def _():
        acc_ref[...] = jnp.zeros_like(acc_ref)

    # Pure MXU work in the K loop body.
    acc_ref[...] += jnp.dot(p_ref[...], w_ref[...],
                            preferred_element_type=jnp.float32)

    # Epilogue only on the final K step: bias, LeakyReLU(0.2), optional sigmoid.
    @pl.when(k == pl.num_programs(2) - 1)
    def _():
        acc = acc_ref[...] + b_ref[...]                 # (tm, tn) + (1, tn)
        if apply_act:
            acc = jnp.where(acc >= 0.0, acc, acc * negative_slope)
        if apply_sigmoid:
            acc = jax.nn.sigmoid(acc)
        o_ref[...] = acc.astype(o_ref.dtype)


# ----------------------------------------------------------------------------- glue
def _im2col(x, kh, kw, stride, pad):
    """x: (N, H, W, C) -> patches (N*Ho*Wo, kh*kw*C), plus (Ho, Wo)."""
    x = jnp.pad(x, ((0, 0), (pad, pad), (pad, pad), (0, 0)))
    n, hp, wp, c = x.shape
    ho = (hp - kh) // stride + 1
    wo = (wp - kw) // stride + 1
    cols = []
    for i in range(kh):
        for j in range(kw):
            cols.append(
                x[:, i:i + (ho - 1) * stride + 1:stride,
                     j:j + (wo - 1) * stride + 1:stride, :]
            )
    p = jnp.stack(cols, axis=3)                 # (N, Ho, Wo, kh*kw, C)
    p = p.reshape(n * ho * wo, kh * kw * c)     # patch order: (i*kw + j)*C + c
    return p, ho, wo


def _tile_plan(m, kdim, cout):
    """(8,128)-aligned tiles; tn spans full padded Cout so P is read once."""
    # M axis (sublanes of the output tile).
    tm = 512 if m >= 512 else 256
    m_pad = _round_up(m, tm)
    # N axis (lanes): whole padded Cout in one lane-dense tile when it fits.
    n_pad = _round_up(cout, 128)
    tn = n_pad if n_pad <= 512 else 512
    n_pad = _round_up(n_pad, tn)
    # K axis: single step for small K, otherwise 512-wide chunks.
    if kdim <= 512:
        k_pad = _round_up(kdim, 128)
        tk = k_pad
    else:
        k_pad = _round_up(kdim, 512)
        tk = 512
    return tm, m_pad, tn, n_pad, tk, k_pad


def conv2d_lrelu_pallas(x, w, b, stride, pad, apply_act, *,
                        negative_slope=0.2, apply_sigmoid=False,
                        operand_dtype=jnp.float32):
    """Conv2d (PyTorch weight layout (Cout, Cin, KH, KW)) + optional LeakyReLU/sigmoid.

    x: (N, H, W, Cin) float32 NHWC.  Returns (N, Ho, Wo, Cout) float32.
    """
    cout, cin, kh, kw = w.shape
    n_batch = x.shape[0]

    p, ho, wo = _im2col(x, kh, kw, stride, pad)
    # Match patch ordering ((i*kw + j)*Cin + c) when flattening the weights.
    wm = jnp.transpose(w, (2, 3, 1, 0)).reshape(kh * kw * cin, cout)

    m, kdim = p.shape
    tm, m_pad, tn, n_pad, tk, k_pad = _tile_plan(m, kdim, cout)

    # Zero-pad operands so every tile load/store is unmasked and lane-dense.
    p_p = jnp.pad(p.astype(operand_dtype), ((0, m_pad - m), (0, k_pad - kdim)))
    w_p = jnp.pad(wm.astype(operand_dtype), ((0, k_pad - kdim), (0, n_pad - cout)))
    b_p = jnp.pad(b.astype(jnp.float32).reshape(1, cout), ((0, 0), (0, n_pad - cout)))

    grid = (m_pad // tm, n_pad // tn, k_pad // tk)

    bytes_per = jnp.dtype(operand_dtype).itemsize
    cost = pl.CostEstimate(
        flops=2 * m_pad * k_pad * n_pad,
        transcendentals=(m_pad * n_pad) if apply_sigmoid else 0,
        bytes_accessed=bytes_per * (m_pad * k_pad + k_pad * n_pad) + 4 * m_pad * n_pad,
    )

    out = pl.pallas_call(
        functools.partial(
            _conv_matmul_kernel,
            negative_slope=negative_slope,
            apply_act=apply_act,
            apply_sigmoid=apply_sigmoid,
        ),
        out_shape=jax.ShapeDtypeStruct((m_pad, n_pad), jnp.float32),
        grid_spec=pltpu.PrefetchScalarGridSpec(
            num_scalar_prefetch=0,
            grid=grid,
            in_specs=[
                pl.BlockSpec((tm, tk), lambda i, j, k: (i, k)),   # P tile
                pl.BlockSpec((tk, tn), lambda i, j, k: (k, j)),   # W tile
                pl.BlockSpec((1, tn), lambda i, j, k: (0, j)),    # bias tile
            ],
            out_specs=pl.BlockSpec((tm, tn), lambda i, j, k: (i, j)),
            scratch_shapes=[pltpu.VMEM((tm, tn), jnp.float32)],
        ),
        compiler_params=pltpu.CompilerParams(
            dimension_semantics=("parallel", "parallel", "arbitrary"),
            vmem_limit_bytes=48 * 1024 * 1024,
        ),
        cost_estimate=cost,
    )(p_p, w_p, b_p)

    out = out[:m, :cout]                        # drop M / lane padding
    return out.reshape(n_batch, ho, wo, cout)


# ----------------------------------------------------------------------------- model
def init_params(key, input_nc, ndf=64, n_layers=3):
    """Deterministic synthetic parameters matching NoNormDiscriminator.__init__.

    Returns (weights, configs, padw) where weights is a pytree of arrays and
    configs is a hashable tuple of (stride, has_leaky_relu) — kept separate so
    the forward pass can be jitted with configs as a static argument.
    """
    kw = 4
    padw = 2  # int(np.ceil((kw - 1) / 2))

    # (cin, cout, stride, has_leaky_relu)
    layer_defs = [(input_nc, ndf, 2, True)]
    nf_mult = 1
    for n in range(1, n_layers):
        nf_mult_prev = nf_mult
        nf_mult = min(2 ** n, 8)
        layer_defs.append((ndf * nf_mult_prev, ndf * nf_mult, 2, True))
    nf_mult_prev = nf_mult
    nf_mult = min(2 ** n_layers, 8)
    layer_defs.append((ndf * nf_mult_prev, ndf * nf_mult, 1, True))
    layer_defs.append((ndf * nf_mult, 1, 1, False))

    weights = []
    configs = []
    for (ci, co, stride, act) in layer_defs:
        key, k_w, k_b = jax.random.split(key, 3)
        w = jax.random.normal(k_w, (co, ci, kw, kw), jnp.float32) * 0.02
        b = jax.random.normal(k_b, (co,), jnp.float32) * 0.01
        weights.append((w, b))
        configs.append((stride, act))
    return weights, tuple(configs), padw


@functools.partial(jax.jit, static_argnums=(2, 3, 4))
def no_norm_discriminator(x_nchw, weights, configs, padw, use_sigmoid=False):
    """Forward pass.  x_nchw: (N, C, H, W) float32 -> (N, 1, Ho, Wo) float32."""
    x = jnp.transpose(x_nchw, (0, 2, 3, 1))     # NCHW -> NHWC
    last = len(weights) - 1
    for idx, ((w, b), (stride, act)) in enumerate(zip(weights, configs)):
        x = conv2d_lrelu_pallas(
            x, w, b, stride, padw, act,
            apply_sigmoid=(use_sigmoid and idx == last),   # sigmoid fused into last kernel
        )
    return jnp.transpose(x, (0, 3, 1, 2))       # NHWC -> NCHW


# ----------------------------------------------------------------------------- main
if __name__ == "__main__":
    key = jax.random.PRNGKey(0)
    k_in, k_par = jax.random.split(key)

    N, C, H, W = 2, 4, 16, 16                   # small but conv-shape-consistent
    ndf, n_layers = 8, 3

    x = jax.random.normal(k_in, (N, C, H, W), jnp.float32)
    weights, configs, padw = init_params(k_par, input_nc=C, ndf=ndf, n_layers=n_layers)

    out = no_norm_discriminator(x, weights, configs, padw, False)
    out = jax.block_until_ready(out)

    # Spatial chain (k=4, pad=2): 16 -> 9 -> 5 -> 3 (three stride-2 convs)
    #                             -> 4 -> 5 (two stride-1 convs), 1 output channel.
    assert out.shape == (2, 1, 5, 5), out.shape
    assert out.dtype == jnp.float32
    assert bool(jnp.all(jnp.isfinite(out)))

    print("KERNEL_OK")
</pallas_src>

<mosaic_0001>
module attributes {stable_mosaic.version = 11 : i64} {
  func.func @_conv_matmul_kernel(%arg0: i32, %arg1: i32, %arg2: i32, %arg3: memref<256x128xf32, #tpu.memory_space<vmem>>, %arg4: memref<128x128xf32, #tpu.memory_space<vmem>>, %arg5: memref<1x128xf32, #tpu.memory_space<vmem>>, %arg6: memref<256x128xf32, #tpu.memory_space<vmem>>, %arg7: memref<256x128xf32, #tpu.memory_space<vmem>>) attributes {dimension_semantics = [#tpu.dimension_semantics<parallel>, #tpu.dimension_semantics<parallel>, #tpu.dimension_semantics<arbitrary>], iteration_bounds = array<i64: 1, 1, 1>, scalar_prefetch = 0 : i64, scratch_operands = 1 : i64, tpu.core_type = #tpu.core_type<tc>, window_params = [{transform_indices = @transform_0, window_bounds = array<i64: 256, 128>}, {transform_indices = @transform_1, window_bounds = array<i64: 128, 128>}, {transform_indices = @transform_2, window_bounds = array<i64: 1, 128>}, {transform_indices = @transform_3, window_bounds = array<i64: 256, 128>}]} {
    %c0_i32 = arith.constant 0 : i32
    %0 = arith.cmpi eq, %arg2, %c0_i32 : i32
    %1 = arith.extui %0 : i1 to i32
    %c0_i32_0 = arith.constant 0 : i32
    %2 = arith.cmpi ne, %1, %c0_i32_0 : i32
    scf.if %2 {
      %cst_10 = arith.constant 0.000000e+00 : f32
      %12 = vector.broadcast %cst_10 : f32 to vector<256x128xf32>
      %c0_11 = arith.constant 0 : index
      %c0_12 = arith.constant 0 : index
      %13 = vector.load %arg7[%c0_11, %c0_12] : memref<256x128xf32, #tpu.memory_space<vmem>>, vector<256x128xf32>
      tpu.vector_store %arg7[%c0_11, %c0_12], %12 {strides = array<i32>} : memref<256x128xf32, #tpu.memory_space<vmem>>, vector<256x128xf32>,
    } else {
    }
    %c0 = arith.constant 0 : index
    %c0_1 = arith.constant 0 : index
    %3 = vector.load %arg7[%c0, %c0_1] : memref<256x128xf32, #tpu.memory_space<vmem>>, vector<256x128xf32>
    %c0_2 = arith.constant 0 : index
    %c0_3 = arith.constant 0 : index
    %4 = vector.load %arg3[%c0_2, %c0_3] : memref<256x128xf32, #tpu.memory_space<vmem>>, vector<256x128xf32>
    %c0_4 = arith.constant 0 : index
    %c0_5 = arith.constant 0 : index
    %5 = vector.load %arg4[%c0_4, %c0_5] : memref<128x128xf32, #tpu.memory_space<vmem>>, vector<128x128xf32>
    %cst = arith.constant dense<0.000000e+00> : vector<256x128xf32>
    %6 = tpu.matmul %4, %5, %cst {dimension_numbers = #tpu.dot_dimension_numbers<[1], [0], [0], [1], [0, 0, 1, 1], [], []>} : vector<256x128xf32>, vector<128x128xf32>, vector<256x128xf32> -> vector<256x128xf32>
    %7 = arith.addf %3, %6 : vector<256x128xf32>
    %c0_6 = arith.constant 0 : index
    %c0_7 = arith.constant 0 : index
    %8 = vector.load %arg7[%c0_6, %c0_7] : memref<256x128xf32, #tpu.memory_space<vmem>>, vector<256x128xf32>
    tpu.vector_store %arg7[%c0_6, %c0_7], %7 {strides = array<i32>} : memref<256x128xf32, #tpu.memory_space<vmem>>, vector<256x128xf32>,
    %c0_i32_8 = arith.constant 0 : i32
    %9 = arith.cmpi eq, %arg2, %c0_i32_8 : i32
    %10 = arith.extui %9 : i1 to i32
    %c0_i32_9 = arith.constant 0 : i32
    %11 = arith.cmpi ne, %10, %c0_i32_9 : i32
    scf.if %11 {
      %c0_10 = arith.constant 0 : index
      %c0_11 = arith.constant 0 : index
      %12 = vector.load %arg7[%c0_10, %c0_11] : memref<256x128xf32, #tpu.memory_space<vmem>>, vector<256x128xf32>
      %c0_12 = arith.constant 0 : index
      %c0_13 = arith.constant 0 : index
      %13 = vector.load %arg5[%c0_12, %c0_13] : memref<1x128xf32, #tpu.memory_space<vmem>>, vector<1x128xf32>
      %14 = vector.broadcast %13 : vector<1x128xf32> to vector<256x128xf32>
      %15 = arith.addf %12, %14 : vector<256x128xf32>
      %cst_14 = arith.constant 0.000000e+00 : f32
      %16 = vector.broadcast %cst_14 : f32 to vector<256x128xf32>
      %17 = arith.cmpf oge, %15, %16 : vector<256x128xf32>
      %cst_15 = arith.constant 2.000000e-01 : f32
      %18 = vector.broadcast %cst_15 : f32 to vector<256x128xf32>
      %19 = arith.mulf %15, %18 : vector<256x128xf32>
      %20 = arith.select %17, %15, %19 : vector<256x128xi1>, vector<256x128xf32>
      %c0_16 = arith.constant 0 : index
      %c0_17 = arith.constant 0 : index
      %21 = vector.load %arg6[%c0_16, %c0_17] : memref<256x128xf32, #tpu.memory_space<vmem>>, vector<256x128xf32>
      tpu.vector_store %arg6[%c0_16, %c0_17], %20 {strides = array<i32>} : memref<256x128xf32, #tpu.memory_space<vmem>>, vector<256x128xf32>,
    } else {
    }
    return
  }
  func.func @transform_0(%arg0: i32, %arg1: i32, %arg2: i32) -> (i32, i32) {
    %c0_i32 = arith.constant 0 : i32
    return %arg0, %arg2 : i32, i32
  }
  func.func @transform_1(%arg0: i32, %arg1: i32, %arg2: i32) -> (i32, i32) {
    %c0_i32 = arith.constant 0 : i32
    return %arg2, %arg1 : i32, i32
  }
  func.func @transform_2(%arg0: i32, %arg1: i32, %arg2: i32) -> (i32, i32) {
    %c0_i32 = arith.constant 0 : i32
    %c0_i32_0 = arith.constant 0 : i32
    return %c0_i32, %arg1 : i32, i32
  }
  func.func @transform_3(%arg0: i32, %arg1: i32, %arg2: i32) -> (i32, i32) {
    %c0_i32 = arith.constant 0 : i32
    return %arg0, %arg1 : i32, i32
  }
}

module attributes {stable_mosaic.version = 11 : i64} {
  func.func @_conv_matmul_kernel(%arg0: i32, %arg1: i32, %arg2: i32, %arg3: memref<256x256xf32, #tpu.memory_space<vmem>>, %arg4: memref<256x128xf32, #tpu.memory_space<vmem>>, %arg5: memref<1x128xf32, #tpu.memory_space<vmem>>, %arg6: memref<256x128xf32, #tpu.memory_space<vmem>>, %arg7: memref<256x128xf32, #tpu.memory_space<vmem>>) attributes {dimension_semantics = [#tpu.dimension_semantics<parallel>, #tpu.dimension_semantics<parallel>, #tpu.dimension_semantics<arbitrary>], iteration_bounds = array<i64: 1, 1, 1>, scalar_prefetch = 0 : i64, scratch_operands = 1 : i64, tpu.core_type = #tpu.core_type<tc>, window_params = [{transform_indices = @transform_0, window_bounds = array<i64: 256, 256>}, {transform_indices = @transform_1, window_bounds = array<i64: 256, 128>}, {transform_indices = @transform_2, window_bounds = array<i64: 1, 128>}, {transform_indices = @transform_3, window_bounds = array<i64: 256, 128>}]} {
    %c0_i32 = arith.constant 0 : i32
    %0 = arith.cmpi eq, %arg2, %c0_i32 : i32
    %1 = arith.extui %0 : i1 to i32
    %c0_i32_0 = arith.constant 0 : i32
    %2 = arith.cmpi ne, %1, %c0_i32_0 : i32
    scf.if %2 {
      %cst_10 = arith.constant 0.000000e+00 : f32
      %12 = vector.broadcast %cst_10 : f32 to vector<256x128xf32>
      %c0_11 = arith.constant 0 : index
      %c0_12 = arith.constant 0 : index
      %13 = vector.load %arg7[%c0_11, %c0_12] : memref<256x128xf32, #tpu.memory_space<vmem>>, vector<256x128xf32>
      tpu.vector_store %arg7[%c0_11, %c0_12], %12 {strides = array<i32>} : memref<256x128xf32, #tpu.memory_space<vmem>>, vector<256x128xf32>,
    } else {
    }
    %c0 = arith.constant 0 : index
    %c0_1 = arith.constant 0 : index
    %3 = vector.load %arg7[%c0, %c0_1] : memref<256x128xf32, #tpu.memory_space<vmem>>, vector<256x128xf32>
    %c0_2 = arith.constant 0 : index
    %c0_3 = arith.constant 0 : index
    %4 = vector.load %arg3[%c0_2, %c0_3] : memref<256x256xf32, #tpu.memory_space<vmem>>, vector<256x256xf32>
    %c0_4 = arith.constant 0 : index
    %c0_5 = arith.constant 0 : index
    %5 = vector.load %arg4[%c0_4, %c0_5] : memref<256x128xf32, #tpu.memory_space<vmem>>, vector<256x128xf32>
    %cst = arith.constant dense<0.000000e+00> : vector<256x128xf32>
    %6 = tpu.matmul %4, %5, %cst {dimension_numbers = #tpu.dot_dimension_numbers<[1], [0], [0], [1], [0, 0, 1, 1], [], []>} : vector<256x256xf32>, vector<256x128xf32>, vector<256x128xf32> -> vector<256x128xf32>
    %7 = arith.addf %3, %6 : vector<256x128xf32>
    %c0_6 = arith.constant 0 : index
    %c0_7 = arith.constant 0 : index
    %8 = vector.load %arg7[%c0_6, %c0_7] : memref<256x128xf32, #tpu.memory_space<vmem>>, vector<256x128xf32>
    tpu.vector_store %arg7[%c0_6, %c0_7], %7 {strides = array<i32>} : memref<256x128xf32, #tpu.memory_space<vmem>>, vector<256x128xf32>,
    %c0_i32_8 = arith.constant 0 : i32
    %9 = arith.cmpi eq, %arg2, %c0_i32_8 : i32
    %10 = arith.extui %9 : i1 to i32
    %c0_i32_9 = arith.constant 0 : i32
    %11 = arith.cmpi ne, %10, %c0_i32_9 : i32
    scf.if %11 {
      %c0_10 = arith.constant 0 : index
      %c0_11 = arith.constant 0 : index
      %12 = vector.load %arg7[%c0_10, %c0_11] : memref<256x128xf32, #tpu.memory_space<vmem>>, vector<256x128xf32>
      %c0_12 = arith.constant 0 : index
      %c0_13 = arith.constant 0 : index
      %13 = vector.load %arg5[%c0_12, %c0_13] : memref<1x128xf32, #tpu.memory_space<vmem>>, vector<1x128xf32>
      %14 = vector.broadcast %13 : vector<1x128xf32> to vector<256x128xf32>
      %15 = arith.addf %12, %14 : vector<256x128xf32>
      %cst_14 = arith.constant 0.000000e+00 : f32
      %16 = vector.broadcast %cst_14 : f32 to vector<256x128xf32>
      %17 = arith.cmpf oge, %15, %16 : vector<256x128xf32>
      %cst_15 = arith.constant 2.000000e-01 : f32
      %18 = vector.broadcast %cst_15 : f32 to vector<256x128xf32>
      %19 = arith.mulf %15, %18 : vector<256x128xf32>
      %20 = arith.select %17, %15, %19 : vector<256x128xi1>, vector<256x128xf32>
      %c0_16 = arith.constant 0 : index
      %c0_17 = arith.constant 0 : index
      %21 = vector.load %arg6[%c0_16, %c0_17] : memref<256x128xf32, #tpu.memory_space<vmem>>, vector<256x128xf32>
      tpu.vector_store %arg6[%c0_16, %c0_17], %20 {strides = array<i32>} : memref<256x128xf32, #tpu.memory_space<vmem>>, vector<256x128xf32>,
    } else {
    }
    return
  }
  func.func @transform_0(%arg0: i32, %arg1: i32, %arg2: i32) -> (i32, i32) {
    %c0_i32 = arith.constant 0 : i32
    return %arg0, %arg2 : i32, i32
  }
  func.func @transform_1(%arg0: i32, %arg1: i32, %arg2: i32) -> (i32, i32) {
    %c0_i32 = arith.constant 0 : i32
    return %arg2, %arg1 : i32, i32
  }
  func.func @transform_2(%arg0: i32, %arg1: i32, %arg2: i32) -> (i32, i32) {
    %c0_i32 = arith.constant 0 : i32
    %c0_i32_0 = arith.constant 0 : i32
    return %c0_i32, %arg1 : i32, i32
  }
  func.func @transform_3(%arg0: i32, %arg1: i32, %arg2: i32) -> (i32, i32) {
    %c0_i32 = arith.constant 0 : i32
    return %arg0, %arg1 : i32, i32
  }
}

module attributes {stable_mosaic.version = 11 : i64} {
  func.func @_conv_matmul_kernel(%arg0: i32, %arg1: i32, %arg2: i32, %arg3: memref<256x512xf32, #tpu.memory_space<vmem>>, %arg4: memref<512x128xf32, #tpu.memory_space<vmem>>, %arg5: memref<1x128xf32, #tpu.memory_space<vmem>>, %arg6: memref<256x128xf32, #tpu.memory_space<vmem>>, %arg7: memref<256x128xf32, #tpu.memory_space<vmem>>) attributes {dimension_semantics = [#tpu.dimension_semantics<parallel>, #tpu.dimension_semantics<parallel>, #tpu.dimension_semantics<arbitrary>], iteration_bounds = array<i64: 1, 1, 1>, scalar_prefetch = 0 : i64, scratch_operands = 1 : i64, tpu.core_type = #tpu.core_type<tc>, window_params = [{transform_indices = @transform_0, window_bounds = array<i64: 256, 512>}, {transform_indices = @transform_1, window_bounds = array<i64: 512, 128>}, {transform_indices = @transform_2, window_bounds = array<i64: 1, 128>}, {transform_indices = @transform_3, window_bounds = array<i64: 256, 128>}]} {
    %c0_i32 = arith.constant 0 : i32
    %0 = arith.cmpi eq, %arg2, %c0_i32 : i32
    %1 = arith.extui %0 : i1 to i32
    %c0_i32_0 = arith.constant 0 : i32
    %2 = arith.cmpi ne, %1, %c0_i32_0 : i32
    scf.if %2 {
      %cst_10 = arith.constant 0.000000e+00 : f32
      %12 = vector.broadcast %cst_10 : f32 to vector<256x128xf32>
      %c0_11 = arith.constant 0 : index
      %c0_12 = arith.constant 0 : index
      %13 = vector.load %arg7[%c0_11, %c0_12] : memref<256x128xf32, #tpu.memory_space<vmem>>, vector<256x128xf32>
      tpu.vector_store %arg7[%c0_11, %c0_12], %12 {strides = array<i32>} : memref<256x128xf32, #tpu.memory_space<vmem>>, vector<256x128xf32>,
    } else {
    }
    %c0 = arith.constant 0 : index
    %c0_1 = arith.constant 0 : index
    %3 = vector.load %arg7[%c0, %c0_1] : memref<256x128xf32, #tpu.memory_space<vmem>>, vector<256x128xf32>
    %c0_2 = arith.constant 0 : index
    %c0_3 = arith.constant 0 : index
    %4 = vector.load %arg3[%c0_2, %c0_3] : memref<256x512xf32, #tpu.memory_space<vmem>>, vector<256x512xf32>
    %c0_4 = arith.constant 0 : index
    %c0_5 = arith.constant 0 : index
    %5 = vector.load %arg4[%c0_4, %c0_5] : memref<512x128xf32, #tpu.memory_space<vmem>>, vector<512x128xf32>
    %cst = arith.constant dense<0.000000e+00> : vector<256x128xf32>
    %6 = tpu.matmul %4, %5, %cst {dimension_numbers = #tpu.dot_dimension_numbers<[1], [0], [0], [1], [0, 0, 1, 1], [], []>} : vector<256x512xf32>, vector<512x128xf32>, vector<256x128xf32> -> vector<256x128xf32>
    %7 = arith.addf %3, %6 : vector<256x128xf32>
    %c0_6 = arith.constant 0 : index
    %c0_7 = arith.constant 0 : index
    %8 = vector.load %arg7[%c0_6, %c0_7] : memref<256x128xf32, #tpu.memory_space<vmem>>, vector<256x128xf32>
    tpu.vector_store %arg7[%c0_6, %c0_7], %7 {strides = array<i32>} : memref<256x128xf32, #tpu.memory_space<vmem>>, vector<256x128xf32>,
    %c0_i32_8 = arith.constant 0 : i32
    %9 = arith.cmpi eq, %arg2, %c0_i32_8 : i32
    %10 = arith.extui %9 : i1 to i32
    %c0_i32_9 = arith.constant 0 : i32
    %11 = arith.cmpi ne, %10, %c0_i32_9 : i32
    scf.if %11 {
      %c0_10 = arith.constant 0 : index
      %c0_11 = arith.constant 0 : index
      %12 = vector.load %arg7[%c0_10, %c0_11] : memref<256x128xf32, #tpu.memory_space<vmem>>, vector<256x128xf32>
      %c0_12 = arith.constant 0 : index
      %c0_13 = arith.constant 0 : index
      %13 = vector.load %arg5[%c0_12, %c0_13] : memref<1x128xf32, #tpu.memory_space<vmem>>, vector<1x128xf32>
      %14 = vector.broadcast %13 : vector<1x128xf32> to vector<256x128xf32>
      %15 = arith.addf %12, %14 : vector<256x128xf32>
      %cst_14 = arith.constant 0.000000e+00 : f32
      %16 = vector.broadcast %cst_14 : f32 to vector<256x128xf32>
      %17 = arith.cmpf oge, %15, %16 : vector<256x128xf32>
      %cst_15 = arith.constant 2.000000e-01 : f32
      %18 = vector.broadcast %cst_15 : f32 to vector<256x128xf32>
      %19 = arith.mulf %15, %18 : vector<256x128xf32>
      %20 = arith.select %17, %15, %19 : vector<256x128xi1>, vector<256x128xf32>
      %c0_16 = arith.constant 0 : index
      %c0_17 = arith.constant 0 : index
      %21 = vector.load %arg6[%c0_16, %c0_17] : memref<256x128xf32, #tpu.memory_space<vmem>>, vector<256x128xf32>
      tpu.vector_store %arg6[%c0_16, %c0_17], %20 {strides = array<i32>} : memref<256x128xf32, #tpu.memory_space<vmem>>, vector<256x128xf32>,
    } else {
    }
    return
  }
  func.func @transform_0(%arg0: i32, %arg1: i32, %arg2: i32) -> (i32, i32) {
    %c0_i32 = arith.constant 0 : i32
    return %arg0, %arg2 : i32, i32
  }
  func.func @transform_1(%arg0: i32, %arg1: i32, %arg2: i32) -> (i32, i32) {
    %c0_i32 = arith.constant 0 : i32
    return %arg2, %arg1 : i32, i32
  }
  func.func @transform_2(%arg0: i32, %arg1: i32, %arg2: i32) -> (i32, i32) {
    %c0_i32 = arith.constant 0 : i32
    %c0_i32_0 = arith.constant 0 : i32
    return %c0_i32, %arg1 : i32, i32
  }
  func.func @transform_3(%arg0: i32, %arg1: i32, %arg2: i32) -> (i32, i32) {
    %c0_i32 = arith.constant 0 : i32
    return %arg0, %arg1 : i32, i32
  }
}

module attributes {stable_mosaic.version = 11 : i64} {
  func.func @_conv_matmul_kernel(%arg0: i32, %arg1: i32, %arg2: i32, %arg3: memref<256x512xf32, #tpu.memory_space<vmem>>, %arg4: memref<512x128xf32, #tpu.memory_space<vmem>>, %arg5: memref<1x128xf32, #tpu.memory_space<vmem>>, %arg6: memref<256x128xf32, #tpu.memory_space<vmem>>, %arg7: memref<256x128xf32, #tpu.memory_space<vmem>>) attributes {dimension_semantics = [#tpu.dimension_semantics<parallel>, #tpu.dimension_semantics<parallel>, #tpu.dimension_semantics<arbitrary>], iteration_bounds = array<i64: 1, 1, 2>, scalar_prefetch = 0 : i64, scratch_operands = 1 : i64, tpu.core_type = #tpu.core_type<tc>, window_params = [{transform_indices = @transform_0, window_bounds = array<i64: 256, 512>}, {transform_indices = @transform_1, window_bounds = array<i64: 512, 128>}, {transform_indices = @transform_2, window_bounds = array<i64: 1, 128>}, {transform_indices = @transform_3, window_bounds = array<i64: 256, 128>}]} {
    %c0_i32 = arith.constant 0 : i32
    %0 = arith.cmpi eq, %arg2, %c0_i32 : i32
    %1 = arith.extui %0 : i1 to i32
    %c0_i32_0 = arith.constant 0 : i32
    %2 = arith.cmpi ne, %1, %c0_i32_0 : i32
    scf.if %2 {
      %cst_9 = arith.constant 0.000000e+00 : f32
      %12 = vector.broadcast %cst_9 : f32 to vector<256x128xf32>
      %c0_10 = arith.constant 0 : index
      %c0_11 = arith.constant 0 : index
      %13 = vector.load %arg7[%c0_10, %c0_11] : memref<256x128xf32, #tpu.memory_space<vmem>>, vector<256x128xf32>
      tpu.vector_store %arg7[%c0_10, %c0_11], %12 {strides = array<i32>} : memref<256x128xf32, #tpu.memory_space<vmem>>, vector<256x128xf32>,
    } else {
    }
    %c0 = arith.constant 0 : index
    %c0_1 = arith.constant 0 : index
    %3 = vector.load %arg7[%c0, %c0_1] : memref<256x128xf32, #tpu.memory_space<vmem>>, vector<256x128xf32>
    %c0_2 = arith.constant 0 : index
    %c0_3 = arith.constant 0 : index
    %4 = vector.load %arg3[%c0_2, %c0_3] : memref<256x512xf32, #tpu.memory_space<vmem>>, vector<256x512xf32>
    %c0_4 = arith.constant 0 : index
    %c0_5 = arith.constant 0 : index
    %5 = vector.load %arg4[%c0_4, %c0_5] : memref<512x128xf32, #tpu.memory_space<vmem>>, vector<512x128xf32>
    %cst = arith.constant dense<0.000000e+00> : vector<256x128xf32>
    %6 = tpu.matmul %4, %5, %cst {dimension_numbers = #tpu.dot_dimension_numbers<[1], [0], [0], [1], [0, 0, 1, 1], [], []>} : vector<256x512xf32>, vector<512x128xf32>, vector<256x128xf32> -> vector<256x128xf32>
    %7 = arith.addf %3, %6 : vector<256x128xf32>
    %c0_6 = arith.constant 0 : index
    %c0_7 = arith.constant 0 : index
    %8 = vector.load %arg7[%c0_6, %c0_7] : memref<256x128xf32, #tpu.memory_space<vmem>>, vector<256x128xf32>
    tpu.vector_store %arg7[%c0_6, %c0_7], %7 {strides = array<i32>} : memref<256x128xf32, #tpu.memory_space<vmem>>, vector<256x128xf32>,
    %c1_i32 = arith.constant 1 : i32
    %9 = arith.cmpi eq, %arg2, %c1_i32 : i32
    %10 = arith.extui %9 : i1 to i32
    %c0_i32_8 = arith.constant 0 : i32
    %11 = arith.cmpi ne, %10, %c0_i32_8 : i32
    scf.if %11 {
      %c0_9 = arith.constant 0 : index
      %c0_10 = arith.constant 0 : index
      %12 = vector.load %arg7[%c0_9, %c0_10] : memref<256x128xf32, #tpu.memory_space<vmem>>, vector<256x128xf32>
      %c0_11 = arith.constant 0 : index
      %c0_12 = arith.constant 0 : index
      %13 = vector.load %arg5[%c0_11, %c0_12] : memref<1x128xf32, #tpu.memory_space<vmem>>, vector<1x128xf32>
      %14 = vector.broadcast %13 : vector<1x128xf32> to vector<256x128xf32>
      %15 = arith.addf %12, %14 : vector<256x128xf32>
      %c0_13 = arith.constant 0 : index
      %c0_14 = arith.constant 0 : index
      %16 = vector.load %arg6[%c0_13, %c0_14] : memref<256x128xf32, #tpu.memory_space<vmem>>, vector<256x128xf32>
      tpu.vector_store %arg6[%c0_13, %c0_14], %15 {strides = array<i32>} : memref<256x128xf32, #tpu.memory_space<vmem>>, vector<256x128xf32>,
    } else {
    }
    return
  }
  func.func @transform_0(%arg0: i32, %arg1: i32, %arg2: i32) -> (i32, i32) {
    %c0_i32 = arith.constant 0 : i32
    return %arg0, %arg2 : i32, i32
  }
  func.func @transform_1(%arg0: i32, %arg1: i32, %arg2: i32) -> (i32, i32) {
    %c0_i32 = arith.constant 0 : i32
    return %arg2, %arg1 : i32, i32
  }
  func.func @transform_2(%arg0: i32, %arg1: i32, %arg2: i32) -> (i32, i32) {
    %c0_i32 = arith.constant 0 : i32
    %c0_i32_0 = arith.constant 0 : i32
    return %c0_i32, %arg1 : i32, i32
  }
  func.func @transform_3(%arg0: i32, %arg1: i32, %arg2: i32) -> (i32, i32) {
    %c0_i32 = arith.constant 0 : i32
    return %arg0, %arg1 : i32, i32
  }
}

</mosaic_0001>

<llo_original>
// kernel: no_norm_discriminator.5
$region0: #{no_norm_discriminator.5}
  #allocation0 [shape = 'u32[]', space=smem, size = 0x4, offset = 0x4, fixed_abs, tag = 'smem constant byte address 0x4 - core index']
  #allocation1 [shape = 'u32[144,128]{1,0:T(1,128)}', space=vmem, size = 0x12000, scoped, tag = 'internal scratch']
  #allocation2 [shape = 'f32[256,128]{1,0:T(8,128)}', space=vmem, size = 0x20000, scoped, tag = 'scratch operand']
  %s0 = inlined_call_operand.vmem [shape: f32[256,128], index: 0, kind: input, shape index: {}]
  %s1 = inlined_call_operand.vmem [shape: f32[128,128], index: 1, kind: input, shape index: {}]
  %s2 = inlined_call_operand.vmem [shape: f32[1,128], index: 2, kind: input, shape index: {}]
  %s3 = inlined_call_operand.vmem [shape: f32[256,128], index: 3, kind: output, shape index: {}]
  %s4 = sld [smem:[#allocation0]]
  $region30: #{no_norm_discriminator.5} parent=0
    _
  %s6 = ssub.s32 1, %s4
  %s7 = scalar_select 0, %s6, %s4
  // Predicated region
  $region2: #{no_norm_discriminator.5} parent=0 // pred_check
    _
  $region3: #{no_norm_discriminator.5} parent=0 // pred_check_branch
    %9 = sbr.rel (0) target = $region5
  $region4: #{no_norm_discriminator.5} parent=0 // pred_region
    _
  $region5: #{no_norm_discriminator.5} parent=0 // pred_fallthru
    _
  // Predicated region
  $region6: #{no_norm_discriminator.5} parent=0 // pred_check
    _
  $region7: #{no_norm_discriminator.5} parent=0 // pred_check_branch
    %11 = sbr.rel (0) target = $region9
  $region8: #{no_norm_discriminator.5} parent=0 // pred_region
    _
  $region9: #{no_norm_discriminator.5} parent=0 // pred_fallthru
    _
  // Predicated region
  $region10: #{no_norm_discriminator.5} parent=0 // pred_check
    _
  $region11: #{no_norm_discriminator.5} parent=0 // pred_check_branch
    %13 = sbr.rel (0) target = $region13
  $region12: #{no_norm_discriminator.5} parent=0 // pred_region
    _
  $region13: #{no_norm_discriminator.5} parent=0 // pred_fallthru
    _
  %p14 = scmp.eq.s32.totalorder 0, 0
  // Predicated region
  $region14: #{no_norm_discriminator.5} parent=0 // pred_check
    %p15 = pneg %p14
  $region15: #{no_norm_discriminator.5} parent=0 // pred_check_branch
    %17 = sbr.rel (%p15) target = $region17
  $region16: #{no_norm_discriminator.5} parent=0 // pred_region
    %18 = vst [vmem:[#allocation2] sm:$0xff] 0.0
    %19 = vst [vmem:[#allocation2 + $0x8] sm:$0xff] 0.0
    %20 = vst [vmem:[#allocation2 + $0x10] sm:$0xff] 0.0
    %21 = vst [vmem:[#allocation2 + $0x18] sm:$0xff] 0.0
    %22 = vst [vmem:[#allocation2 + $0x20] sm:$0xff] 0.0
    %23 = vst [vmem:[#allocation2 + $0x28] sm:$0xff] 0.0
    %24 = vst [vmem:[#allocation2 + $0x30] sm:$0xff] 0.0
    %25 = vst [vmem:[#allocation2 + $0x38] sm:$0xff] 0.0
    %26 = vst [vmem:[#allocation2 + $0x40] sm:$0xff] 0.0
    %27 = vst [vmem:[#allocation2 + $0x48] sm:$0xff] 0.0
    %28 = vst [vmem:[#allocation2 + $0x50] sm:$0xff] 0.0
    %29 = vst [vmem:[#allocation2 + $0x58] sm:$0xff] 0.0
    %30 = vst [vmem:[#allocation2 + $0x60] sm:$0xff] 0.0
    %31 = vst [vmem:[#allocation2 + $0x68] sm:$0xff] 0.0
    %32 = vst [vmem:[#allocation2 + $0x70] sm:$0xff] 0.0
    %33 = vst [vmem:[#allocation2 + $0x78] sm:$0xff] 0.0
    %34 = vst [vmem:[#allocation2 + $0x80] sm:$0xff] 0.0
    %35 = vst [vmem:[#allocation2 + $0x88] sm:$0xff] 0.0
    %36 = vst [vmem:[#allocation2 + $0x90] sm:$0xff] 0.0
    %37 = vst [vmem:[#allocation2 + $0x98] sm:$0xff] 0.0
    %38 = vst [vmem:[#allocation2 + $0xa0] sm:$0xff] 0.0
    %39 = vst [vmem:[#allocation2 + $0xa8] sm:$0xff] 0.0
    %40 = vst [vmem:[#allocation2 + $0xb0] sm:$0xff] 0.0
    %41 = vst [vmem:[#allocation2 + $0xb8] sm:$0xff] 0.0
    %42 = vst [vmem:[#allocation2 + $0xc0] sm:$0xff] 0.0
    %43 = vst [vmem:[#allocation2 + $0xc8] sm:$0xff] 0.0
    %44 = vst [vmem:[#allocation2 + $0xd0] sm:$0xff] 0.0
    %45 = vst [vmem:[#allocation2 + $0xd8] sm:$0xff] 0.0
    %46 = vst [vmem:[#allocation2 + $0xe0] sm:$0xff] 0.0
    %47 = vst [vmem:[#allocation2 + $0xe8] sm:$0xff] 0.0
    %48 = vst [vmem:[#allocation2 + $0xf0] sm:$0xff] 0.0
    %49 = vst [vmem:[#allocation2 + $0xf8] sm:$0xff] 0.0
  $region17: #{no_norm_discriminator.5} parent=0 // pred_fallthru
    _
  %v50 = vld [vmem:[#allocation2] sm:$0xff]
  %v51 = vld [vmem:[#allocation2 + $0x8] sm:$0xff]
  %v52 = vld [vmem:[#allocation2 + $0x10] sm:$0xff]
  %v53 = vld [vmem:[#allocation2 + $0x18] sm:$0xff]
  %v54 = vld [vmem:[#allocation2 + $0x20] sm:$0xff]
  %v55 = vld [vmem:[#allocation2 + $0x28] sm:$0xff]
  %v56 = vld [vmem:[#allocation2 + $0x30] sm:$0xff]
  %v57 = vld [vmem:[#allocation2 + $0x38] sm:$0xff]
  %v58 = vld [vmem:[#allocation2 + $0x40] sm:$0xff]
  %v59 = vld [vmem:[#allocation2 + $0x48] sm:$0xff]
  %v60 = vld [vmem:[#allocation2 + $0x50] sm:$0xff]
  %v61 = vld [vmem:[#allocation2 + $0x58] sm:$0xff]
  %v62 = vld [vmem:[#allocation2 + $0x60] sm:$0xff]
  %v63 = vld [vmem:[#allocation2 + $0x68] sm:$0xff]
  %v64 = vld [vmem:[#allocation2 + $0x70] sm:$0xff]
  %v65 = vld [vmem:[#allocation2 + $0x78] sm:$0xff]
  %v66 = vld [vmem:[#allocation2 + $0x80] sm:$0xff]
  %v67 = vld [vmem:[#allocation2 + $0x88] sm:$0xff]
  %v68 = vld [vmem:[#allocation2 + $0x90] sm:$0xff]
  %v69 = vld [vmem:[#allocation2 + $0x98] sm:$0xff]
  %v70 = vld [vmem:[#allocation2 + $0xa0] sm:$0xff]
  %v71 = vld [vmem:[#allocation2 + $0xa8] sm:$0xff]
  %v72 = vld [vmem:[#allocation2 + $0xb0] sm:$0xff]
  %v73 = vld [vmem:[#allocation2 + $0xb8] sm:$0xff]
  %v74 = vld [vmem:[#allocation2 + $0xc0] sm:$0xff]
  %v75 = vld [vmem:[#allocation2 + $0xc8] sm:$0xff]
  %v76 = vld [vmem:[#allocation2 + $0xd0] sm:$0xff]
  %v77 = vld [vmem:[#allocation2 + $0xd8] sm:$0xff]
  %v78 = vld [vmem:[#allocation2 + $0xe0] sm:$0xff]
  %v79 = vld [vmem:[#allocation2 + $0xe8] sm:$0xff]
  %v80 = vld [vmem:[#allocation2 + $0xf0] sm:$0xff]
  %v81 = vld [vmem:[#allocation2 + $0xf8] sm:$0xff]
  %v82 = vld [vmem:[%s0] sm:$0xff]
  %v83 = vld [vmem:[%s0 + $0x8] sm:$0xff]
  %v84 = vld [vmem:[%s0 + $0x10] sm:$0xff]
  %v85 = vld [vmem:[%s0 + $0x18] sm:$0xff]
  %v86 = vld [vmem:[%s0 + $0x20] sm:$0xff]
  %v87 = vld [vmem:[%s0 + $0x28] sm:$0xff]
  %v88 = vld [vmem:[%s0 + $0x30] sm:$0xff]
  %v89 = vld [vmem:[%s0 + $0x38] sm:$0xff]
  %v90 = vld [vmem:[%s0 + $0x40] sm:$0xff]
  %v91 = vld [vmem:[%s0 + $0x48] sm:$0xff]
  %v92 = vld [vmem:[%s0 + $0x50] sm:$0xff]
  %v93 = vld [vmem:[%s0 + $0x58] sm:$0xff]
  %v94 = vld [vmem:[%s0 + $0x60] sm:$0xff]
  %v95 = vld [vmem:[%s0 + $0x68] sm:$0xff]
  %v96 = vld [vmem:[%s0 + $0x70] sm:$0xff]
  %v97 = vld [vmem:[%s0 + $0x78] sm:$0xff]
  %v98 = vld [vmem:[%s0 + $0x80] sm:$0xff]
  %v99 = vld [vmem:[%s0 + $0x88] sm:$0xff]
  %v100 = vld [vmem:[%s0 + $0x90] sm:$0xff]
  %v101 = vld [vmem:[%s0 + $0x98] sm:$0xff]
  %v102 = vld [vmem:[%s0 + $0xa0] sm:$0xff]
  %v103 = vld [vmem:[%s0 + $0xa8] sm:$0xff]
  %v104 = vld [vmem:[%s0 + $0xb0] sm:$0xff]
  %v105 = vld [vmem:[%s0 + $0xb8] sm:$0xff]
  %v106 = vld [vmem:[%s0 + $0xc0] sm:$0xff]
  %v107 = vld [vmem:[%s0 + $0xc8] sm:$0xff]
  %v108 = vld [vmem:[%s0 + $0xd0] sm:$0xff]
  %v109 = vld [vmem:[%s0 + $0xd8] sm:$0xff]
  %v110 = vld [vmem:[%s0 + $0xe0] sm:$0xff]
  %v111 = vld [vmem:[%s0 + $0xe8] sm:$0xff]
  %v112 = vld [vmem:[%s0 + $0xf0] sm:$0xff]
  %v113 = vld [vmem:[%s0 + $0xf8] sm:$0xff]
  %v114 = vld [vmem:[%s1] sm:$0xff]
  %v115 = vld [vmem:[%s1 + $0x8] sm:$0xff]
  %v116 = vld [vmem:[%s1 + $0x10] sm:$0xff]
  %v117 = vld [vmem:[%s1 + $0x18] sm:$0xff]
  %v118 = vld [vmem:[%s1 + $0x20] sm:$0xff]
  %v119 = vld [vmem:[%s1 + $0x28] sm:$0xff]
  %v120 = vld [vmem:[%s1 + $0x30] sm:$0xff]
  %v121 = vld [vmem:[%s1 + $0x38] sm:$0xff]
  %v122 = vld [vmem:[%s1 + $0x40] sm:$0xff]
  %v123 = vld [vmem:[%s1 + $0x48] sm:$0xff]
  %v124 = vld [vmem:[%s1 + $0x50] sm:$0xff]
  %v125 = vld [vmem:[%s1 + $0x58] sm:$0xff]
  %v126 = vld [vmem:[%s1 + $0x60] sm:$0xff]
  %v127 = vld [vmem:[%s1 + $0x68] sm:$0xff]
  %v128 = vld [vmem:[%s1 + $0x70] sm:$0xff]
  %v129 = vld [vmem:[%s1 + $0x78] sm:$0xff]
  %130 = vmatprep.subr.mxu0 0.0
  %131 = vmatpush1.msra.mxu0 %v114
  %132 = vmatprep.subr.mxu0 0.0
  %133 = vmatpush1.msra.mxu0 %v115
  %134 = vmatprep.subr.mxu0 0.0
  %135 = vmatpush1.msra.mxu0 %v116
  %136 = vmatprep.subr.mxu0 0.0
  %137 = vmatpush1.msra.mxu0 %v117
  %138 = vmatprep.subr.mxu0 0.0
  %139 = vmatpush1.msra.mxu0 %v118
  %140 = vmatprep.subr.mxu0 0.0
  %141 = vmatpush1.msra.mxu0 %v119
  %142 = vmatprep.subr.mxu0 0.0
  %143 = vmatpush1.msra.mxu0 %v120
  %144 = vmatprep.subr.mxu0 0.0
  %145 = vmatpush1.msra.mxu0 %v121
  %146 = vmatprep.subr.mxu0 0.0
  %147 = vmatpush1.msra.mxu0 %v122
  %148 = vmatprep.subr.mxu0 0.0
  %149 = vmatpush1.msra.mxu0 %v123
  %150 = vmatprep.subr.mxu0 0.0
  %151 = vmatpush1.msra.mxu0 %v124
  %152 = vmatprep.subr.mxu0 0.0
  %153 = vmatpush1.msra.mxu0 %v125
  %154 = vmatprep.subr.mxu0 0.0
  %155 = vmatpush1.msra.mxu0 %v126
  %156 = vmatprep.subr.mxu0 0.0
  %157 = vmatpush1.msra.mxu0 %v127
  %158 = vmatprep.subr.mxu0 0.0
  %159 = vmatpush1.msra.mxu0 %v128
  %160 = vmatprep.subr.mxu0 0.0
  %161 = vmatpush1.msra.mxu0 %v129
  %162 = vmatprep.subr.mxu0 0.0
  %163 = vmatpush1.msra.mxu0 0.0
  %164 = vmatprep.subr.mxu0 0.0
  %165 = vmatpush1.msra.mxu0 0.0
  %166 = vmatprep.subr.mxu0 0.0
  %167 = vmatpush1.msra.mxu0 0.0
  %168 = vmatprep.subr.mxu0 0.0
  %169 = vmatpush1.msra.mxu0 0.0
  %170 = vmatprep.subr.mxu0 0.0
  %171 = vmatpush1.msra.mxu0 0.0
  %172 = vmatprep.subr.mxu0 0.0
  %173 = vmatpush1.msra.mxu0 0.0
  %174 = vmatprep.subr.mxu0 0.0
  %175 = vmatpush1.msra.mxu0 0.0
  %176 = vmatprep.subr.mxu0 0.0
  %177 = vmatpush1.msra.mxu0 0.0
  %178 = vmatprep.subr.mxu0 0.0
  %179 = vmatpush1.msra.mxu0 0.0
  %180 = vmatprep.subr.mxu0 0.0
  %181 = vmatpush1.msra.mxu0 0.0
  %182 = vmatprep.subr.mxu0 0.0
  %183 = vmatpush1.msra.mxu0 0.0
  %184 = vmatprep.subr.mxu0 0.0
  %185 = vmatpush1.msra.mxu0 0.0
  %186 = vmatprep.subr.mxu0 0.0
  %187 = vmatpush1.msra.mxu0 0.0
  %188 = vmatprep.subr.mxu0 0.0
  %189 = vmatpush1.msra.mxu0 0.0
  %190 = vmatprep.subr.mxu0 0.0
  %191 = vmatpush1.msra.mxu0 0.0
  %192 = vmatprep.subr.mxu0 0.0
  %193 = vmatpush1.msra.mxu0 0.0
  %194 = vmatprep.mubr.f32.mxu0 0.0
  %195 = vmatmul.mubr.f32.gmra.mrb[0].mxu0 %v82
  %v196 = vpop.f32.mrb[0].mxu0
  %v197 = vadd.f32 0.0, %v196
  %v198 = vpop.f32.mrb[0].mxu0
  %199 = vmatprep.mubr.f32.mxu0 0.0
  %200 = vmatmul.mubr.f32.gmra.mrb[0].mxu0 %v83
  %v201 = vpop.f32.mrb[0].mxu0
  %v202 = vadd.f32 0.0, %v201
  %v203 = vpop.f32.mrb[0].mxu0
  %204 = vmatprep.mubr.f32.mxu0 0.0
  %205 = vmatmul.mubr.f32.gmra.mrb[0].mxu0 %v84
  %v206 = vpop.f32.mrb[0].mxu0
  %v207 = vadd.f32 0.0, %v206
  %v208 = vpop.f32.mrb[0].mxu0
  %209 = vmatprep.mubr.f32.mxu0 0.0
  %210 = vmatmul.mubr.f32.gmra.mrb[0].mxu0 %v85
  %v211 = vpop.f32.mrb[0].mxu0
  %v212 = vadd.f32 0.0, %v211
  %v213 = vpop.f32.mrb[0].mxu0
  %214 = vmatprep.mubr.f32.mxu0 0.0
  %215 = vmatmul.mubr.f32.gmra.mrb[0].mxu0 %v86
  %v216 = vpop.f32.mrb[0].mxu0
  %v217 = vadd.f32 0.0, %v216
  %v218 = vpop.f32.mrb[0].mxu0
  %219 = vmatprep.mubr.f32.mxu0 0.0
  %220 = vmatmul.mubr.f32.gmra.mrb[0].mxu0 %v87
  %v221 = vpop.f32.mrb[0].mxu0
  %v222 = vadd.f32 0.0, %v221
  %v223 = vpop.f32.mrb[0].mxu0
  %224 = vmatprep.mubr.f32.mxu0 0.0
  %225 = vmatmul.mubr.f32.gmra.mrb[0].mxu0 %v88
  %v226 = vpop.f32.mrb[0].mxu0
  %v227 = vadd.f32 0.0, %v226
  %v228 = vpop.f32.mrb[0].mxu0
  %229 = vmatprep.mubr.f32.mxu0 0.0
  %230 = vmatmul.mubr.f32.gmra.mrb[0].mxu0 %v89
  %v231 = vpop.f32.mrb[0].mxu0
  %v232 = vadd.f32 0.0, %v231
  %v233 = vpop.f32.mrb[0].mxu0
  %234 = vmatprep.mubr.f32.mxu0 0.0
  %235 = vmatmul.mubr.f32.gmra.mrb[0].mxu0 %v90
  %v236 = vpop.f32.mrb[0].mxu0
  %v237 = vadd.f32 0.0, %v236
  %v238 = vpop.f32.mrb[0].mxu0
  %239 = vmatprep.mubr.f32.mxu0 0.0
  %240 = vmatmul.mubr.f32.gmra.mrb[0].mxu0 %v91
  %v241 = vpop.f32.mrb[0].mxu0
  %v242 = vadd.f32 0.0, %v241
  %v243 = vpop.f32.mrb[0].mxu0
  %244 = vmatprep.mubr.f32.mxu0 0.0
  %245 = vmatmul.mubr.f32.gmra.mrb[0].mxu0 %v92
  %v246 = vpop.f32.mrb[0].mxu0
  %v247 = vadd.f32 0.0, %v246
  %v248 = vpop.f32.mrb[0].mxu0
  %249 = vmatprep.mubr.f32.mxu0 0.0
  %250 = vmatmul.mubr.f32.gmra.mrb[0].mxu0 %v93
  %v251 = vpop.f32.mrb[0].mxu0
  %v252 = vadd.f32 0.0, %v251
  %v253 = vpop.f32.mrb[0].mxu0
  %254 = vmatprep.mubr.f32.mxu0 0.0
  %255 = vmatmul.mubr.f32.gmra.mrb[0].mxu0 %v94
  %v256 = vpop.f32.mrb[0].mxu0
  %v257 = vadd.f32 0.0, %v256
  %v258 = vpop.f32.mrb[0].mxu0
  %259 = vmatprep.mubr.f32.mxu0 0.0
  %260 = vmatmul.mubr.f32.gmra.mrb[0].mxu0 %v95
  %v261 = vpop.f32.mrb[0].mxu0
  %v262 = vadd.f32 0.0, %v261
  %v263 = vpop.f32.mrb[0].mxu0
  %264 = vmatprep.mubr.f32.mxu0 0.0
  %265 = vmatmul.mubr.f32.gmra.mrb[0].mxu0 %v96
  %v266 = vpop.f32.mrb[0].mxu0
  %v267 = vadd.f32 0.0, %v266
  %v268 = vpop.f32.mrb[0].mxu0
  %269 = vmatprep.mubr.f32.mxu0 0.0
  %270 = vmatmul.mubr.f32.gmra.mrb[0].mxu0 %v97
  %v271 = vpop.f32.mrb[0].mxu0
  %v272 = vadd.f32 0.0, %v271
  %v273 = vpop.f32.mrb[0].mxu0
  %274 = vmatprep.mubr.f32.mxu0 0.0
  %275 = vmatmul.mubr.f32.gmra.mrb[0].mxu0 %v98
  %v276 = vpop.f32.mrb[0].mxu0
  %v277 = vadd.f32 0.0, %v276
  %v278 = vpop.f32.mrb[0].mxu0
  %279 = vmatprep.mubr.f32.mxu0 0.0
  %280 = vmatmul.mubr.f32.gmra.mrb[0].mxu0 %v99
  %v281 = vpop.f32.mrb[0].mxu0
  %v282 = vadd.f32 0.0, %v281
  %v283 = vpop.f32.mrb[0].mxu0
  %284 = vmatprep.mubr.f32.mxu0 0.0
  %285 = vmatmul.mubr.f32.gmra.mrb[0].mxu0 %v100
  %v286 = vpop.f32.mrb[0].mxu0
  %v287 = vadd.f32 0.0, %v286
  %v288 = vpop.f32.mrb[0].mxu0
  %289 = vmatprep.mubr.f32.mxu0 0.0
  %290 = vmatmul.mubr.f32.gmra.mrb[0].mxu0 %v101
  %v291 = vpop.f32.mrb[0].mxu0
  %v292 = vadd.f32 0.0, %v291
  %v293 = vpop.f32.mrb[0].mxu0
  %294 = vmatprep.mubr.f32.mxu0 0.0
  %295 = vmatmul.mubr.f32.gmra.mrb[0].mxu0 %v102
  %v296 = vpop.f32.mrb[0].mxu0
  %v297 = vadd.f32 0.0, %v296
  %v298 = vpop.f32.mrb[0].mxu0
  %299 = vmatprep.mubr.f32.mxu0 0.0
  %300 = vmatmul.mubr.f32.gmra.mrb[0].mxu0 %v103
  %v301 = vpop.f32.mrb[0].mxu0
  %v302 = vadd.f32 0.0, %v301
  %v303 = vpop.f32.mrb[0].mxu0
  %304 = vmatprep.mubr.f32.mxu0 0.0
  %305 = vmatmul.mubr.f32.gmra.mrb[0].mxu0 %v104
  %v306 = vpop.f32.mrb[0].mxu0
  %v307 = vadd.f32 0.0, %v306
  %v308 = vpop.f32.mrb[0].mxu0
  %309 = vmatprep.mubr.f32.mxu0 0.0
  %310 = vmatmul.mubr.f32.gmra.mrb[0].mxu0 %v105
  %v311 = vpop.f32.mrb[0].mxu0
  %v312 = vadd.f32 0.0, %v311
  %v313 = vpop.f32.mrb[0].mxu0
  %314 = vmatprep.mubr.f32.mxu0 0.0
  %315 = vmatmul.mubr.f32.gmra.mrb[0].mxu0 %v106
  %v316 = vpop.f32.mrb[0].mxu0
  %v317 = vadd.f32 0.0, %v316
  %v318 = vpop.f32.mrb[0].mxu0
  %319 = vmatprep.mubr.f32.mxu0 0.0
  %320 = vmatmul.mubr.f32.gmra.mrb[0].mxu0 %v107
  %v321 = vpop.f32.mrb[0].mxu0
  %v322 = vadd.f32 0.0, %v321
  %v323 = vpop.f32.mrb[0].mxu0
  %324 = vmatprep.mubr.f32.mxu0 0.0
  %325 = vmatmul.mubr.f32.gmra.mrb[0].mxu0 %v108
  %v326 = vpop.f32.mrb[0].mxu0
  %v327 = vadd.f32 0.0, %v326
  %v328 = vpop.f32.mrb[0].mxu0
  %329 = vmatprep.mubr.f32.mxu0 0.0
  %330 = vmatmul.mubr.f32.gmra.mrb[0].mxu0 %v109
  %v331 = vpop.f32.mrb[0].mxu0
  %v332 = vadd.f32 0.0, %v331
  %v333 = vpop.f32.mrb[0].mxu0
  %334 = vmatprep.mubr.f32.mxu0 0.0
  %335 = vmatmul.mubr.f32.gmra.mrb[0].mxu0 %v110
  %v336 = vpop.f32.mrb[0].mxu0
  %v337 = vadd.f32 0.0, %v336
  %v338 = vpop.f32.mrb[0].mxu0
  %339 = vmatprep.mubr.f32.mxu0 0.0
  %340 = vmatmul.mubr.f32.gmra.mrb[0].mxu0 %v111
  %v341 = vpop.f32.mrb[0].mxu0
  %v342 = vadd.f32 0.0, %v341
  %v343 = vpop.f32.mrb[0].mxu0
  %344 = vmatprep.mubr.f32.mxu0 0.0
  %345 = vmatmul.mubr.f32.gmra.mrb[0].mxu0 %v112
  %v346 = vpop.f32.mrb[0].mxu0
  %v347 = vadd.f32 0.0, %v346
  %v348 = vpop.f32.mrb[0].mxu0
  %349 = vmatprep.mubr.f32.mxu0 0.0
  %350 = vmatmul.mubr.f32.gmra.mrb[0].mxu0 %v113
  %v351 = vpop.f32.mrb[0].mxu0
  %v352 = vadd.f32 0.0, %v351
  %v353 = vpop.f32.mrb[0].mxu0
  %354 = vdwg.mxu0
  %v355 = vadd.f32 %v50, %v197
  %v356 = vadd.f32 %v51, %v202
  %v357 = vadd.f32 %v52, %v207
  %v358 = vadd.f32 %v53, %v212
  %v359 = vadd.f32 %v54, %v217
  %v360 = vadd.f32 %v55, %v222
  %v361 = vadd.f32 %v56, %v227
  %v362 = vadd.f32 %v57, %v232
  %v363 = vadd.f32 %v58, %v237
  %v364 = vadd.f32 %v59, %v242
  %v365 = vadd.f32 %v60, %v247
  %v366 = vadd.f32 %v61, %v252
  %v367 = vadd.f32 %v62, %v257
  %v368 = vadd.f32 %v63, %v262
  %v369 = vadd.f32 %v64, %v267
  %v370 = vadd.f32 %v65, %v272
  %v371 = vadd.f32 %v66, %v277
  %v372 = vadd.f32 %v67, %v282
  %v373 = vadd.f32 %v68, %v287
  %v374 = vadd.f32 %v69, %v292
  %v375 = vadd.f32 %v70, %v297
  %v376 = vadd.f32 %v71, %v302
  %v377 = vadd.f32 %v72, %v307
  %v378 = vadd.f32 %v73, %v312
  %v379 = vadd.f32 %v74, %v317
  %v380 = vadd.f32 %v75, %v322
  %v381 = vadd.f32 %v76, %v327
  %v382 = vadd.f32 %v77, %v332
  %v383 = vadd.f32 %v78, %v337
  %v384 = vadd.f32 %v79, %v342
  %v385 = vadd.f32 %v80, %v347
  %v386 = vadd.f32 %v81, %v352
  %387 = vst [vmem:[#allocation2] sm:$0xff] %v355
  %388 = vst [vmem:[#allocation2 + $0x8] sm:$0xff] %v356
  %389 = vst [vmem:[#allocation2 + $0x10] sm:$0xff] %v357
  %390 = vst [vmem:[#allocation2 + $0x18] sm:$0xff] %v358
  %391 = vst [vmem:[#allocation2 + $0x20] sm:$0xff] %v359
  %392 = vst [vmem:[#allocation2 + $0x28] sm:$0xff] %v360
  %393 = vst [vmem:[#allocation2 + $0x30] sm:$0xff] %v361
  %394 = vst [vmem:[#allocation2 + $0x38] sm:$0xff] %v362
  %395 = vst [vmem:[#allocation2 + $0x40] sm:$0xff] %v363
  %396 = vst [vmem:[#allocation2 + $0x48] sm:$0xff] %v364
  %397 = vst [vmem:[#allocation2 + $0x50] sm:$0xff] %v365
  %398 = vst [vmem:[#allocation2 + $0x58] sm:$0xff] %v366
  %399 = vst [vmem:[#allocation2 + $0x60] sm:$0xff] %v367
  %400 = vst [vmem:[#allocation2 + $0x68] sm:$0xff] %v368
  %401 = vst [vmem:[#allocation2 + $0x70] sm:$0xff] %v369
  %402 = vst [vmem:[#allocation2 + $0x78] sm:$0xff] %v370
  %403 = vst [vmem:[#allocation2 + $0x80] sm:$0xff] %v371
  %404 = vst [vmem:[#allocation2 + $0x88] sm:$0xff] %v372
  %405 = vst [vmem:[#allocation2 + $0x90] sm:$0xff] %v373
  %406 = vst [vmem:[#allocation2 + $0x98] sm:$0xff] %v374
  %407 = vst [vmem:[#allocation2 + $0xa0] sm:$0xff] %v375
  %408 = vst [vmem:[#allocation2 + $0xa8] sm:$0xff] %v376
  %409 = vst [vmem:[#allocation2 + $0xb0] sm:$0xff] %v377
  %410 = vst [vmem:[#allocation2 + $0xb8] sm:$0xff] %v378
  %411 = vst [vmem:[#allocation2 + $0xc0] sm:$0xff] %v379
  %412 = vst [vmem:[#allocation2 + $0xc8] sm:$0xff] %v380
  %413 = vst [vmem:[#allocation2 + $0xd0] sm:$0xff] %v381
  %414 = vst [vmem:[#allocation2 + $0xd8] sm:$0xff] %v382
  %415 = vst [vmem:[#allocation2 + $0xe0] sm:$0xff] %v383
  %416 = vst [vmem:[#allocation2 + $0xe8] sm:$0xff] %v384
  %417 = vst [vmem:[#allocation2 + $0xf0] sm:$0xff] %v385
  %418 = vst [vmem:[#allocation2 + $0xf8] sm:$0xff] %v386
  // Predicated region
  $region18: #{no_norm_discriminator.5} parent=0 // pred_check
    %p419 = pneg %p14
  $region19: #{no_norm_discriminator.5} parent=0 // pred_check_branch
    %421 = sbr.rel (%p419) target = $region21
  $region20: #{no_norm_discriminator.5} parent=0 // pred_region
    %v422 = vld [vmem:[#allocation2] sm:$0xff]
    %v423 = vld [vmem:[#allocation2 + $0x8] sm:$0xff]
    %v424 = vld [vmem:[#allocation2 + $0x10] sm:$0xff]
    %v425 = vld [vmem:[#allocation2 + $0x18] sm:$0xff]
    %v426 = vld [vmem:[#allocation2 + $0x20] sm:$0xff]
    %v427 = vld [vmem:[#allocation2 + $0x28] sm:$0xff]
    %v428 = vld [vmem:[#allocation2 + $0x30] sm:$0xff]
    %v429 = vld [vmem:[#allocation2 + $0x38] sm:$0xff]
    %v430 = vld [vmem:[#allocation2 + $0x40] sm:$0xff]
    %v431 = vld [vmem:[#allocation2 + $0x48] sm:$0xff]
    %v432 = vld [vmem:[#allocation2 + $0x50] sm:$0xff]
    %v433 = vld [vmem:[#allocation2 + $0x58] sm:$0xff]
    %v434 = vld [vmem:[#allocation2 + $0x60] sm:$0xff]
    %v435 = vld [vmem:[#allocation2 + $0x68] sm:$0xff]
    %v436 = vld [vmem:[#allocation2 + $0x70] sm:$0xff]
    %v437 = vld [vmem:[#allocation2 + $0x78] sm:$0xff]
    %v438 = vld [vmem:[#allocation2 + $0x80] sm:$0xff]
    %v439 = vld [vmem:[#allocation2 + $0x88] sm:$0xff]
    %v440 = vld [vmem:[#allocation2 + $0x90] sm:$0xff]
    %v441 = vld [vmem:[#allocation2 + $0x98] sm:$0xff]
    %v442 = vld [vmem:[#allocation2 + $0xa0] sm:$0xff]
    %v443 = vld [vmem:[#allocation2 + $0xa8] sm:$0xff]
    %v444 = vld [vmem:[#allocation2 + $0xb0] sm:$0xff]
    %v445 = vld [vmem:[#allocation2 + $0xb8] sm:$0xff]
    %v446 = vld [vmem:[#allocation2 + $0xc0] sm:$0xff]
    %v447 = vld [vmem:[#allocation2 + $0xc8] sm:$0xff]
    %v448 = vld [vmem:[#allocation2 + $0xd0] sm:$0xff]
    %v449 = vld [vmem:[#allocation2 + $0xd8] sm:$0xff]
    %v450 = vld [vmem:[#allocation2 + $0xe0] sm:$0xff]
    %v451 = vld [vmem:[#allocation2 + $0xe8] sm:$0xff]
    %v452 = vld [vmem:[#allocation2 + $0xf0] sm:$0xff]
    %v453 = vld [vmem:[#allocation2 + $0xf8] sm:$0xff]
    %v454 = vld [vmem:[%s2] sm:$0x1]
    %v456 = vlaneseq
    %v457 = vshrl.u32 %v456, 7
    %v458 = vsub.s32 0, %v457
    %v459 = vrot.slane %v454, %v458
    %v461 = vadd.f32 %v422, %v459
    %v462 = vadd.f32 %v423, %v459
    %v463 = vadd.f32 %v424, %v459
    %v464 = vadd.f32 %v425, %v459
    %v465 = vadd.f32 %v426, %v459
    %v466 = vadd.f32 %v427, %v459
    %v467 = vadd.f32 %v428, %v459
    %v468 = vadd.f32 %v429, %v459
    %v469 = vadd.f32 %v430, %v459
    %v470 = vadd.f32 %v431, %v459
    %v471 = vadd.f32 %v432, %v459
    %v472 = vadd.f32 %v433, %v459
    %v473 = vadd.f32 %v434, %v459
    %v474 = vadd.f32 %v435, %v459
    %v475 = vadd.f32 %v436, %v459
    %v476 = vadd.f32 %v437, %v459
    %v477 = vadd.f32 %v438, %v459
    %v478 = vadd.f32 %v439, %v459
    %v479 = vadd.f32 %v440, %v459
    %v480 = vadd.f32 %v441, %v459
    %v481 = vadd.f32 %v442, %v459
    %v482 = vadd.f32 %v443, %v459
    %v483 = vadd.f32 %v444, %v459
    %v484 = vadd.f32 %v445, %v459
    %v485 = vadd.f32 %v446, %v459
    %v486 = vadd.f32 %v447, %v459
    %v487 = vadd.f32 %v448, %v459
    %v488 = vadd.f32 %v449, %v459
    %v489 = vadd.f32 %v450, %v459
    %v490 = vadd.f32 %v451, %v459
    %v491 = vadd.f32 %v452, %v459
    %v492 = vadd.f32 %v453, %v459
    %vm493 = vcmp.ge.f32.partialorder %v461, 0.0
    %vm494 = vcmp.ge.f32.partialorder %v462, 0.0
    %vm495 = vcmp.ge.f32.partialorder %v463, 0.0
    %vm496 = vcmp.ge.f32.partialorder %v464, 0.0
    %vm497 = vcmp.ge.f32.partialorder %v465, 0.0
    %vm498 = vcmp.ge.f32.partialorder %v466, 0.0
    %vm499 = vcmp.ge.f32.partialorder %v467, 0.0
    %vm500 = vcmp.ge.f32.partialorder %v468, 0.0
    %vm501 = vcmp.ge.f32.partialorder %v469, 0.0
    %vm502 = vcmp.ge.f32.partialorder %v470, 0.0
    %vm503 = vcmp.ge.f32.partialorder %v471, 0.0
    %vm504 = vcmp.ge.f32.partialorder %v472, 0.0
    %vm505 = vcmp.ge.f32.partialorder %v473, 0.0
    %vm506 = vcmp.ge.f32.partialorder %v474, 0.0
    %vm507 = vcmp.ge.f32.partialorder %v475, 0.0
    %vm508 = vcmp.ge.f32.partialorder %v476, 0.0
    %vm509 = vcmp.ge.f32.partialorder %v477, 0.0
    %vm510 = vcmp.ge.f32.partialorder %v478, 0.0
    %vm511 = vcmp.ge.f32.partialorder %v479, 0.0
    %vm512 = vcmp.ge.f32.partialorder %v480, 0.0
    %vm513 = vcmp.ge.f32.partialorder %v481, 0.0
    %vm514 = vcmp.ge.f32.partialorder %v482, 0.0
    %vm515 = vcmp.ge.f32.partialorder %v483, 0.0
    %vm516 = vcmp.ge.f32.partialorder %v484, 0.0
    %vm517 = vcmp.ge.f32.partialorder %v485, 0.0
    %vm518 = vcmp.ge.f32.partialorder %v486, 0.0
    %vm519 = vcmp.ge.f32.partialorder %v487, 0.0
    %vm520 = vcmp.ge.f32.partialorder %v488, 0.0
    %vm521 = vcmp.ge.f32.partialorder %v489, 0.0
    %vm522 = vcmp.ge.f32.partialorder %v490, 0.0
    %vm523 = vcmp.ge.f32.partialorder %v491, 0.0
    %vm524 = vcmp.ge.f32.partialorder %v492, 0.0
    %v525 = vmul.f32 %v461, 0.2
    %v526 = vmul.f32 %v462, 0.2
    %v527 = vmul.f32 %v463, 0.2
    %v528 = vmul.f32 %v464, 0.2
    %v529 = vmul.f32 %v465, 0.2
    %v530 = vmul.f32 %v466, 0.2
    %v531 = vmul.f32 %v467, 0.2
    %v532 = vmul.f32 %v468, 0.2
    %v533 = vmul.f32 %v469, 0.2
    %v534 = vmul.f32 %v470, 0.2
    %v535 = vmul.f32 %v471, 0.2
    %v536 = vmul.f32 %v472, 0.2
    %v537 = vmul.f32 %v473, 0.2
    %v538 = vmul.f32 %v474, 0.2
    %v539 = vmul.f32 %v475, 0.2
    %v540 = vmul.f32 %v476, 0.2
    %v541 = vmul.f32 %v477, 0.2
    %v542 = vmul.f32 %v478, 0.2
    %v543 = vmul.f32 %v479, 0.2
    %v544 = vmul.f32 %v480, 0.2
    %v545 = vmul.f32 %v481, 0.2
    %v546 = vmul.f32 %v482, 0.2
    %v547 = vmul.f32 %v483, 0.2
    %v548 = vmul.f32 %v484, 0.2
    %v549 = vmul.f32 %v485, 0.2
    %v550 = vmul.f32 %v486, 0.2
    %v551 = vmul.f32 %v487, 0.2
    %v552 = vmul.f32 %v488, 0.2
    %v553 = vmul.f32 %v489, 0.2
    %v554 = vmul.f32 %v490, 0.2
    %v555 = vmul.f32 %v491, 0.2
    %v556 = vmul.f32 %v492, 0.2
    %v557 = vsel %vm493, %v461, %v525
    %v558 = vsel %vm494, %v462, %v526
    %v559 = vsel %vm495, %v463, %v527
    %v560 = vsel %vm496, %v464, %v528
    %v561 = vsel %vm497, %v465, %v529
    %v562 = vsel %vm498, %v466, %v530
    %v563 = vsel %vm499, %v467, %v531
    %v564 = vsel %vm500, %v468, %v532
    %v565 = vsel %vm501, %v469, %v533
    %v566 = vsel %vm502, %v470, %v534
    %v567 = vsel %vm503, %v471, %v535
    %v568 = vsel %vm504, %v472, %v536
    %v569 = vsel %vm505, %v473, %v537
    %v570 = vsel %vm506, %v474, %v538
    %v571 = vsel %vm507, %v475, %v539
    %v572 = vsel %vm508, %v476, %v540
    %v573 = vsel %vm509, %v477, %v541
    %v574 = vsel %vm510, %v478, %v542
    %v575 = vsel %vm511, %v479, %v543
    %v576 = vsel %vm512, %v480, %v544
    %v577 = vsel %vm513, %v481, %v545
    %v578 = vsel %vm514, %v482, %v546
    %v579 = vsel %vm515, %v483, %v547
    %v580 = vsel %vm516, %v484, %v548
    %v581 = vsel %vm517, %v485, %v549
    %v582 = vsel %vm518, %v486, %v550
    %v583 = vsel %vm519, %v487, %v551
    %v584 = vsel %vm520, %v488, %v552
    %v585 = vsel %vm521, %v489, %v553
    %v586 = vsel %vm522, %v490, %v554
    %v587 = vsel %vm523, %v491, %v555
    %v588 = vsel %vm524, %v492, %v556
    %589 = vst [vmem:[%s3] sm:$0xff] %v557
    %590 = vst [vmem:[%s3 + $0x8] sm:$0xff] %v558
    %591 = vst [vmem:[%s3 + $0x10] sm:$0xff] %v559
    %592 = vst [vmem:[%s3 + $0x18] sm:$0xff] %v560
    %593 = vst [vmem:[%s3 + $0x20] sm:$0xff] %v561
    %594 = vst [vmem:[%s3 + $0x28] sm:$0xff] %v562
    %595 = vst [vmem:[%s3 + $0x30] sm:$0xff] %v563
    %596 = vst [vmem:[%s3 + $0x38] sm:$0xff] %v564
    %597 = vst [vmem:[%s3 + $0x40] sm:$0xff] %v565
    %598 = vst [vmem:[%s3 + $0x48] sm:$0xff] %v566
    %599 = vst [vmem:[%s3 + $0x50] sm:$0xff] %v567
    %600 = vst [vmem:[%s3 + $0x58] sm:$0xff] %v568
    %601 = vst [vmem:[%s3 + $0x60] sm:$0xff] %v569
    %602 = vst [vmem:[%s3 + $0x68] sm:$0xff] %v570
    %603 = vst [vmem:[%s3 + $0x70] sm:$0xff] %v571
    %604 = vst [vmem:[%s3 + $0x78] sm:$0xff] %v572
    %605 = vst [vmem:[%s3 + $0x80] sm:$0xff] %v573
    %606 = vst [vmem:[%s3 + $0x88] sm:$0xff] %v574
    %607 = vst [vmem:[%s3 + $0x90] sm:$0xff] %v575
    %608 = vst [vmem:[%s3 + $0x98] sm:$0xff] %v576
    %609 = vst [vmem:[%s3 + $0xa0] sm:$0xff] %v577
    %610 = vst [vmem:[%s3 + $0xa8] sm:$0xff] %v578
    %611 = vst [vmem:[%s3 + $0xb0] sm:$0xff] %v579
    %612 = vst [vmem:[%s3 + $0xb8] sm:$0xff] %v580
    %613 = vst [vmem:[%s3 + $0xc0] sm:$0xff] %v581
    %614 = vst [vmem:[%s3 + $0xc8] sm:$0xff] %v582
    %615 = vst [vmem:[%s3 + $0xd0] sm:$0xff] %v583
    %616 = vst [vmem:[%s3 + $0xd8] sm:$0xff] %v584
    %617 = vst [vmem:[%s3 + $0xe0] sm:$0xff] %v585
    %618 = vst [vmem:[%s3 + $0xe8] sm:$0xff] %v586
    %619 = vst [vmem:[%s3 + $0xf0] sm:$0xff] %v587
    %620 = vst [vmem:[%s3 + $0xf8] sm:$0xff] %v588
  $region21: #{no_norm_discriminator.5} parent=0 // pred_fallthru
    _
  // Predicated region
  $region22: #{no_norm_discriminator.5} parent=0 // pred_check
    _
  $region23: #{no_norm_discriminator.5} parent=0 // pred_check_branch
    %622 = sbr.rel (0) target = $region25
  $region24: #{no_norm_discriminator.5} parent=0 // pred_region
    _
  $region25: #{no_norm_discriminator.5} parent=0 // pred_fallthru
    _
  // Predicated region
  $region26: #{no_norm_discriminator.5} parent=0 // pred_check
    _
  $region27: #{no_norm_discriminator.5} parent=0 // pred_check_branch
    %624 = sbr.rel (0) target = $region29
  $region28: #{no_norm_discriminator.5} parent=0 // pred_region
    _
  $region29: #{no_norm_discriminator.5} parent=0 // pred_fallthru
    _

// kernel: no_norm_discriminator.7
$region0: #{no_norm_discriminator.7}
  #allocation0 [shape = 'u32[]', space=smem, size = 0x4, offset = 0x4, fixed_abs, tag = 'smem constant byte address 0x4 - core index']
  #allocation1 [shape = 'u32[144,128]{1,0:T(1,128)}', space=vmem, size = 0x12000, scoped, tag = 'internal scratch']
  #allocation2 [shape = 'f32[256,128]{1,0:T(8,128)}', space=vmem, size = 0x20000, scoped, tag = 'scratch operand']
  %s0 = inlined_call_operand.vmem [shape: f32[256,256], index: 0, kind: input, shape index: {}]
  %s1 = inlined_call_operand.vmem [shape: f32[256,128], index: 1, kind: input, shape index: {}]
  %s2 = inlined_call_operand.vmem [shape: f32[1,128], index: 2, kind: input, shape index: {}]
  %s3 = inlined_call_operand.vmem [shape: f32[256,128], index: 3, kind: output, shape index: {}]
  %s4 = sld [smem:[#allocation0]]
  $region30: #{no_norm_discriminator.7} parent=0
    _
  %s6 = ssub.s32 1, %s4
  %s7 = scalar_select 0, %s6, %s4
  // Predicated region
  $region2: #{no_norm_discriminator.7} parent=0 // pred_check
    _
  $region3: #{no_norm_discriminator.7} parent=0 // pred_check_branch
    %9 = sbr.rel (0) target = $region5
  $region4: #{no_norm_discriminator.7} parent=0 // pred_region
    _
  $region5: #{no_norm_discriminator.7} parent=0 // pred_fallthru
    _
  // Predicated region
  $region6: #{no_norm_discriminator.7} parent=0 // pred_check
    _
  $region7: #{no_norm_discriminator.7} parent=0 // pred_check_branch
    %11 = sbr.rel (0) target = $region9
  $region8: #{no_norm_discriminator.7} parent=0 // pred_region
    _
  $region9: #{no_norm_discriminator.7} parent=0 // pred_fallthru
    _
  // Predicated region
  $region10: #{no_norm_discriminator.7} parent=0 // pred_check
    _
  $region11: #{no_norm_discriminator.7} parent=0 // pred_check_branch
    %13 = sbr.rel (0) target = $region13
  $region12: #{no_norm_discriminator.7} parent=0 // pred_region
    _
  $region13: #{no_norm_discriminator.7} parent=0 // pred_fallthru
    _
  %p14 = scmp.eq.s32.totalorder 0, 0
  // Predicated region
  $region14: #{no_norm_discriminator.7} parent=0 // pred_check
    %p15 = pneg %p14
  $region15: #{no_norm_discriminator.7} parent=0 // pred_check_branch
    %17 = sbr.rel (%p15) target = $region17
  $region16: #{no_norm_discriminator.7} parent=0 // pred_region
    %18 = vst [vmem:[#allocation2] sm:$0xff] 0.0
    %19 = vst [vmem:[#allocation2 + $0x8] sm:$0xff] 0.0
    %20 = vst [vmem:[#allocation2 + $0x10] sm:$0xff] 0.0
    %21 = vst [vmem:[#allocation2 + $0x18] sm:$0xff] 0.0
    %22 = vst [vmem:[#allocation2 + $0x20] sm:$0xff] 0.0
    %23 = vst [vmem:[#allocation2 + $0x28] sm:$0xff] 0.0
    %24 = vst [vmem:[#allocation2 + $0x30] sm:$0xff] 0.0
    %25 = vst [vmem:[#allocation2 + $0x38] sm:$0xff] 0.0
    %26 = vst [vmem:[#allocation2 + $0x40] sm:$0xff] 0.0
    %27 = vst [vmem:[#allocation2 + $0x48] sm:$0xff] 0.0
    %28 = vst [vmem:[#allocation2 + $0x50] sm:$0xff] 0.0
    %29 = vst [vmem:[#allocation2 + $0x58] sm:$0xff] 0.0
    %30 = vst [vmem:[#allocation2 + $0x60] sm:$0xff] 0.0
    %31 = vst [vmem:[#allocation2 + $0x68] sm:$0xff] 0.0
    %32 = vst [vmem:[#allocation2 + $0x70] sm:$0xff] 0.0
    %33 = vst [vmem:[#allocation2 + $0x78] sm:$0xff] 0.0
    %34 = vst [vmem:[#allocation2 + $0x80] sm:$0xff] 0.0
    %35 = vst [vmem:[#allocation2 + $0x88] sm:$0xff] 0.0
    %36 = vst [vmem:[#allocation2 + $0x90] sm:$0xff] 0.0
    %37 = vst [vmem:[#allocation2 + $0x98] sm:$0xff] 0.0
    %38 = vst [vmem:[#allocation2 + $0xa0] sm:$0xff] 0.0
    %39 = vst [vmem:[#allocation2 + $0xa8] sm:$0xff] 0.0
    %40 = vst [vmem:[#allocation2 + $0xb0] sm:$0xff] 0.0
    %41 = vst [vmem:[#allocation2 + $0xb8] sm:$0xff] 0.0
    %42 = vst [vmem:[#allocation2 + $0xc0] sm:$0xff] 0.0
    %43 = vst [vmem:[#allocation2 + $0xc8] sm:$0xff] 0.0
    %44 = vst [vmem:[#allocation2 + $0xd0] sm:$0xff] 0.0
    %45 = vst [vmem:[#allocation2 + $0xd8] sm:$0xff] 0.0
    %46 = vst [vmem:[#allocation2 + $0xe0] sm:$0xff] 0.0
    %47 = vst [vmem:[#allocation2 + $0xe8] sm:$0xff] 0.0
    %48 = vst [vmem:[#allocation2 + $0xf0] sm:$0xff] 0.0
    %49 = vst [vmem:[#allocation2 + $0xf8] sm:$0xff] 0.0
  $region17: #{no_norm_discriminator.7} parent=0 // pred_fallthru
    _
  %v50 = vld [vmem:[#allocation2] sm:$0xff]
  %v51 = vld [vmem:[#allocation2 + $0x8] sm:$0xff]
  %v52 = vld [vmem:[#allocation2 + $0x10] sm:$0xff]
  %v53 = vld [vmem:[#allocation2 + $0x18] sm:$0xff]
  %v54 = vld [vmem:[#allocation2 + $0x20] sm:$0xff]
  %v55 = vld [vmem:[#allocation2 + $0x28] sm:$0xff]
  %v56 = vld [vmem:[#allocation2 + $0x30] sm:$0xff]
  %v57 = vld [vmem:[#allocation2 + $0x38] sm:$0xff]
  %v58 = vld [vmem:[#allocation2 + $0x40] sm:$0xff]
  %v59 = vld [vmem:[#allocation2 + $0x48] sm:$0xff]
  %v60 = vld [vmem:[#allocation2 + $0x50] sm:$0xff]
  %v61 = vld [vmem:[#allocation2 + $0x58] sm:$0xff]
  %v62 = vld [vmem:[#allocation2 + $0x60] sm:$0xff]
  %v63 = vld [vmem:[#allocation2 + $0x68] sm:$0xff]
  %v64 = vld [vmem:[#allocation2 + $0x70] sm:$0xff]
  %v65 = vld [vmem:[#allocation2 + $0x78] sm:$0xff]
  %v66 = vld [vmem:[#allocation2 + $0x80] sm:$0xff]
  %v67 = vld [vmem:[#allocation2 + $0x88] sm:$0xff]
  %v68 = vld [vmem:[#allocation2 + $0x90] sm:$0xff]
  %v69 = vld [vmem:[#allocation2 + $0x98] sm:$0xff]
  %v70 = vld [vmem:[#allocation2 + $0xa0] sm:$0xff]
  %v71 = vld [vmem:[#allocation2 + $0xa8] sm:$0xff]
  %v72 = vld [vmem:[#allocation2 + $0xb0] sm:$0xff]
  %v73 = vld [vmem:[#allocation2 + $0xb8] sm:$0xff]
  %v74 = vld [vmem:[#allocation2 + $0xc0] sm:$0xff]
  %v75 = vld [vmem:[#allocation2 + $0xc8] sm:$0xff]
  %v76 = vld [vmem:[#allocation2 + $0xd0] sm:$0xff]
  %v77 = vld [vmem:[#allocation2 + $0xd8] sm:$0xff]
  %v78 = vld [vmem:[#allocation2 + $0xe0] sm:$0xff]
  %v79 = vld [vmem:[#allocation2 + $0xe8] sm:$0xff]
  %v80 = vld [vmem:[#allocation2 + $0xf0] sm:$0xff]
  %v81 = vld [vmem:[#allocation2 + $0xf8] sm:$0xff]
  %v82 = vld [vmem:[%s0] sm:$0xff]
  %v83 = vld [vmem:[%s0 + $0x8] sm:$0xff]
  %v84 = vld [vmem:[%s0 + $0x10] sm:$0xff]
  %v85 = vld [vmem:[%s0 + $0x18] sm:$0xff]
  %v86 = vld [vmem:[%s0 + $0x20] sm:$0xff]
  %v87 = vld [vmem:[%s0 + $0x28] sm:$0xff]
  %v88 = vld [vmem:[%s0 + $0x30] sm:$0xff]
  %v89 = vld [vmem:[%s0 + $0x38] sm:$0xff]
  %v90 = vld [vmem:[%s0 + $0x40] sm:$0xff]
  %v91 = vld [vmem:[%s0 + $0x48] sm:$0xff]
  %v92 = vld [vmem:[%s0 + $0x50] sm:$0xff]
  %v93 = vld [vmem:[%s0 + $0x58] sm:$0xff]
  %v94 = vld [vmem:[%s0 + $0x60] sm:$0xff]
  %v95 = vld [vmem:[%s0 + $0x68] sm:$0xff]
  %v96 = vld [vmem:[%s0 + $0x70] sm:$0xff]
  %v97 = vld [vmem:[%s0 + $0x78] sm:$0xff]
  %v98 = vld [vmem:[%s0 + $0x80] sm:$0xff]
  %v99 = vld [vmem:[%s0 + $0x88] sm:$0xff]
  %v100 = vld [vmem:[%s0 + $0x90] sm:$0xff]
  %v101 = vld [vmem:[%s0 + $0x98] sm:$0xff]
  %v102 = vld [vmem:[%s0 + $0xa0] sm:$0xff]
  %v103 = vld [vmem:[%s0 + $0xa8] sm:$0xff]
  %v104 = vld [vmem:[%s0 + $0xb0] sm:$0xff]
  %v105 = vld [vmem:[%s0 + $0xb8] sm:$0xff]
  %v106 = vld [vmem:[%s0 + $0xc0] sm:$0xff]
  %v107 = vld [vmem:[%s0 + $0xc8] sm:$0xff]
  %v108 = vld [vmem:[%s0 + $0xd0] sm:$0xff]
  %v109 = vld [vmem:[%s0 + $0xd8] sm:$0xff]
  %v110 = vld [vmem:[%s0 + $0xe0] sm:$0xff]
  %v111 = vld [vmem:[%s0 + $0xe8] sm:$0xff]
  %v112 = vld [vmem:[%s0 + $0xf0] sm:$0xff]
  %v113 = vld [vmem:[%s0 + $0xf8] sm:$0xff]
  %v114 = vld [vmem:[%s0 + $0x100] sm:$0xff]
  %v115 = vld [vmem:[%s0 + $0x108] sm:$0xff]
  %v116 = vld [vmem:[%s0 + $0x110] sm:$0xff]
  %v117 = vld [vmem:[%s0 + $0x118] sm:$0xff]
  %v118 = vld [vmem:[%s0 + $0x120] sm:$0xff]
  %v119 = vld [vmem:[%s0 + $0x128] sm:$0xff]
  %v120 = vld [vmem:[%s0 + $0x130] sm:$0xff]
  %v121 = vld [vmem:[%s0 + $0x138] sm:$0xff]
  %v122 = vld [vmem:[%s0 + $0x140] sm:$0xff]
  %v123 = vld [vmem:[%s0 + $0x148] sm:$0xff]
  %v124 = vld [vmem:[%s0 + $0x150] sm:$0xff]
  %v125 = vld [vmem:[%s0 + $0x158] sm:$0xff]
  %v126 = vld [vmem:[%s0 + $0x160] sm:$0xff]
  %v127 = vld [vmem:[%s0 + $0x168] sm:$0xff]
  %v128 = vld [vmem:[%s0 + $0x170] sm:$0xff]
  %v129 = vld [vmem:[%s0 + $0x178] sm:$0xff]
  %v130 = vld [vmem:[%s0 + $0x180] sm:$0xff]
  %v131 = vld [vmem:[%s0 + $0x188] sm:$0xff]
  %v132 = vld [vmem:[%s0 + $0x190] sm:$0xff]
  %v133 = vld [vmem:[%s0 + $0x198] sm:$0xff]
  %v134 = vld [vmem:[%s0 + $0x1a0] sm:$0xff]
  %v135 = vld [vmem:[%s0 + $0x1a8] sm:$0xff]
  %v136 = vld [vmem:[%s0 + $0x1b0] sm:$0xff]
  %v137 = vld [vmem:[%s0 + $0x1b8] sm:$0xff]
  %v138 = vld [vmem:[%s0 + $0x1c0] sm:$0xff]
  %v139 = vld [vmem:[%s0 + $0x1c8] sm:$0xff]
  %v140 = vld [vmem:[%s0 + $0x1d0] sm:$0xff]
  %v141 = vld [vmem:[%s0 + $0x1d8] sm:$0xff]
  %v142 = vld [vmem:[%s0 + $0x1e0] sm:$0xff]
  %v143 = vld [vmem:[%s0 + $0x1e8] sm:$0xff]
  %v144 = vld [vmem:[%s0 + $0x1f0] sm:$0xff]
  %v145 = vld [vmem:[%s0 + $0x1f8] sm:$0xff]
  %v146 = vld [vmem:[%s1] sm:$0xff]
  %v147 = vld [vmem:[%s1 + $0x8] sm:$0xff]
  %v148 = vld [vmem:[%s1 + $0x10] sm:$0xff]
  %v149 = vld [vmem:[%s1 + $0x18] sm:$0xff]
  %v150 = vld [vmem:[%s1 + $0x20] sm:$0xff]
  %v151 = vld [vmem:[%s1 + $0x28] sm:$0xff]
  %v152 = vld [vmem:[%s1 + $0x30] sm:$0xff]
  %v153 = vld [vmem:[%s1 + $0x38] sm:$0xff]
  %v154 = vld [vmem:[%s1 + $0x40] sm:$0xff]
  %v155 = vld [vmem:[%s1 + $0x48] sm:$0xff]
  %v156 = vld [vmem:[%s1 + $0x50] sm:$0xff]
  %v157 = vld [vmem:[%s1 + $0x58] sm:$0xff]
  %v158 = vld [vmem:[%s1 + $0x60] sm:$0xff]
  %v159 = vld [vmem:[%s1 + $0x68] sm:$0xff]
  %v160 = vld [vmem:[%s1 + $0x70] sm:$0xff]
  %v161 = vld [vmem:[%s1 + $0x78] sm:$0xff]
  %v162 = vld [vmem:[%s1 + $0x80] sm:$0xff]
  %v163 = vld [vmem:[%s1 + $0x88] sm:$0xff]
  %v164 = vld [vmem:[%s1 + $0x90] sm:$0xff]
  %v165 = vld [vmem:[%s1 + $0x98] sm:$0xff]
  %v166 = vld [vmem:[%s1 + $0xa0] sm:$0xff]
  %v167 = vld [vmem:[%s1 + $0xa8] sm:$0xff]
  %v168 = vld [vmem:[%s1 + $0xb0] sm:$0xff]
  %v169 = vld [vmem:[%s1 + $0xb8] sm:$0xff]
  %v170 = vld [vmem:[%s1 + $0xc0] sm:$0xff]
  %v171 = vld [vmem:[%s1 + $0xc8] sm:$0xff]
  %v172 = vld [vmem:[%s1 + $0xd0] sm:$0xff]
  %v173 = vld [vmem:[%s1 + $0xd8] sm:$0xff]
  %v174 = vld [vmem:[%s1 + $0xe0] sm:$0xff]
  %v175 = vld [vmem:[%s1 + $0xe8] sm:$0xff]
  %v176 = vld [vmem:[%s1 + $0xf0] sm:$0xff]
  %v177 = vld [vmem:[%s1 + $0xf8] sm:$0xff]
  %178 = vmatprep.subr.mxu0 0.0
  %179 = vmatpush1.msra.mxu0 %v146
  %180 = vmatprep.subr.mxu0 0.0
  %181 = vmatpush1.msra.mxu0 %v147
  %182 = vmatprep.subr.mxu0 0.0
  %183 = vmatpush1.msra.mxu0 %v148
  %184 = vmatprep.subr.mxu0 0.0
  %185 = vmatpush1.msra.mxu0 %v149
  %186 = vmatprep.subr.mxu0 0.0
  %187 = vmatpush1.msra.mxu0 %v150
  %188 = vmatprep.subr.mxu0 0.0
  %189 = vmatpush1.msra.mxu0 %v151
  %190 = vmatprep.subr.mxu0 0.0
  %191 = vmatpush1.msra.mxu0 %v152
  %192 = vmatprep.subr.mxu0 0.0
  %193 = vmatpush1.msra.mxu0 %v153
  %194 = vmatprep.subr.mxu0 0.0
  %195 = vmatpush1.msra.mxu0 %v154
  %196 = vmatprep.subr.mxu0 0.0
  %197 = vmatpush1.msra.mxu0 %v155
  %198 = vmatprep.subr.mxu0 0.0
  %199 = vmatpush1.msra.mxu0 %v156
  %200 = vmatprep.subr.mxu0 0.0
  %201 = vmatpush1.msra.mxu0 %v157
  %202 = vmatprep.subr.mxu0 0.0
  %203 = vmatpush1.msra.mxu0 %v158
  %204 = vmatprep.subr.mxu0 0.0
  %205 = vmatpush1.msra.mxu0 %v159
  %206 = vmatprep.subr.mxu0 0.0
  %207 = vmatpush1.msra.mxu0 %v160
  %208 = vmatprep.subr.mxu0 0.0
  %209 = vmatpush1.msra.mxu0 %v161
  %210 = vmatprep.subr.mxu0 0.0
  %211 = vmatpush1.msra.mxu0 %v162
  %212 = vmatprep.subr.mxu0 0.0
  %213 = vmatpush1.msra.mxu0 %v163
  %214 = vmatprep.subr.mxu0 0.0
  %215 = vmatpush1.msra.mxu0 %v164
  %216 = vmatprep.subr.mxu0 0.0
  %217 = vmatpush1.msra.mxu0 %v165
  %218 = vmatprep.subr.mxu0 0.0
  %219 = vmatpush1.msra.mxu0 %v166
  %220 = vmatprep.subr.mxu0 0.0
  %221 = vmatpush1.msra.mxu0 %v167
  %222 = vmatprep.subr.mxu0 0.0
  %223 = vmatpush1.msra.mxu0 %v168
  %224 = vmatprep.subr.mxu0 0.0
  %225 = vmatpush1.msra.mxu0 %v169
  %226 = vmatprep.subr.mxu0 0.0
  %227 = vmatpush1.msra.mxu0 %v170
  %228 = vmatprep.subr.mxu0 0.0
  %229 = vmatpush1.msra.mxu0 %v171
  %230 = vmatprep.subr.mxu0 0.0
  %231 = vmatpush1.msra.mxu0 %v172
  %232 = vmatprep.subr.mxu0 0.0
  %233 = vmatpush1.msra.mxu0 %v173
  %234 = vmatprep.subr.mxu0 0.0
  %235 = vmatpush1.msra.mxu0 %v174
  %236 = vmatprep.subr.mxu0 0.0
  %237 = vmatpush1.msra.mxu0 %v175
  %238 = vmatprep.subr.mxu0 0.0
  %239 = vmatpush1.msra.mxu0 %v176
  %240 = vmatprep.subr.mxu0 0.0
  %241 = vmatpush1.msra.mxu0 %v177
  %242 = vmatprep.mubr.f32.mxu0 %v83
  %243 = vmatmul.mubr.f32.gmra.mrb[0].mxu0 %v82
  %v244 = vpop.f32.mrb[0].mxu0
  %v245 = vadd.f32 0.0, %v244
  %v246 = vpop.f32.mrb[0].mxu0
  %247 = vmatprep.mubr.f32.mxu0 %v85
  %248 = vmatmul.mubr.f32.gmra.mrb[0].mxu0 %v84
  %v249 = vpop.f32.mrb[0].mxu0
  %v250 = vadd.f32 0.0, %v249
  %v251 = vpop.f32.mrb[0].mxu0
  %252 = vmatprep.mubr.f32.mxu0 %v87
  %253 = vmatmul.mubr.f32.gmra.mrb[0].mxu0 %v86
  %v254 = vpop.f32.mrb[0].mxu0
  %v255 = vadd.f32 0.0, %v254
  %v256 = vpop.f32.mrb[0].mxu0
  %257 = vmatprep.mubr.f32.mxu0 %v89
  %258 = vmatmul.mubr.f32.gmra.mrb[0].mxu0 %v88
  %v259 = vpop.f32.mrb[0].mxu0
  %v260 = vadd.f32 0.0, %v259
  %v261 = vpop.f32.mrb[0].mxu0
  %262 = vmatprep.mubr.f32.mxu0 %v91
  %263 = vmatmul.mubr.f32.gmra.mrb[0].mxu0 %v90
  %v264 = vpop.f32.mrb[0].mxu0
  %v265 = vadd.f32 0.0, %v264
  %v266 = vpop.f32.mrb[0].mxu0
  %267 = vmatprep.mubr.f32.mxu0 %v93
  %268 = vmatmul.mubr.f32.gmra.mrb[0].mxu0 %v92
  %v269 = vpop.f32.mrb[0].mxu0
  %v270 = vadd.f32 0.0, %v269
  %v271 = vpop.f32.mrb[0].mxu0
  %272 = vmatprep.mubr.f32.mxu0 %v95
  %273 = vmatmul.mubr.f32.gmra.mrb[0].mxu0 %v94
  %v274 = vpop.f32.mrb[0].mxu0
  %v275 = vadd.f32 0.0, %v274
  %v276 = vpop.f32.mrb[0].mxu0
  %277 = vmatprep.mubr.f32.mxu0 %v97
  %278 = vmatmul.mubr.f32.gmra.mrb[0].mxu0 %v96
  %v279 = vpop.f32.mrb[0].mxu0
  %v280 = vadd.f32 0.0, %v279
  %v281 = vpop.f32.mrb[0].mxu0
  %282 = vmatprep.mubr.f32.mxu0 %v99
  %283 = vmatmul.mubr.f32.gmra.mrb[0].mxu0 %v98
  %v284 = vpop.f32.mrb[0].mxu0
  %v285 = vadd.f32 0.0, %v284
  %v286 = vpop.f32.mrb[0].mxu0
  %287 = vmatprep.mubr.f32.mxu0 %v101
  %288 = vmatmul.mubr.f32.gmra.mrb[0].mxu0 %v100
  %v289 = vpop.f32.mrb[0].mxu0
  %v290 = vadd.f32 0.0, %v289
  %v291 = vpop.f32.mrb[0].mxu0
  %292 = vmatprep.mubr.f32.mxu0 %v103
  %293 = vmatmul.mubr.f32.gmra.mrb[0].mxu0 %v102
  %v294 = vpop.f32.mrb[0].mxu0
  %v295 = vadd.f32 0.0, %v294
  %v296 = vpop.f32.mrb[0].mxu0
  %297 = vmatprep.mubr.f32.mxu0 %v105
  %298 = vmatmul.mubr.f32.gmra.mrb[0].mxu0 %v104
  %v299 = vpop.f32.mrb[0].mxu0
  %v300 = vadd.f32 0.0, %v299
  %v301 = vpop.f32.mrb[0].mxu0
  %302 = vmatprep.mubr.f32.mxu0 %v107
  %303 = vmatmul.mubr.f32.gmra.mrb[0].mxu0 %v106
  %v304 = vpop.f32.mrb[0].mxu0
  %v305 = vadd.f32 0.0, %v304
  %v306 = vpop.f32.mrb[0].mxu0
  %307 = vmatprep.mubr.f32.mxu0 %v109
  %308 = vmatmul.mubr.f32.gmra.mrb[0].mxu0 %v108
  %v309 = vpop.f32.mrb[0].mxu0
  %v310 = vadd.f32 0.0, %v309
  %v311 = vpop.f32.mrb[0].mxu0
  %312 = vmatprep.mubr.f32.mxu0 %v111
  %313 = vmatmul.mubr.f32.gmra.mrb[0].mxu0 %v110
  %v314 = vpop.f32.mrb[0].mxu0
  %v315 = vadd.f32 0.0, %v314
  %v316 = vpop.f32.mrb[0].mxu0
  %317 = vmatprep.mubr.f32.mxu0 %v113
  %318 = vmatmul.mubr.f32.gmra.mrb[0].mxu0 %v112
  %v319 = vpop.f32.mrb[0].mxu0
  %v320 = vadd.f32 0.0, %v319
  %v321 = vpop.f32.mrb[0].mxu0
  %322 = vmatprep.mubr.f32.mxu0 %v115
  %323 = vmatmul.mubr.f32.gmra.mrb[0].mxu0 %v114
  %v324 = vpop.f32.mrb[0].mxu0
  %v325 = vadd.f32 0.0, %v324
  %v326 = vpop.f32.mrb[0].mxu0
  %327 = vmatprep.mubr.f32.mxu0 %v117
  %328 = vmatmul.mubr.f32.gmra.mrb[0].mxu0 %v116
  %v329 = vpop.f32.mrb[0].mxu0
  %v330 = vadd.f32 0.0, %v329
  %v331 = vpop.f32.mrb[0].mxu0
  %332 = vmatprep.mubr.f32.mxu0 %v119
  %333 = vmatmul.mubr.f32.gmra.mrb[0].mxu0 %v118
  %v334 = vpop.f32.mrb[0].mxu0
  %v335 = vadd.f32 0.0, %v334
  %v336 = vpop.f32.mrb[0].mxu0
  %337 = vmatprep.mubr.f32.mxu0 %v121
  %338 = vmatmul.mubr.f32.gmra.mrb[0].mxu0 %v120
  %v339 = vpop.f32.mrb[0].mxu0
  %v340 = vadd.f32 0.0, %v339
  %v341 = vpop.f32.mrb[0].mxu0
  %342 = vmatprep.mubr.f32.mxu0 %v123
  %343 = vmatmul.mubr.f32.gmra.mrb[0].mxu0 %v122
  %v344 = vpop.f32.mrb[0].mxu0
  %v345 = vadd.f32 0.0, %v344
  %v346 = vpop.f32.mrb[0].mxu0
  %347 = vmatprep.mubr.f32.mxu0 %v125
  %348 = vmatmul.mubr.f32.gmra.mrb[0].mxu0 %v124
  %v349 = vpop.f32.mrb[0].mxu0
  %v350 = vadd.f32 0.0, %v349
  %v351 = vpop.f32.mrb[0].mxu0
  %352 = vmatprep.mubr.f32.mxu0 %v127
  %353 = vmatmul.mubr.f32.gmra.mrb[0].mxu0 %v126
  %v354 = vpop.f32.mrb[0].mxu0
  %v355 = vadd.f32 0.0, %v354
  %v356 = vpop.f32.mrb[0].mxu0
  %357 = vmatprep.mubr.f32.mxu0 %v129
  %358 = vmatmul.mubr.f32.gmra.mrb[0].mxu0 %v128
  %v359 = vpop.f32.mrb[0].mxu0
  %v360 = vadd.f32 0.0, %v359
  %v361 = vpop.f32.mrb[0].mxu0
  %362 = vmatprep.mubr.f32.mxu0 %v131
  %363 = vmatmul.mubr.f32.gmra.mrb[0].mxu0 %v130
  %v364 = vpop.f32.mrb[0].mxu0
  %v365 = vadd.f32 0.0, %v364
  %v366 = vpop.f32.mrb[0].mxu0
  %367 = vmatprep.mubr.f32.mxu0 %v133
  %368 = vmatmul.mubr.f32.gmra.mrb[0].mxu0 %v132
  %v369 = vpop.f32.mrb[0].mxu0
  %v370 = vadd.f32 0.0, %v369
  %v371 = vpop.f32.mrb[0].mxu0
  %372 = vmatprep.mubr.f32.mxu0 %v135
  %373 = vmatmul.mubr.f32.gmra.mrb[0].mxu0 %v134
  %v374 = vpop.f32.mrb[0].mxu0
  %v375 = vadd.f32 0.0, %v374
  %v376 = vpop.f32.mrb[0].mxu0
  %377 = vmatprep.mubr.f32.mxu0 %v137
  %378 = vmatmul.mubr.f32.gmra.mrb[0].mxu0 %v136
  %v379 = vpop.f32.mrb[0].mxu0
  %v380 = vadd.f32 0.0, %v379
  %v381 = vpop.f32.mrb[0].mxu0
  %382 = vmatprep.mubr.f32.mxu0 %v139
  %383 = vmatmul.mubr.f32.gmra.mrb[0].mxu0 %v138
  %v384 = vpop.f32.mrb[0].mxu0
  %v385 = vadd.f32 0.0, %v384
  %v386 = vpop.f32.mrb[0].mxu0
  %387 = vmatprep.mubr.f32.mxu0 %v141
  %388 = vmatmul.mubr.f32.gmra.mrb[0].mxu0 %v140
  %v389 = vpop.f32.mrb[0].mxu0
  %v390 = vadd.f32 0.0, %v389
  %v391 = vpop.f32.mrb[0].mxu0
  %392 = vmatprep.mubr.f32.mxu0 %v143
  %393 = vmatmul.mubr.f32.gmra.mrb[0].mxu0 %v142
  %v394 = vpop.f32.mrb[0].mxu0
  %v395 = vadd.f32 0.0, %v394
  %v396 = vpop.f32.mrb[0].mxu0
  %397 = vmatprep.mubr.f32.mxu0 %v145
  %398 = vmatmul.mubr.f32.gmra.mrb[0].mxu0 %v144
  %v399 = vpop.f32.mrb[0].mxu0
  %v400 = vadd.f32 0.0, %v399
  %v401 = vpop.f32.mrb[0].mxu0
  %402 = vdwg.mxu0
  %v403 = vadd.f32 %v50, %v245
  %v404 = vadd.f32 %v51, %v250
  %v405 = vadd.f32 %v52, %v255
  %v406 = vadd.f32 %v53, %v260
  %v407 = vadd.f32 %v54, %v265
  %v408 = vadd.f32 %v55, %v270
  %v409 = vadd.f32 %v56, %v275
  %v410 = vadd.f32 %v57, %v280
  %v411 = vadd.f32 %v58, %v285
  %v412 = vadd.f32 %v59, %v290
  %v413 = vadd.f32 %v60, %v295
  %v414 = vadd.f32 %v61, %v300
  %v415 = vadd.f32 %v62, %v305
  %v416 = vadd.f32 %v63, %v310
  %v417 = vadd.f32 %v64, %v315
  %v418 = vadd.f32 %v65, %v320
  %v419 = vadd.f32 %v66, %v325
  %v420 = vadd.f32 %v67, %v330
  %v421 = vadd.f32 %v68, %v335
  %v422 = vadd.f32 %v69, %v340
  %v423 = vadd.f32 %v70, %v345
  %v424 = vadd.f32 %v71, %v350
  %v425 = vadd.f32 %v72, %v355
  %v426 = vadd.f32 %v73, %v360
  %v427 = vadd.f32 %v74, %v365
  %v428 = vadd.f32 %v75, %v370
  %v429 = vadd.f32 %v76, %v375
  %v430 = vadd.f32 %v77, %v380
  %v431 = vadd.f32 %v78, %v385
  %v432 = vadd.f32 %v79, %v390
  %v433 = vadd.f32 %v80, %v395
  %v434 = vadd.f32 %v81, %v400
  %435 = vst [vmem:[#allocation2] sm:$0xff] %v403
  %436 = vst [vmem:[#allocation2 + $0x8] sm:$0xff] %v404
  %437 = vst [vmem:[#allocation2 + $0x10] sm:$0xff] %v405
  %438 = vst [vmem:[#allocation2 + $0x18] sm:$0xff] %v406
  %439 = vst [vmem:[#allocation2 + $0x20] sm:$0xff] %v407
  %440 = vst [vmem:[#allocation2 + $0x28] sm:$0xff] %v408
  %441 = vst [vmem:[#allocation2 + $0x30] sm:$0xff] %v409
  %442 = vst [vmem:[#allocation2 + $0x38] sm:$0xff] %v410
  %443 = vst [vmem:[#allocation2 + $0x40] sm:$0xff] %v411
  %444 = vst [vmem:[#allocation2 + $0x48] sm:$0xff] %v412
  %445 = vst [vmem:[#allocation2 + $0x50] sm:$0xff] %v413
  %446 = vst [vmem:[#allocation2 + $0x58] sm:$0xff] %v414
  %447 = vst [vmem:[#allocation2 + $0x60] sm:$0xff] %v415
  %448 = vst [vmem:[#allocation2 + $0x68] sm:$0xff] %v416
  %449 = vst [vmem:[#allocation2 + $0x70] sm:$0xff] %v417
  %450 = vst [vmem:[#allocation2 + $0x78] sm:$0xff] %v418
  %451 = vst [vmem:[#allocation2 + $0x80] sm:$0xff] %v419
  %452 = vst [vmem:[#allocation2 + $0x88] sm:$0xff] %v420
  %453 = vst [vmem:[#allocation2 + $0x90] sm:$0xff] %v421
  %454 = vst [vmem:[#allocation2 + $0x98] sm:$0xff] %v422
  %455 = vst [vmem:[#allocation2 + $0xa0] sm:$0xff] %v423
  %456 = vst [vmem:[#allocation2 + $0xa8] sm:$0xff] %v424
  %457 = vst [vmem:[#allocation2 + $0xb0] sm:$0xff] %v425
  %458 = vst [vmem:[#allocation2 + $0xb8] sm:$0xff] %v426
  %459 = vst [vmem:[#allocation2 + $0xc0] sm:$0xff] %v427
  %460 = vst [vmem:[#allocation2 + $0xc8] sm:$0xff] %v428
  %461 = vst [vmem:[#allocation2 + $0xd0] sm:$0xff] %v429
  %462 = vst [vmem:[#allocation2 + $0xd8] sm:$0xff] %v430
  %463 = vst [vmem:[#allocation2 + $0xe0] sm:$0xff] %v431
  %464 = vst [vmem:[#allocation2 + $0xe8] sm:$0xff] %v432
  %465 = vst [vmem:[#allocation2 + $0xf0] sm:$0xff] %v433
  %466 = vst [vmem:[#allocation2 + $0xf8] sm:$0xff] %v434
  // Predicated region
  $region18: #{no_norm_discriminator.7} parent=0 // pred_check
    %p467 = pneg %p14
  $region19: #{no_norm_discriminator.7} parent=0 // pred_check_branch
    %469 = sbr.rel (%p467) target = $region21
  $region20: #{no_norm_discriminator.7} parent=0 // pred_region
    %v470 = vld [vmem:[#allocation2] sm:$0xff]
    %v471 = vld [vmem:[#allocation2 + $0x8] sm:$0xff]
    %v472 = vld [vmem:[#allocation2 + $0x10] sm:$0xff]
    %v473 = vld [vmem:[#allocation2 + $0x18] sm:$0xff]
    %v474 = vld [vmem:[#allocation2 + $0x20] sm:$0xff]
    %v475 = vld [vmem:[#allocation2 + $0x28] sm:$0xff]
    %v476 = vld [vmem:[#allocation2 + $0x30] sm:$0xff]
    %v477 = vld [vmem:[#allocation2 + $0x38] sm:$0xff]
    %v478 = vld [vmem:[#allocation2 + $0x40] sm:$0xff]
    %v479 = vld [vmem:[#allocation2 + $0x48] sm:$0xff]
    %v480 = vld [vmem:[#allocation2 + $0x50] sm:$0xff]
    %v481 = vld [vmem:[#allocation2 + $0x58] sm:$0xff]
    %v482 = vld [vmem:[#allocation2 + $0x60] sm:$0xff]
    %v483 = vld [vmem:[#allocation2 + $0x68] sm:$0xff]
    %v484 = vld [vmem:[#allocation2 + $0x70] sm:$0xff]
    %v485 = vld [vmem:[#allocation2 + $0x78] sm:$0xff]
    %v486 = vld [vmem:[#allocation2 + $0x80] sm:$0xff]
    %v487 = vld [vmem:[#allocation2 + $0x88] sm:$0xff]
    %v488 = vld [vmem:[#allocation2 + $0x90] sm:$0xff]
    %v489 = vld [vmem:[#allocation2 + $0x98] sm:$0xff]
    %v490 = vld [vmem:[#allocation2 + $0xa0] sm:$0xff]
    %v491 = vld [vmem:[#allocation2 + $0xa8] sm:$0xff]
    %v492 = vld [vmem:[#allocation2 + $0xb0] sm:$0xff]
    %v493 = vld [vmem:[#allocation2 + $0xb8] sm:$0xff]
    %v494 = vld [vmem:[#allocation2 + $0xc0] sm:$0xff]
    %v495 = vld [vmem:[#allocation2 + $0xc8] sm:$0xff]
    %v496 = vld [vmem:[#allocation2 + $0xd0] sm:$0xff]
    %v497 = vld [vmem:[#allocation2 + $0xd8] sm:$0xff]
    %v498 = vld [vmem:[#allocation2 + $0xe0] sm:$0xff]
    %v499 = vld [vmem:[#allocation2 + $0xe8] sm:$0xff]
    %v500 = vld [vmem:[#allocation2 + $0xf0] sm:$0xff]
    %v501 = vld [vmem:[#allocation2 + $0xf8] sm:$0xff]
    %v502 = vld [vmem:[%s2] sm:$0x1]
    %v504 = vlaneseq
    %v505 = vshrl.u32 %v504, 7
    %v506 = vsub.s32 0, %v505
    %v507 = vrot.slane %v502, %v506
    %v509 = vadd.f32 %v470, %v507
    %v510 = vadd.f32 %v471, %v507
    %v511 = vadd.f32 %v472, %v507
    %v512 = vadd.f32 %v473, %v507
    %v513 = vadd.f32 %v474, %v507
    %v514 = vadd.f32 %v475, %v507
    %v515 = vadd.f32 %v476, %v507
    %v516 = vadd.f32 %v477, %v507
    %v517 = vadd.f32 %v478, %v507
    %v518 = vadd.f32 %v479, %v507
    %v519 = vadd.f32 %v480, %v507
    %v520 = vadd.f32 %v481, %v507
    %v521 = vadd.f32 %v482, %v507
    %v522 = vadd.f32 %v483, %v507
    %v523 = vadd.f32 %v484, %v507
    %v524 = vadd.f32 %v485, %v507
    %v525 = vadd.f32 %v486, %v507
    %v526 = vadd.f32 %v487, %v507
    %v527 = vadd.f32 %v488, %v507
    %v528 = vadd.f32 %v489, %v507
    %v529 = vadd.f32 %v490, %v507
    %v530 = vadd.f32 %v491, %v507
    %v531 = vadd.f32 %v492, %v507
    %v532 = vadd.f32 %v493, %v507
    %v533 = vadd.f32 %v494, %v507
    %v534 = vadd.f32 %v495, %v507
    %v535 = vadd.f32 %v496, %v507
    %v536 = vadd.f32 %v497, %v507
    %v537 = vadd.f32 %v498, %v507
    %v538 = vadd.f32 %v499, %v507
    %v539 = vadd.f32 %v500, %v507
    %v540 = vadd.f32 %v501, %v507
    %vm541 = vcmp.ge.f32.partialorder %v509, 0.0
    %vm542 = vcmp.ge.f32.partialorder %v510, 0.0
    %vm543 = vcmp.ge.f32.partialorder %v511, 0.0
    %vm544 = vcmp.ge.f32.partialorder %v512, 0.0
    %vm545 = vcmp.ge.f32.partialorder %v513, 0.0
    %vm546 = vcmp.ge.f32.partialorder %v514, 0.0
    %vm547 = vcmp.ge.f32.partialorder %v515, 0.0
    %vm548 = vcmp.ge.f32.partialorder %v516, 0.0
    %vm549 = vcmp.ge.f32.partialorder %v517, 0.0
    %vm550 = vcmp.ge.f32.partialorder %v518, 0.0
    %vm551 = vcmp.ge.f32.partialorder %v519, 0.0
    %vm552 = vcmp.ge.f32.partialorder %v520, 0.0
    %vm553 = vcmp.ge.f32.partialorder %v521, 0.0
    %vm554 = vcmp.ge.f32.partialorder %v522, 0.0
    %vm555 = vcmp.ge.f32.partialorder %v523, 0.0
    %vm556 = vcmp.ge.f32.partialorder %v524, 0.0
    %vm557 = vcmp.ge.f32.partialorder %v525, 0.0
    %vm558 = vcmp.ge.f32.partialorder %v526, 0.0
    %vm559 = vcmp.ge.f32.partialorder %v527, 0.0
    %vm560 = vcmp.ge.f32.partialorder %v528, 0.0
    %vm561 = vcmp.ge.f32.partialorder %v529, 0.0
    %vm562 = vcmp.ge.f32.partialorder %v530, 0.0
    %vm563 = vcmp.ge.f32.partialorder %v531, 0.0
    %vm564 = vcmp.ge.f32.partialorder %v532, 0.0
    %vm565 = vcmp.ge.f32.partialorder %v533, 0.0
    %vm566 = vcmp.ge.f32.partialorder %v534, 0.0
    %vm567 = vcmp.ge.f32.partialorder %v535, 0.0
    %vm568 = vcmp.ge.f32.partialorder %v536, 0.0
    %vm569 = vcmp.ge.f32.partialorder %v537, 0.0
    %vm570 = vcmp.ge.f32.partialorder %v538, 0.0
    %vm571 = vcmp.ge.f32.partialorder %v539, 0.0
    %vm572 = vcmp.ge.f32.partialorder %v540, 0.0
    %v573 = vmul.f32 %v509, 0.2
    %v574 = vmul.f32 %v510, 0.2
    %v575 = vmul.f32 %v511, 0.2
    %v576 = vmul.f32 %v512, 0.2
    %v577 = vmul.f32 %v513, 0.2
    %v578 = vmul.f32 %v514, 0.2
    %v579 = vmul.f32 %v515, 0.2
    %v580 = vmul.f32 %v516, 0.2
    %v581 = vmul.f32 %v517, 0.2
    %v582 = vmul.f32 %v518, 0.2
    %v583 = vmul.f32 %v519, 0.2
    %v584 = vmul.f32 %v520, 0.2
    %v585 = vmul.f32 %v521, 0.2
    %v586 = vmul.f32 %v522, 0.2
    %v587 = vmul.f32 %v523, 0.2
    %v588 = vmul.f32 %v524, 0.2
    %v589 = vmul.f32 %v525, 0.2
    %v590 = vmul.f32 %v526, 0.2
    %v591 = vmul.f32 %v527, 0.2
    %v592 = vmul.f32 %v528, 0.2
    %v593 = vmul.f32 %v529, 0.2
    %v594 = vmul.f32 %v530, 0.2
    %v595 = vmul.f32 %v531, 0.2
    %v596 = vmul.f32 %v532, 0.2
    %v597 = vmul.f32 %v533, 0.2
    %v598 = vmul.f32 %v534, 0.2
    %v599 = vmul.f32 %v535, 0.2
    %v600 = vmul.f32 %v536, 0.2
    %v601 = vmul.f32 %v537, 0.2
    %v602 = vmul.f32 %v538, 0.2
    %v603 = vmul.f32 %v539, 0.2
    %v604 = vmul.f32 %v540, 0.2
    %v605 = vsel %vm541, %v509, %v573
    %v606 = vsel %vm542, %v510, %v574
    %v607 = vsel %vm543, %v511, %v575
    %v608 = vsel %vm544, %v512, %v576
    %v609 = vsel %vm545, %v513, %v577
    %v610 = vsel %vm546, %v514, %v578
    %v611 = vsel %vm547, %v515, %v579
    %v612 = vsel %vm548, %v516, %v580
    %v613 = vsel %vm549, %v517, %v581
    %v614 = vsel %vm550, %v518, %v582
    %v615 = vsel %vm551, %v519, %v583
    %v616 = vsel %vm552, %v520, %v584
    %v617 = vsel %vm553, %v521, %v585
    %v618 = vsel %vm554, %v522, %v586
    %v619 = vsel %vm555, %v523, %v587
    %v620 = vsel %vm556, %v524, %v588
    %v621 = vsel %vm557, %v525, %v589
    %v622 = vsel %vm558, %v526, %v590
    %v623 = vsel %vm559, %v527, %v591
    %v624 = vsel %vm560, %v528, %v592
    %v625 = vsel %vm561, %v529, %v593
    %v626 = vsel %vm562, %v530, %v594
    %v627 = vsel %vm563, %v531, %v595
    %v628 = vsel %vm564, %v532, %v596
    %v629 = vsel %vm565, %v533, %v597
    %v630 = vsel %vm566, %v534, %v598
    %v631 = vsel %vm567, %v535, %v599
    %v632 = vsel %vm568, %v536, %v600
    %v633 = vsel %vm569, %v537, %v601
    %v634 = vsel %vm570, %v538, %v602
    %v635 = vsel %vm571, %v539, %v603
    %v636 = vsel %vm572, %v540, %v604
    %637 = vst [vmem:[%s3] sm:$0xff] %v605
    %638 = vst [vmem:[%s3 + $0x8] sm:$0xff] %v606
    %639 = vst [vmem:[%s3 + $0x10] sm:$0xff] %v607
    %640 = vst [vmem:[%s3 + $0x18] sm:$0xff] %v608
    %641 = vst [vmem:[%s3 + $0x20] sm:$0xff] %v609
    %642 = vst [vmem:[%s3 + $0x28] sm:$0xff] %v610
    %643 = vst [vmem:[%s3 + $0x30] sm:$0xff] %v611
    %644 = vst [vmem:[%s3 + $0x38] sm:$0xff] %v612
    %645 = vst [vmem:[%s3 + $0x40] sm:$0xff] %v613
    %646 = vst [vmem:[%s3 + $0x48] sm:$0xff] %v614
    %647 = vst [vmem:[%s3 + $0x50] sm:$0xff] %v615
    %648 = vst [vmem:[%s3 + $0x58] sm:$0xff] %v616
    %649 = vst [vmem:[%s3 + $0x60] sm:$0xff] %v617
    %650 = vst [vmem:[%s3 + $0x68] sm:$0xff] %v618
    %651 = vst [vmem:[%s3 + $0x70] sm:$0xff] %v619
    %652 = vst [vmem:[%s3 + $0x78] sm:$0xff] %v620
    %653 = vst [vmem:[%s3 + $0x80] sm:$0xff] %v621
    %654 = vst [vmem:[%s3 + $0x88] sm:$0xff] %v622
    %655 = vst [vmem:[%s3 + $0x90] sm:$0xff] %v623
    %656 = vst [vmem:[%s3 + $0x98] sm:$0xff] %v624
    %657 = vst [vmem:[%s3 + $0xa0] sm:$0xff] %v625
    %658 = vst [vmem:[%s3 + $0xa8] sm:$0xff] %v626
    %659 = vst [vmem:[%s3 + $0xb0] sm:$0xff] %v627
    %660 = vst [vmem:[%s3 + $0xb8] sm:$0xff] %v628
    %661 = vst [vmem:[%s3 + $0xc0] sm:$0xff] %v629
    %662 = vst [vmem:[%s3 + $0xc8] sm:$0xff] %v630
    %663 = vst [vmem:[%s3 + $0xd0] sm:$0xff] %v631
    %664 = vst [vmem:[%s3 + $0xd8] sm:$0xff] %v632
    %665 = vst [vmem:[%s3 + $0xe0] sm:$0xff] %v633
    %666 = vst [vmem:[%s3 + $0xe8] sm:$0xff] %v634
    %667 = vst [vmem:[%s3 + $0xf0] sm:$0xff] %v635
    %668 = vst [vmem:[%s3 + $0xf8] sm:$0xff] %v636
  $region21: #{no_norm_discriminator.7} parent=0 // pred_fallthru
    _
  // Predicated region
  $region22: #{no_norm_discriminator.7} parent=0 // pred_check
    _
  $region23: #{no_norm_discriminator.7} parent=0 // pred_check_branch
    %670 = sbr.rel (0) target = $region25
  $region24: #{no_norm_discriminator.7} parent=0 // pred_region
    _
  $region25: #{no_norm_discriminator.7} parent=0 // pred_fallthru
    _
  // Predicated region
  $region26: #{no_norm_discriminator.7} parent=0 // pred_check
    _
  $region27: #{no_norm_discriminator.7} parent=0 // pred_check_branch
    %672 = sbr.rel (0) target = $region29
  $region28: #{no_norm_discriminator.7} parent=0 // pred_region
    _
  $region29: #{no_norm_discriminator.7} parent=0 // pred_fallthru
    _

// kernel: no_norm_discriminator.8
$region0: #{no_norm_discriminator.8}
  #allocation0 [shape = 'u32[]', space=smem, size = 0x4, offset = 0x4, fixed_abs, tag = 'smem constant byte address 0x4 - core index']
  #allocation1 [shape = 'u32[144,128]{1,0:T(1,128)}', space=vmem, size = 0x12000, scoped, tag = 'internal scratch']
  #allocation2 [shape = 'f32[256,128]{1,0:T(8,128)}', space=vmem, size = 0x20000, scoped, tag = 'scratch operand']
  %s0 = inlined_call_operand.vmem [shape: f32[256,512], index: 0, kind: input, shape index: {}]
  %s1 = inlined_call_operand.vmem [shape: f32[512,128], index: 1, kind: input, shape index: {}]
  %s2 = inlined_call_operand.vmem [shape: f32[1,128], index: 2, kind: input, shape index: {}]
  %s3 = inlined_call_operand.vmem [shape: f32[256,128], index: 3, kind: output, shape index: {}]
  %s4 = sld [smem:[#allocation0]]
  $region30: #{no_norm_discriminator.8} parent=0
    _
  %s6 = ssub.s32 1, %s4
  %s7 = scalar_select 0, %s6, %s4
  // Predicated region
  $region2: #{no_norm_discriminator.8} parent=0 // pred_check
    _
  $region3: #{no_norm_discriminator.8} parent=0 // pred_check_branch
    %9 = sbr.rel (0) target = $region5
  $region4: #{no_norm_discriminator.8} parent=0 // pred_region
    _
  $region5: #{no_norm_discriminator.8} parent=0 // pred_fallthru
    _
  // Predicated region
  $region6: #{no_norm_discriminator.8} parent=0 // pred_check
    _
  $region7: #{no_norm_discriminator.8} parent=0 // pred_check_branch
    %11 = sbr.rel (0) target = $region9
  $region8: #{no_norm_discriminator.8} parent=0 // pred_region
    _
  $region9: #{no_norm_discriminator.8} parent=0 // pred_fallthru
    _
  // Predicated region
  $region10: #{no_norm_discriminator.8} parent=0 // pred_check
    _
  $region11: #{no_norm_discriminator.8} parent=0 // pred_check_branch
    %13 = sbr.rel (0) target = $region13
  $region12: #{no_norm_discriminator.8} parent=0 // pred_region
    _
  $region13: #{no_norm_discriminator.8} parent=0 // pred_fallthru
    _
  %p14 = scmp.eq.s32.totalorder 0, 0
  // Predicated region
  $region14: #{no_norm_discriminator.8} parent=0 // pred_check
    %p15 = pneg %p14
  $region15: #{no_norm_discriminator.8} parent=0 // pred_check_branch
    %17 = sbr.rel (%p15) target = $region17
  $region16: #{no_norm_discriminator.8} parent=0 // pred_region
    %18 = vst [vmem:[#allocation2] sm:$0xff] 0.0
    %19 = vst [vmem:[#allocation2 + $0x8] sm:$0xff] 0.0
    %20 = vst [vmem:[#allocation2 + $0x10] sm:$0xff] 0.0
    %21 = vst [vmem:[#allocation2 + $0x18] sm:$0xff] 0.0
    %22 = vst [vmem:[#allocation2 + $0x20] sm:$0xff] 0.0
    %23 = vst [vmem:[#allocation2 + $0x28] sm:$0xff] 0.0
    %24 = vst [vmem:[#allocation2 + $0x30] sm:$0xff] 0.0
    %25 = vst [vmem:[#allocation2 + $0x38] sm:$0xff] 0.0
    %26 = vst [vmem:[#allocation2 + $0x40] sm:$0xff] 0.0
    %27 = vst [vmem:[#allocation2 + $0x48] sm:$0xff] 0.0
    %28 = vst [vmem:[#allocation2 + $0x50] sm:$0xff] 0.0
    %29 = vst [vmem:[#allocation2 + $0x58] sm:$0xff] 0.0
    %30 = vst [vmem:[#allocation2 + $0x60] sm:$0xff] 0.0
    %31 = vst [vmem:[#allocation2 + $0x68] sm:$0xff] 0.0
    %32 = vst [vmem:[#allocation2 + $0x70] sm:$0xff] 0.0
    %33 = vst [vmem:[#allocation2 + $0x78] sm:$0xff] 0.0
    %34 = vst [vmem:[#allocation2 + $0x80] sm:$0xff] 0.0
    %35 = vst [vmem:[#allocation2 + $0x88] sm:$0xff] 0.0
    %36 = vst [vmem:[#allocation2 + $0x90] sm:$0xff] 0.0
    %37 = vst [vmem:[#allocation2 + $0x98] sm:$0xff] 0.0
    %38 = vst [vmem:[#allocation2 + $0xa0] sm:$0xff] 0.0
    %39 = vst [vmem:[#allocation2 + $0xa8] sm:$0xff] 0.0
    %40 = vst [vmem:[#allocation2 + $0xb0] sm:$0xff] 0.0
    %41 = vst [vmem:[#allocation2 + $0xb8] sm:$0xff] 0.0
    %42 = vst [vmem:[#allocation2 + $0xc0] sm:$0xff] 0.0
    %43 = vst [vmem:[#allocation2 + $0xc8] sm:$0xff] 0.0
    %44 = vst [vmem:[#allocation2 + $0xd0] sm:$0xff] 0.0
    %45 = vst [vmem:[#allocation2 + $0xd8] sm:$0xff] 0.0
    %46 = vst [vmem:[#allocation2 + $0xe0] sm:$0xff] 0.0
    %47 = vst [vmem:[#allocation2 + $0xe8] sm:$0xff] 0.0
    %48 = vst [vmem:[#allocation2 + $0xf0] sm:$0xff] 0.0
    %49 = vst [vmem:[#allocation2 + $0xf8] sm:$0xff] 0.0
  $region17: #{no_norm_discriminator.8} parent=0 // pred_fallthru
    _
  %v50 = vld [vmem:[#allocation2] sm:$0xff]
  %v51 = vld [vmem:[#allocation2 + $0x8] sm:$0xff]
  %v52 = vld [vmem:[#allocation2 + $0x10] sm:$0xff]
  %v53 = vld [vmem:[#allocation2 + $0x18] sm:$0xff]
  %v54 = vld [vmem:[#allocation2 + $0x20] sm:$0xff]
  %v55 = vld [vmem:[#allocation2 + $0x28] sm:$0xff]
  %v56 = vld [vmem:[#allocation2 + $0x30] sm:$0xff]
  %v57 = vld [vmem:[#allocation2 + $0x38] sm:$0xff]
  %v58 = vld [vmem:[#allocation2 + $0x40] sm:$0xff]
  %v59 = vld [vmem:[#allocation2 + $0x48] sm:$0xff]
  %v60 = vld [vmem:[#allocation2 + $0x50] sm:$0xff]
  %v61 = vld [vmem:[#allocation2 + $0x58] sm:$0xff]
  %v62 = vld [vmem:[#allocation2 + $0x60] sm:$0xff]
  %v63 = vld [vmem:[#allocation2 + $0x68] sm:$0xff]
  %v64 = vld [vmem:[#allocation2 + $0x70] sm:$0xff]
  %v65 = vld [vmem:[#allocation2 + $0x78] sm:$0xff]
  %v66 = vld [vmem:[#allocation2 + $0x80] sm:$0xff]
  %v67 = vld [vmem:[#allocation2 + $0x88] sm:$0xff]
  %v68 = vld [vmem:[#allocation2 + $0x90] sm:$0xff]
  %v69 = vld [vmem:[#allocation2 + $0x98] sm:$0xff]
  %v70 = vld [vmem:[#allocation2 + $0xa0] sm:$0xff]
  %v71 = vld [vmem:[#allocation2 + $0xa8] sm:$0xff]
  %v72 = vld [vmem:[#allocation2 + $0xb0] sm:$0xff]
  %v73 = vld [vmem:[#allocation2 + $0xb8] sm:$0xff]
  %v74 = vld [vmem:[#allocation2 + $0xc0] sm:$0xff]
  %v75 = vld [vmem:[#allocation2 + $0xc8] sm:$0xff]
  %v76 = vld [vmem:[#allocation2 + $0xd0] sm:$0xff]
  %v77 = vld [vmem:[#allocation2 + $0xd8] sm:$0xff]
  %v78 = vld [vmem:[#allocation2 + $0xe0] sm:$0xff]
  %v79 = vld [vmem:[#allocation2 + $0xe8] sm:$0xff]
  %v80 = vld [vmem:[#allocation2 + $0xf0] sm:$0xff]
  %v81 = vld [vmem:[#allocation2 + $0xf8] sm:$0xff]
  %v82 = vld [vmem:[%s0] sm:$0xff]
  %v83 = vld [vmem:[%s0 + $0x8] sm:$0xff]
  %v84 = vld [vmem:[%s0 + $0x10] sm:$0xff]
  %v85 = vld [vmem:[%s0 + $0x18] sm:$0xff]
  %v86 = vld [vmem:[%s0 + $0x20] sm:$0xff]
  %v87 = vld [vmem:[%s0 + $0x28] sm:$0xff]
  %v88 = vld [vmem:[%s0 + $0x30] sm:$0xff]
  %v89 = vld [vmem:[%s0 + $0x38] sm:$0xff]
  %v90 = vld [vmem:[%s0 + $0x40] sm:$0xff]
  %v91 = vld [vmem:[%s0 + $0x48] sm:$0xff]
  %v92 = vld [vmem:[%s0 + $0x50] sm:$0xff]
  %v93 = vld [vmem:[%s0 + $0x58] sm:$0xff]
  %v94 = vld [vmem:[%s0 + $0x60] sm:$0xff]
  %v95 = vld [vmem:[%s0 + $0x68] sm:$0xff]
  %v96 = vld [vmem:[%s0 + $0x70] sm:$0xff]
  %v97 = vld [vmem:[%s0 + $0x78] sm:$0xff]
  %v98 = vld [vmem:[%s0 + $0x80] sm:$0xff]
  %v99 = vld [vmem:[%s0 + $0x88] sm:$0xff]
  %v100 = vld [vmem:[%s0 + $0x90] sm:$0xff]
  %v101 = vld [vmem:[%s0 + $0x98] sm:$0xff]
  %v102 = vld [vmem:[%s0 + $0xa0] sm:$0xff]
  %v103 = vld [vmem:[%s0 + $0xa8] sm:$0xff]
  %v104 = vld [vmem:[%s0 + $0xb0] sm:$0xff]
  %v105 = vld [vmem:[%s0 + $0xb8] sm:$0xff]
  %v106 = vld [vmem:[%s0 + $0xc0] sm:$0xff]
  %v107 = vld [vmem:[%s0 + $0xc8] sm:$0xff]
  %v108 = vld [vmem:[%s0 + $0xd0] sm:$0xff]
  %v109 = vld [vmem:[%s0 + $0xd8] sm:$0xff]
  %v110 = vld [vmem:[%s0 + $0xe0] sm:$0xff]
  %v111 = vld [vmem:[%s0 + $0xe8] sm:$0xff]
  %v112 = vld [vmem:[%s0 + $0xf0] sm:$0xff]
  %v113 = vld [vmem:[%s0 + $0xf8] sm:$0xff]
  %v114 = vld [vmem:[%s0 + $0x100] sm:$0xff]
  %v115 = vld [vmem:[%s0 + $0x108] sm:$0xff]
  %v116 = vld [vmem:[%s0 + $0x110] sm:$0xff]
  %v117 = vld [vmem:[%s0 + $0x118] sm:$0xff]
  %v118 = vld [vmem:[%s0 + $0x120] sm:$0xff]
  %v119 = vld [vmem:[%s0 + $0x128] sm:$0xff]
  %v120 = vld [vmem:[%s0 + $0x130] sm:$0xff]
  %v121 = vld [vmem:[%s0 + $0x138] sm:$0xff]
  %v122 = vld [vmem:[%s0 + $0x140] sm:$0xff]
  %v123 = vld [vmem:[%s0 + $0x148] sm:$0xff]
  %v124 = vld [vmem:[%s0 + $0x150] sm:$0xff]
  %v125 = vld [vmem:[%s0 + $0x158] sm:$0xff]
  %v126 = vld [vmem:[%s0 + $0x160] sm:$0xff]
  %v127 = vld [vmem:[%s0 + $0x168] sm:$0xff]
  %v128 = vld [vmem:[%s0 + $0x170] sm:$0xff]
  %v129 = vld [vmem:[%s0 + $0x178] sm:$0xff]
  %v130 = vld [vmem:[%s0 + $0x180] sm:$0xff]
  %v131 = vld [vmem:[%s0 + $0x188] sm:$0xff]
  %v132 = vld [vmem:[%s0 + $0x190] sm:$0xff]
  %v133 = vld [vmem:[%s0 + $0x198] sm:$0xff]
  %v134 = vld [vmem:[%s0 + $0x1a0] sm:$0xff]
  %v135 = vld [vmem:[%s0 + $0x1a8] sm:$0xff]
  %v136 = vld [vmem:[%s0 + $0x1b0] sm:$0xff]
  %v137 = vld [vmem:[%s0 + $0x1b8] sm:$0xff]
  %v138 = vld [vmem:[%s0 + $0x1c0] sm:$0xff]
  %v139 = vld [vmem:[%s0 + $0x1c8] sm:$0xff]
  %v140 = vld [vmem:[%s0 + $0x1d0] sm:$0xff]
  %v141 = vld [vmem:[%s0 + $0x1d8] sm:$0xff]
  %v142 = vld [vmem:[%s0 + $0x1e0] sm:$0xff]
  %v143 = vld [vmem:[%s0 + $0x1e8] sm:$0xff]
  %v144 = vld [vmem:[%s0 + $0x1f0] sm:$0xff]
  %v145 = vld [vmem:[%s0 + $0x1f8] sm:$0xff]
  %v146 = vld [vmem:[%s0 + $0x200] sm:$0xff]
  %v147 = vld [vmem:[%s0 + $0x208] sm:$0xff]
  %v148 = vld [vmem:[%s0 + $0x210] sm:$0xff]
  %v149 = vld [vmem:[%s0 + $0x218] sm:$0xff]
  %v150 = vld [vmem:[%s0 + $0x220] sm:$0xff]
  %v151 = vld [vmem:[%s0 + $0x228] sm:$0xff]
  %v152 = vld [vmem:[%s0 + $0x230] sm:$0xff]
  %v153 = vld [vmem:[%s0 + $0x238] sm:$0xff]
  %v154 = vld [vmem:[%s0 + $0x240] sm:$0xff]
  %v155 = vld [vmem:[%s0 + $0x248] sm:$0xff]
  %v156 = vld [vmem:[%s0 + $0x250] sm:$0xff]
  %v157 = vld [vmem:[%s0 + $0x258] sm:$0xff]
  %v158 = vld [vmem:[%s0 + $0x260] sm:$0xff]
  %v159 = vld [vmem:[%s0 + $0x268] sm:$0xff]
  %v160 = vld [vmem:[%s0 + $0x270] sm:$0xff]
  %v161 = vld [vmem:[%s0 + $0x278] sm:$0xff]
  %v162 = vld [vmem:[%s0 + $0x280] sm:$0xff]
  %v163 = vld [vmem:[%s0 + $0x288] sm:$0xff]
  %v164 = vld [vmem:[%s0 + $0x290] sm:$0xff]
  %v165 = vld [vmem:[%s0 + $0x298] sm:$0xff]
  %v166 = vld [vmem:[%s0 + $0x2a0] sm:$0xff]
  %v167 = vld [vmem:[%s0 + $0x2a8] sm:$0xff]
  %v168 = vld [vmem:[%s0 + $0x2b0] sm:$0xff]
  %v169 = vld [vmem:[%s0 + $0x2b8] sm:$0xff]
  %v170 = vld [vmem:[%s0 + $0x2c0] sm:$0xff]
  %v171 = vld [vmem:[%s0 + $0x2c8] sm:$0xff]
  %v172 = vld [vmem:[%s0 + $0x2d0] sm:$0xff]
  %v173 = vld [vmem:[%s0 + $0x2d8] sm:$0xff]
  %v174 = vld [vmem:[%s0 + $0x2e0] sm:$0xff]
  %v175 = vld [vmem:[%s0 + $0x2e8] sm:$0xff]
  %v176 = vld [vmem:[%s0 + $0x2f0] sm:$0xff]
  %v177 = vld [vmem:[%s0 + $0x2f8] sm:$0xff]
  %v178 = vld [vmem:[%s0 + $0x300] sm:$0xff]
  %v179 = vld [vmem:[%s0 + $0x308] sm:$0xff]
  %v180 = vld [vmem:[%s0 + $0x310] sm:$0xff]
  %v181 = vld [vmem:[%s0 + $0x318] sm:$0xff]
  %v182 = vld [vmem:[%s0 + $0x320] sm:$0xff]
  %v183 = vld [vmem:[%s0 + $0x328] sm:$0xff]
  %v184 = vld [vmem:[%s0 + $0x330] sm:$0xff]
  %v185 = vld [vmem:[%s0 + $0x338] sm:$0xff]
  %v186 = vld [vmem:[%s0 + $0x340] sm:$0xff]
  %v187 = vld [vmem:[%s0 + $0x348] sm:$0xff]
  %v188 = vld [vmem:[%s0 + $0x350] sm:$0xff]
  %v189 = vld [vmem:[%s0 + $0x358] sm:$0xff]
  %v190 = vld [vmem:[%s0 + $0x360] sm:$0xff]
  %v191 = vld [vmem:[%s0 + $0x368] sm:$0xff]
  %v192 = vld [vmem:[%s0 + $0x370] sm:$0xff]
  %v193 = vld [vmem:[%s0 + $0x378] sm:$0xff]
  %v194 = vld [vmem:[%s0 + $0x380] sm:$0xff]
  %v195 = vld [vmem:[%s0 + $0x388] sm:$0xff]
  %v196 = vld [vmem:[%s0 + $0x390] sm:$0xff]
  %v197 = vld [vmem:[%s0 + $0x398] sm:$0xff]
  %v198 = vld [vmem:[%s0 + $0x3a0] sm:$0xff]
  %v199 = vld [vmem:[%s0 + $0x3a8] sm:$0xff]
  %v200 = vld [vmem:[%s0 + $0x3b0] sm:$0xff]
  %v201 = vld [vmem:[%s0 + $0x3b8] sm:$0xff]
  %v202 = vld [vmem:[%s0 + $0x3c0] sm:$0xff]
  %v203 = vld [vmem:[%s0 + $0x3c8] sm:$0xff]
  %v204 = vld [vmem:[%s0 + $0x3d0] sm:$0xff]
  %v205 = vld [vmem:[%s0 + $0x3d8] sm:$0xff]
  %v206 = vld [vmem:[%s0 + $0x3e0] sm:$0xff]
  %v207 = vld [vmem:[%s0 + $0x3e8] sm:$0xff]
  %v208 = vld [vmem:[%s0 + $0x3f0] sm:$0xff]
  %v209 = vld [vmem:[%s0 + $0x3f8] sm:$0xff]
  %v210 = vld [vmem:[%s1] sm:$0xff]
  %v211 = vld [vmem:[%s1 + $0x8] sm:$0xff]
  %v212 = vld [vmem:[%s1 + $0x10] sm:$0xff]
  %v213 = vld [vmem:[%s1 + $0x18] sm:$0xff]
  %v214 = vld [vmem:[%s1 + $0x20] sm:$0xff]
  %v215 = vld [vmem:[%s1 + $0x28] sm:$0xff]
  %v216 = vld [vmem:[%s1 + $0x30] sm:$0xff]
  %v217 = vld [vmem:[%s1 + $0x38] sm:$0xff]
  %v218 = vld [vmem:[%s1 + $0x40] sm:$0xff]
  %v219 = vld [vmem:[%s1 + $0x48] sm:$0xff]
  %v220 = vld [vmem:[%s1 + $0x50] sm:$0xff]
  %v221 = vld [vmem:[%s1 + $0x58] sm:$0xff]
  %v222 = vld [vmem:[%s1 + $0x60] sm:$0xff]
  %v223 = vld [vmem:[%s1 + $0x68] sm:$0xff]
  %v224 = vld [vmem:[%s1 + $0x70] sm:$0xff]
  %v225 = vld [vmem:[%s1 + $0x78] sm:$0xff]
  %v226 = vld [vmem:[%s1 + $0x80] sm:$0xff]
  %v227 = vld [vmem:[%s1 + $0x88] sm:$0xff]
  %v228 = vld [vmem:[%s1 + $0x90] sm:$0xff]
  %v229 = vld [vmem:[%s1 + $0x98] sm:$0xff]
  %v230 = vld [vmem:[%s1 + $0xa0] sm:$0xff]
  %v231 = vld [vmem:[%s1 + $0xa8] sm:$0xff]
  %v232 = vld [vmem:[%s1 + $0xb0] sm:$0xff]
  %v233 = vld [vmem:[%s1 + $0xb8] sm:$0xff]
  %v234 = vld [vmem:[%s1 + $0xc0] sm:$0xff]
  %v235 = vld [vmem:[%s1 + $0xc8] sm:$0xff]
  %v236 = vld [vmem:[%s1 + $0xd0] sm:$0xff]
  %v237 = vld [vmem:[%s1 + $0xd8] sm:$0xff]
  %v238 = vld [vmem:[%s1 + $0xe0] sm:$0xff]
  %v239 = vld [vmem:[%s1 + $0xe8] sm:$0xff]
  %v240 = vld [vmem:[%s1 + $0xf0] sm:$0xff]
  %v241 = vld [vmem:[%s1 + $0xf8] sm:$0xff]
  %v242 = vld [vmem:[%s1 + $0x100] sm:$0xff]
  %v243 = vld [vmem:[%s1 + $0x108] sm:$0xff]
  %v244 = vld [vmem:[%s1 + $0x110] sm:$0xff]
  %v245 = vld [vmem:[%s1 + $0x118] sm:$0xff]
  %v246 = vld [vmem:[%s1 + $0x120] sm:$0xff]
  %v247 = vld [vmem:[%s1 + $0x128] sm:$0xff]
  %v248 = vld [vmem:[%s1 + $0x130] sm:$0xff]
  %v249 = vld [vmem:[%s1 + $0x138] sm:$0xff]
  %v250 = vld [vmem:[%s1 + $0x140] sm:$0xff]
  %v251 = vld [vmem:[%s1 + $0x148] sm:$0xff]
  %v252 = vld [vmem:[%s1 + $0x150] sm:$0xff]
  %v253 = vld [vmem:[%s1 + $0x158] sm:$0xff]
  %v254 = vld [vmem:[%s1 + $0x160] sm:$0xff]
  %v255 = vld [vmem:[%s1 + $0x168] sm:$0xff]
  %v256 = vld [vmem:[%s1 + $0x170] sm:$0xff]
  %v257 = vld [vmem:[%s1 + $0x178] sm:$0xff]
  %v258 = vld [vmem:[%s1 + $0x180] sm:$0xff]
  %v259 = vld [vmem:[%s1 + $0x188] sm:$0xff]
  %v260 = vld [vmem:[%s1 + $0x190] sm:$0xff]
  %v261 = vld [vmem:[%s1 + $0x198] sm:$0xff]
  %v262 = vld [vmem:[%s1 + $0x1a0] sm:$0xff]
  %v263 = vld [vmem:[%s1 + $0x1a8] sm:$0xff]
  %v264 = vld [vmem:[%s1 + $0x1b0] sm:$0xff]
  %v265 = vld [vmem:[%s1 + $0x1b8] sm:$0xff]
  %v266 = vld [vmem:[%s1 + $0x1c0] sm:$0xff]
  %v267 = vld [vmem:[%s1 + $0x1c8] sm:$0xff]
  %v268 = vld [vmem:[%s1 + $0x1d0] sm:$0xff]
  %v269 = vld [vmem:[%s1 + $0x1d8] sm:$0xff]
  %v270 = vld [vmem:[%s1 + $0x1e0] sm:$0xff]
  %v271 = vld [vmem:[%s1 + $0x1e8] sm:$0xff]
  %v272 = vld [vmem:[%s1 + $0x1f0] sm:$0xff]
  %v273 = vld [vmem:[%s1 + $0x1f8] sm:$0xff]
  %274 = vmatprep.subr.mxu0 0.0
  %275 = vmatpush1.msra.mxu0 %v210
  %276 = vmatprep.subr.mxu0 0.0
  %277 = vmatpush1.msra.mxu0 %v211
  %278 = vmatprep.subr.mxu0 0.0
  %279 = vmatpush1.msra.mxu0 %v212
  %280 = vmatprep.subr.mxu0 0.0
  %281 = vmatpush1.msra.mxu0 %v213
  %282 = vmatprep.subr.mxu0 0.0
  %283 = vmatpush1.msra.mxu0 %v214
  %284 = vmatprep.subr.mxu0 0.0
  %285 = vmatpush1.msra.mxu0 %v215
  %286 = vmatprep.subr.mxu0 0.0
  %287 = vmatpush1.msra.mxu0 %v216
  %288 = vmatprep.subr.mxu0 0.0
  %289 = vmatpush1.msra.mxu0 %v217
  %290 = vmatprep.subr.mxu0 0.0
  %291 = vmatpush1.msra.mxu0 %v218
  %292 = vmatprep.subr.mxu0 0.0
  %293 = vmatpush1.msra.mxu0 %v219
  %294 = vmatprep.subr.mxu0 0.0
  %295 = vmatpush1.msra.mxu0 %v220
  %296 = vmatprep.subr.mxu0 0.0
  %297 = vmatpush1.msra.mxu0 %v221
  %298 = vmatprep.subr.mxu0 0.0
  %299 = vmatpush1.msra.mxu0 %v222
  %300 = vmatprep.subr.mxu0 0.0
  %301 = vmatpush1.msra.mxu0 %v223
  %302 = vmatprep.subr.mxu0 0.0
  %303 = vmatpush1.msra.mxu0 %v224
  %304 = vmatprep.subr.mxu0 0.0
  %305 = vmatpush1.msra.mxu0 %v225
  %306 = vmatprep.subr.mxu0 0.0
  %307 = vmatpush1.msra.mxu0 %v226
  %308 = vmatprep.subr.mxu0 0.0
  %309 = vmatpush1.msra.mxu0 %v227
  %310 = vmatprep.subr.mxu0 0.0
  %311 = vmatpush1.msra.mxu0 %v228
  %312 = vmatprep.subr.mxu0 0.0
  %313 = vmatpush1.msra.mxu0 %v229
  %314 = vmatprep.subr.mxu0 0.0
  %315 = vmatpush1.msra.mxu0 %v230
  %316 = vmatprep.subr.mxu0 0.0
  %317 = vmatpush1.msra.mxu0 %v231
  %318 = vmatprep.subr.mxu0 0.0
  %319 = vmatpush1.msra.mxu0 %v232
  %320 = vmatprep.subr.mxu0 0.0
  %321 = vmatpush1.msra.mxu0 %v233
  %322 = vmatprep.subr.mxu0 0.0
  %323 = vmatpush1.msra.mxu0 %v234
  %324 = vmatprep.subr.mxu0 0.0
  %325 = vmatpush1.msra.mxu0 %v235
  %326 = vmatprep.subr.mxu0 0.0
  %327 = vmatpush1.msra.mxu0 %v236
  %328 = vmatprep.subr.mxu0 0.0
  %329 = vmatpush1.msra.mxu0 %v237
  %330 = vmatprep.subr.mxu0 0.0
  %331 = vmatpush1.msra.mxu0 %v238
  %332 = vmatprep.subr.mxu0 0.0
  %333 = vmatpush1.msra.mxu0 %v239
  %334 = vmatprep.subr.mxu0 0.0
  %335 = vmatpush1.msra.mxu0 %v240
  %336 = vmatprep.subr.mxu0 0.0
  %337 = vmatpush1.msra.mxu0 %v241
  %338 = vmatprep.mubr.f32.mxu0 %v83
  %339 = vmatmul.mubr.f32.gmra.mrb[0].mxu0 %v82
  %v340 = vpop.f32.mrb[0].mxu0
  %v341 = vadd.f32 0.0, %v340
  %v342 = vpop.f32.mrb[0].mxu0
  %343 = vmatprep.mubr.f32.mxu0 %v87
  %344 = vmatmul.mubr.f32.gmra.mrb[0].mxu0 %v86
  %v345 = vpop.f32.mrb[0].mxu0
  %v346 = vadd.f32 0.0, %v345
  %v347 = vpop.f32.mrb[0].mxu0
  %348 = vmatprep.mubr.f32.mxu0 %v91
  %349 = vmatmul.mubr.f32.gmra.mrb[0].mxu0 %v90
  %v350 = vpop.f32.mrb[0].mxu0
  %v351 = vadd.f32 0.0, %v350
  %v352 = vpop.f32.mrb[0].mxu0
  %353 = vmatprep.mubr.f32.mxu0 %v95
  %354 = vmatmul.mubr.f32.gmra.mrb[0].mxu0 %v94
  %v355 = vpop.f32.mrb[0].mxu0
  %v356 = vadd.f32 0.0, %v355
  %v357 = vpop.f32.mrb[0].mxu0
  %358 = vmatprep.mubr.f32.mxu0 %v99
  %359 = vmatmul.mubr.f32.gmra.mrb[0].mxu0 %v98
  %v360 = vpop.f32.mrb[0].mxu0
  %v361 = vadd.f32 0.0, %v360
  %v362 = vpop.f32.mrb[0].mxu0
  %363 = vmatprep.mubr.f32.mxu0 %v103
  %364 = vmatmul.mubr.f32.gmra.mrb[0].mxu0 %v102
  %v365 = vpop.f32.mrb[0].mxu0
  %v366 = vadd.f32 0.0, %v365
  %v367 = vpop.f32.mrb[0].mxu0
  %368 = vmatprep.mubr.f32.mxu0 %v107
  %369 = vmatmul.mubr.f32.gmra.mrb[0].mxu0 %v106
  %v370 = vpop.f32.mrb[0].mxu0
  %v371 = vadd.f32 0.0, %v370
  %v372 = vpop.f32.mrb[0].mxu0
  %373 = vmatprep.mubr.f32.mxu0 %v111
  %374 = vmatmul.mubr.f32.gmra.mrb[0].mxu0 %v110
  %v375 = vpop.f32.mrb[0].mxu0
  %v376 = vadd.f32 0.0, %v375
  %v377 = vpop.f32.mrb[0].mxu0
  %378 = vmatprep.mubr.f32.mxu0 %v115
  %379 = vmatmul.mubr.f32.gmra.mrb[0].mxu0 %v114
  %v380 = vpop.f32.mrb[0].mxu0
  %v381 = vadd.f32 0.0, %v380
  %v382 = vpop.f32.mrb[0].mxu0
  %383 = vmatprep.mubr.f32.mxu0 %v119
  %384 = vmatmul.mubr.f32.gmra.mrb[0].mxu0 %v118
  %v385 = vpop.f32.mrb[0].mxu0
  %v386 = vadd.f32 0.0, %v385
  %v387 = vpop.f32.mrb[0].mxu0
  %388 = vmatprep.mubr.f32.mxu0 %v123
  %389 = vmatmul.mubr.f32.gmra.mrb[0].mxu0 %v122
  %v390 = vpop.f32.mrb[0].mxu0
  %v391 = vadd.f32 0.0, %v390
  %v392 = vpop.f32.mrb[0].mxu0
  %393 = vmatprep.mubr.f32.mxu0 %v127
  %394 = vmatmul.mubr.f32.gmra.mrb[0].mxu0 %v126
  %v395 = vpop.f32.mrb[0].mxu0
  %v396 = vadd.f32 0.0, %v395
  %v397 = vpop.f32.mrb[0].mxu0
  %398 = vmatprep.mubr.f32.mxu0 %v131
  %399 = vmatmul.mubr.f32.gmra.mrb[0].mxu0 %v130
  %v400 = vpop.f32.mrb[0].mxu0
  %v401 = vadd.f32 0.0, %v400
  %v402 = vpop.f32.mrb[0].mxu0
  %403 = vmatprep.mubr.f32.mxu0 %v135
  %404 = vmatmul.mubr.f32.gmra.mrb[0].mxu0 %v134
  %v405 = vpop.f32.mrb[0].mxu0
  %v406 = vadd.f32 0.0, %v405
  %v407 = vpop.f32.mrb[0].mxu0
  %408 = vmatprep.mubr.f32.mxu0 %v139
  %409 = vmatmul.mubr.f32.gmra.mrb[0].mxu0 %v138
  %v410 = vpop.f32.mrb[0].mxu0
  %v411 = vadd.f32 0.0, %v410
  %v412 = vpop.f32.mrb[0].mxu0
  %413 = vmatprep.mubr.f32.mxu0 %v143
  %414 = vmatmul.mubr.f32.gmra.mrb[0].mxu0 %v142
  %v415 = vpop.f32.mrb[0].mxu0
  %v416 = vadd.f32 0.0, %v415
  %v417 = vpop.f32.mrb[0].mxu0
  %418 = vmatprep.mubr.f32.mxu0 %v147
  %419 = vmatmul.mubr.f32.gmra.mrb[0].mxu0 %v146
  %v420 = vpop.f32.mrb[0].mxu0
  %v421 = vadd.f32 0.0, %v420
  %v422 = vpop.f32.mrb[0].mxu0
  %423 = vmatprep.mubr.f32.mxu0 %v151
  %424 = vmatmul.mubr.f32.gmra.mrb[0].mxu0 %v150
  %v425 = vpop.f32.mrb[0].mxu0
  %v426 = vadd.f32 0.0, %v425
  %v427 = vpop.f32.mrb[0].mxu0
  %428 = vmatprep.mubr.f32.mxu0 %v155
  %429 = vmatmul.mubr.f32.gmra.mrb[0].mxu0 %v154
  %v430 = vpop.f32.mrb[0].mxu0
  %v431 = vadd.f32 0.0, %v430
  %v432 = vpop.f32.mrb[0].mxu0
  %433 = vmatprep.mubr.f32.mxu0 %v159
  %434 = vmatmul.mubr.f32.gmra.mrb[0].mxu0 %v158
  %v435 = vpop.f32.mrb[0].mxu0
  %v436 = vadd.f32 0.0, %v435
  %v437 = vpop.f32.mrb[0].mxu0
  %438 = vmatprep.mubr.f32.mxu0 %v163
  %439 = vmatmul.mubr.f32.gmra.mrb[0].mxu0 %v162
  %v440 = vpop.f32.mrb[0].mxu0
  %v441 = vadd.f32 0.0, %v440
  %v442 = vpop.f32.mrb[0].mxu0
  %443 = vmatprep.mubr.f32.mxu0 %v167
  %444 = vmatmul.mubr.f32.gmra.mrb[0].mxu0 %v166
  %v445 = vpop.f32.mrb[0].mxu0
  %v446 = vadd.f32 0.0, %v445
  %v447 = vpop.f32.mrb[0].mxu0
  %448 = vmatprep.mubr.f32.mxu0 %v171
  %449 = vmatmul.mubr.f32.gmra.mrb[0].mxu0 %v170
  %v450 = vpop.f32.mrb[0].mxu0
  %v451 = vadd.f32 0.0, %v450
  %v452 = vpop.f32.mrb[0].mxu0
  %453 = vmatprep.mubr.f32.mxu0 %v175
  %454 = vmatmul.mubr.f32.gmra.mrb[0].mxu0 %v174
  %v455 = vpop.f32.mrb[0].mxu0
  %v456 = vadd.f32 0.0, %v455
  %v457 = vpop.f32.mrb[0].mxu0
  %458 = vmatprep.mubr.f32.mxu0 %v179
  %459 = vmatmul.mubr.f32.gmra.mrb[0].mxu0 %v178
  %v460 = vpop.f32.mrb[0].mxu0
  %v461 = vadd.f32 0.0, %v460
  %v462 = vpop.f32.mrb[0].mxu0
  %463 = vmatprep.mubr.f32.mxu0 %v183
  %464 = vmatmul.mubr.f32.gmra.mrb[0].mxu0 %v182
  %v465 = vpop.f32.mrb[0].mxu0
  %v466 = vadd.f32 0.0, %v465
  %v467 = vpop.f32.mrb[0].mxu0
  %468 = vmatprep.mubr.f32.mxu0 %v187
  %469 = vmatmul.mubr.f32.gmra.mrb[0].mxu0 %v186
  %v470 = vpop.f32.mrb[0].mxu0
  %v471 = vadd.f32 0.0, %v470
  %v472 = vpop.f32.mrb[0].mxu0
  %473 = vmatprep.mubr.f32.mxu0 %v191
  %474 = vmatmul.mubr.f32.gmra.mrb[0].mxu0 %v190
  %v475 = vpop.f32.mrb[0].mxu0
  %v476 = vadd.f32 0.0, %v475
  %v477 = vpop.f32.mrb[0].mxu0
  %478 = vmatprep.mubr.f32.mxu0 %v195
  %479 = vmatmul.mubr.f32.gmra.mrb[0].mxu0 %v194
  %v480 = vpop.f32.mrb[0].mxu0
  %v481 = vadd.f32 0.0, %v480
  %v482 = vpop.f32.mrb[0].mxu0
  %483 = vmatprep.mubr.f32.mxu0 %v199
  %484 = vmatmul.mubr.f32.gmra.mrb[0].mxu0 %v198
  %v485 = vpop.f32.mrb[0].mxu0
  %v486 = vadd.f32 0.0, %v485
  %v487 = vpop.f32.mrb[0].mxu0
  %488 = vmatprep.mubr.f32.mxu0 %v203
  %489 = vmatmul.mubr.f32.gmra.mrb[0].mxu0 %v202
  %v490 = vpop.f32.mrb[0].mxu0
  %v491 = vadd.f32 0.0, %v490
  %v492 = vpop.f32.mrb[0].mxu0
  %493 = vmatprep.mubr.f32.mxu0 %v207
  %494 = vmatmul.mubr.f32.gmra.mrb[0].mxu0 %v206
  %v495 = vpop.f32.mrb[0].mxu0
  %v496 = vadd.f32 0.0, %v495
  %v497 = vpop.f32.mrb[0].mxu0
  %498 = vdwg.mxu0
  %499 = vmatprep.subr.mxu0 0.0
  %500 = vmatpush1.msra.mxu0 %v242
  %501 = vmatprep.subr.mxu0 0.0
  %502 = vmatpush1.msra.mxu0 %v243
  %503 = vmatprep.subr.mxu0 0.0
  %504 = vmatpush1.msra.mxu0 %v244
  %505 = vmatprep.subr.mxu0 0.0
  %506 = vmatpush1.msra.mxu0 %v245
  %507 = vmatprep.subr.mxu0 0.0
  %508 = vmatpush1.msra.mxu0 %v246
  %509 = vmatprep.subr.mxu0 0.0
  %510 = vmatpush1.msra.mxu0 %v247
  %511 = vmatprep.subr.mxu0 0.0
  %512 = vmatpush1.msra.mxu0 %v248
  %513 = vmatprep.subr.mxu0 0.0
  %514 = vmatpush1.msra.mxu0 %v249
  %515 = vmatprep.subr.mxu0 0.0
  %516 = vmatpush1.msra.mxu0 %v250
  %517 = vmatprep.subr.mxu0 0.0
  %518 = vmatpush1.msra.mxu0 %v251
  %519 = vmatprep.subr.mxu0 0.0
  %520 = vmatpush1.msra.mxu0 %v252
  %521 = vmatprep.subr.mxu0 0.0
  %522 = vmatpush1.msra.mxu0 %v253
  %523 = vmatprep.subr.mxu0 0.0
  %524 = vmatpush1.msra.mxu0 %v254
  %525 = vmatprep.subr.mxu0 0.0
  %526 = vmatpush1.msra.mxu0 %v255
  %527 = vmatprep.subr.mxu0 0.0
  %528 = vmatpush1.msra.mxu0 %v256
  %529 = vmatprep.subr.mxu0 0.0
  %530 = vmatpush1.msra.mxu0 %v257
  %531 = vmatprep.subr.mxu0 0.0
  %532 = vmatpush1.msra.mxu0 %v258
  %533 = vmatprep.subr.mxu0 0.0
  %534 = vmatpush1.msra.mxu0 %v259
  %535 = vmatprep.subr.mxu0 0.0
  %536 = vmatpush1.msra.mxu0 %v260
  %537 = vmatprep.subr.mxu0 0.0
  %538 = vmatpush1.msra.mxu0 %v261
  %539 = vmatprep.subr.mxu0 0.0
  %540 = vmatpush1.msra.mxu0 %v262
  %541 = vmatprep.subr.mxu0 0.0
  %542 = vmatpush1.msra.mxu0 %v263
  %543 = vmatprep.subr.mxu0 0.0
  %544 = vmatpush1.msra.mxu0 %v264
  %545 = vmatprep.subr.mxu0 0.0
  %546 = vmatpush1.msra.mxu0 %v265
  %547 = vmatprep.subr.mxu0 0.0
  %548 = vmatpush1.msra.mxu0 %v266
  %549 = vmatprep.subr.mxu0 0.0
  %550 = vmatpush1.msra.mxu0 %v267
  %551 = vmatprep.subr.mxu0 0.0
  %552 = vmatpush1.msra.mxu0 %v268
  %553 = vmatprep.subr.mxu0 0.0
  %554 = vmatpush1.msra.mxu0 %v269
  %555 = vmatprep.subr.mxu0 0.0
  %556 = vmatpush1.msra.mxu0 %v270
  %557 = vmatprep.subr.mxu0 0.0
  %558 = vmatpush1.msra.mxu0 %v271
  %559 = vmatprep.subr.mxu0 0.0
  %560 = vmatpush1.msra.mxu0 %v272
  %561 = vmatprep.subr.mxu0 0.0
  %562 = vmatpush1.msra.mxu0 %v273
  %563 = vmatprep.mubr.f32.mxu0 %v85
  %564 = vmatmul.mubr.f32.gmra.mrb[0].mxu0 %v84
  %v565 = vpop.f32.mrb[0].mxu0
  %v566 = vadd.f32 %v341, %v565
  %v567 = vpop.f32.mrb[0].mxu0
  %568 = vmatprep.mubr.f32.mxu0 %v89
  %569 = vmatmul.mubr.f32.gmra.mrb[0].mxu0 %v88
  %v570 = vpop.f32.mrb[0].mxu0
  %v571 = vadd.f32 %v346, %v570
  %v572 = vpop.f32.mrb[0].mxu0
  %573 = vmatprep.mubr.f32.mxu0 %v93
  %574 = vmatmul.mubr.f32.gmra.mrb[0].mxu0 %v92
  %v575 = vpop.f32.mrb[0].mxu0
  %v576 = vadd.f32 %v351, %v575
  %v577 = vpop.f32.mrb[0].mxu0
  %578 = vmatprep.mubr.f32.mxu0 %v97
  %579 = vmatmul.mubr.f32.gmra.mrb[0].mxu0 %v96
  %v580 = vpop.f32.mrb[0].mxu0
  %v581 = vadd.f32 %v356, %v580
  %v582 = vpop.f32.mrb[0].mxu0
  %583 = vmatprep.mubr.f32.mxu0 %v101
  %584 = vmatmul.mubr.f32.gmra.mrb[0].mxu0 %v100
  %v585 = vpop.f32.mrb[0].mxu0
  %v586 = vadd.f32 %v361, %v585
  %v587 = vpop.f32.mrb[0].mxu0
  %588 = vmatprep.mubr.f32.mxu0 %v105
  %589 = vmatmul.mubr.f32.gmra.mrb[0].mxu0 %v104
  %v590 = vpop.f32.mrb[0].mxu0
  %v591 = vadd.f32 %v366, %v590
  %v592 = vpop.f32.mrb[0].mxu0
  %593 = vmatprep.mubr.f32.mxu0 %v109
  %594 = vmatmul.mubr.f32.gmra.mrb[0].mxu0 %v108
  %v595 = vpop.f32.mrb[0].mxu0
  %v596 = vadd.f32 %v371, %v595
  %v597 = vpop.f32.mrb[0].mxu0
  %598 = vmatprep.mubr.f32.mxu0 %v113
  %599 = vmatmul.mubr.f32.gmra.mrb[0].mxu0 %v112
  %v600 = vpop.f32.mrb[0].mxu0
  %v601 = vadd.f32 %v376, %v600
  %v602 = vpop.f32.mrb[0].mxu0
  %603 = vmatprep.mubr.f32.mxu0 %v117
  %604 = vmatmul.mubr.f32.gmra.mrb[0].mxu0 %v116
  %v605 = vpop.f32.mrb[0].mxu0
  %v606 = vadd.f32 %v381, %v605
  %v607 = vpop.f32.mrb[0].mxu0
  %608 = vmatprep.mubr.f32.mxu0 %v121
  %609 = vmatmul.mubr.f32.gmra.mrb[0].mxu0 %v120
  %v610 = vpop.f32.mrb[0].mxu0
  %v611 = vadd.f32 %v386, %v610
  %v612 = vpop.f32.mrb[0].mxu0
  %613 = vmatprep.mubr.f32.mxu0 %v125
  %614 = vmatmul.mubr.f32.gmra.mrb[0].mxu0 %v124
  %v615 = vpop.f32.mrb[0].mxu0
  %v616 = vadd.f32 %v391, %v615
  %v617 = vpop.f32.mrb[0].mxu0
  %618 = vmatprep.mubr.f32.mxu0 %v129
  %619 = vmatmul.mubr.f32.gmra.mrb[0].mxu0 %v128
  %v620 = vpop.f32.mrb[0].mxu0
  %v621 = vadd.f32 %v396, %v620
  %v622 = vpop.f32.mrb[0].mxu0
  %623 = vmatprep.mubr.f32.mxu0 %v133
  %624 = vmatmul.mubr.f32.gmra.mrb[0].mxu0 %v132
  %v625 = vpop.f32.mrb[0].mxu0
  %v626 = vadd.f32 %v401, %v625
  %v627 = vpop.f32.mrb[0].mxu0
  %628 = vmatprep.mubr.f32.mxu0 %v137
  %629 = vmatmul.mubr.f32.gmra.mrb[0].mxu0 %v136
  %v630 = vpop.f32.mrb[0].mxu0
  %v631 = vadd.f32 %v406, %v630
  %v632 = vpop.f32.mrb[0].mxu0
  %633 = vmatprep.mubr.f32.mxu0 %v141
  %634 = vmatmul.mubr.f32.gmra.mrb[0].mxu0 %v140
  %v635 = vpop.f32.mrb[0].mxu0
  %v636 = vadd.f32 %v411, %v635
  %v637 = vpop.f32.mrb[0].mxu0
  %638 = vmatprep.mubr.f32.mxu0 %v145
  %639 = vmatmul.mubr.f32.gmra.mrb[0].mxu0 %v144
  %v640 = vpop.f32.mrb[0].mxu0
  %v641 = vadd.f32 %v416, %v640
  %v642 = vpop.f32.mrb[0].mxu0
  %643 = vmatprep.mubr.f32.mxu0 %v149
  %644 = vmatmul.mubr.f32.gmra.mrb[0].mxu0 %v148
  %v645 = vpop.f32.mrb[0].mxu0
  %v646 = vadd.f32 %v421, %v645
  %v647 = vpop.f32.mrb[0].mxu0
  %648 = vmatprep.mubr.f32.mxu0 %v153
  %649 = vmatmul.mubr.f32.gmra.mrb[0].mxu0 %v152
  %v650 = vpop.f32.mrb[0].mxu0
  %v651 = vadd.f32 %v426, %v650
  %v652 = vpop.f32.mrb[0].mxu0
  %653 = vmatprep.mubr.f32.mxu0 %v157
  %654 = vmatmul.mubr.f32.gmra.mrb[0].mxu0 %v156
  %v655 = vpop.f32.mrb[0].mxu0
  %v656 = vadd.f32 %v431, %v655
  %v657 = vpop.f32.mrb[0].mxu0
  %658 = vmatprep.mubr.f32.mxu0 %v161
  %659 = vmatmul.mubr.f32.gmra.mrb[0].mxu0 %v160
  %v660 = vpop.f32.mrb[0].mxu0
  %v661 = vadd.f32 %v436, %v660
  %v662 = vpop.f32.mrb[0].mxu0
  %663 = vmatprep.mubr.f32.mxu0 %v165
  %664 = vmatmul.mubr.f32.gmra.mrb[0].mxu0 %v164
  %v665 = vpop.f32.mrb[0].mxu0
  %v666 = vadd.f32 %v441, %v665
  %v667 = vpop.f32.mrb[0].mxu0
  %668 = vmatprep.mubr.f32.mxu0 %v169
  %669 = vmatmul.mubr.f32.gmra.mrb[0].mxu0 %v168
  %v670 = vpop.f32.mrb[0].mxu0
  %v671 = vadd.f32 %v446, %v670
  %v672 = vpop.f32.mrb[0].mxu0
  %673 = vmatprep.mubr.f32.mxu0 %v173
  %674 = vmatmul.mubr.f32.gmra.mrb[0].mxu0 %v172
  %v675 = vpop.f32.mrb[0].mxu0
  %v676 = vadd.f32 %v451, %v675
  %v677 = vpop.f32.mrb[0].mxu0
  %678 = vmatprep.mubr.f32.mxu0 %v177
  %679 = vmatmul.mubr.f32.gmra.mrb[0].mxu0 %v176
  %v680 = vpop.f32.mrb[0].mxu0
  %v681 = vadd.f32 %v456, %v680
  %v682 = vpop.f32.mrb[0].mxu0
  %683 = vmatprep.mubr.f32.mxu0 %v181
  %684 = vmatmul.mubr.f32.gmra.mrb[0].mxu0 %v180
  %v685 = vpop.f32.mrb[0].mxu0
  %v686 = vadd.f32 %v461, %v685
  %v687 = vpop.f32.mrb[0].mxu0
  %688 = vmatprep.mubr.f32.mxu0 %v185
  %689 = vmatmul.mubr.f32.gmra.mrb[0].mxu0 %v184
  %v690 = vpop.f32.mrb[0].mxu0
  %v691 = vadd.f32 %v466, %v690
  %v692 = vpop.f32.mrb[0].mxu0
  %693 = vmatprep.mubr.f32.mxu0 %v189
  %694 = vmatmul.mubr.f32.gmra.mrb[0].mxu0 %v188
  %v695 = vpop.f32.mrb[0].mxu0
  %v696 = vadd.f32 %v471, %v695
  %v697 = vpop.f32.mrb[0].mxu0
  %698 = vmatprep.mubr.f32.mxu0 %v193
  %699 = vmatmul.mubr.f32.gmra.mrb[0].mxu0 %v192
  %v700 = vpop.f32.mrb[0].mxu0
  %v701 = vadd.f32 %v476, %v700
  %v702 = vpop.f32.mrb[0].mxu0
  %703 = vmatprep.mubr.f32.mxu0 %v197
  %704 = vmatmul.mubr.f32.gmra.mrb[0].mxu0 %v196
  %v705 = vpop.f32.mrb[0].mxu0
  %v706 = vadd.f32 %v481, %v705
  %v707 = vpop.f32.mrb[0].mxu0
  %708 = vmatprep.mubr.f32.mxu0 %v201
  %709 = vmatmul.mubr.f32.gmra.mrb[0].mxu0 %v200
  %v710 = vpop.f32.mrb[0].mxu0
  %v711 = vadd.f32 %v486, %v710
  %v712 = vpop.f32.mrb[0].mxu0
  %713 = vmatprep.mubr.f32.mxu0 %v205
  %714 = vmatmul.mubr.f32.gmra.mrb[0].mxu0 %v204
  %v715 = vpop.f32.mrb[0].mxu0
  %v716 = vadd.f32 %v491, %v715
  %v717 = vpop.f32.mrb[0].mxu0
  %718 = vmatprep.mubr.f32.mxu0 %v209
  %719 = vmatmul.mubr.f32.gmra.mrb[0].mxu0 %v208
  %v720 = vpop.f32.mrb[0].mxu0
  %v721 = vadd.f32 %v496, %v720
  %v722 = vpop.f32.mrb[0].mxu0
  %723 = vdwg.mxu0
  %v724 = vadd.f32 %v50, %v566
  %v725 = vadd.f32 %v51, %v571
  %v726 = vadd.f32 %v52, %v576
  %v727 = vadd.f32 %v53, %v581
  %v728 = vadd.f32 %v54, %v586
  %v729 = vadd.f32 %v55, %v591
  %v730 = vadd.f32 %v56, %v596
  %v731 = vadd.f32 %v57, %v601
  %v732 = vadd.f32 %v58, %v606
  %v733 = vadd.f32 %v59, %v611
  %v734 = vadd.f32 %v60, %v616
  %v735 = vadd.f32 %v61, %v621
  %v736 = vadd.f32 %v62, %v626
  %v737 = vadd.f32 %v63, %v631
  %v738 = vadd.f32 %v64, %v636
  %v739 = vadd.f32 %v65, %v641
  %v740 = vadd.f32 %v66, %v646
  %v741 = vadd.f32 %v67, %v651
  %v742 = vadd.f32 %v68, %v656
  %v743 = vadd.f32 %v69, %v661
  %v744 = vadd.f32 %v70, %v666
  %v745 = vadd.f32 %v71, %v671
  %v746 = vadd.f32 %v72, %v676
  %v747 = vadd.f32 %v73, %v681
  %v748 = vadd.f32 %v74, %v686
  %v749 = vadd.f32 %v75, %v691
  %v750 = vadd.f32 %v76, %v696
  %v751 = vadd.f32 %v77, %v701
  %v752 = vadd.f32 %v78, %v706
  %v753 = vadd.f32 %v79, %v711
  %v754 = vadd.f32 %v80, %v716
  %v755 = vadd.f32 %v81, %v721
  %756 = vst [vmem:[#allocation2] sm:$0xff] %v724
  %757 = vst [vmem:[#allocation2 + $0x8] sm:$0xff] %v725
  %758 = vst [vmem:[#allocation2 + $0x10] sm:$0xff] %v726
  %759 = vst [vmem:[#allocation2 + $0x18] sm:$0xff] %v727
  %760 = vst [vmem:[#allocation2 + $0x20] sm:$0xff] %v728
  %761 = vst [vmem:[#allocation2 + $0x28] sm:$0xff] %v729
  %762 = vst [vmem:[#allocation2 + $0x30] sm:$0xff] %v730
  %763 = vst [vmem:[#allocation2 + $0x38] sm:$0xff] %v731
  %764 = vst [vmem:[#allocation2 + $0x40] sm:$0xff] %v732
  %765 = vst [vmem:[#allocation2 + $0x48] sm:$0xff] %v733
  %766 = vst [vmem:[#allocation2 + $0x50] sm:$0xff] %v734
  %767 = vst [vmem:[#allocation2 + $0x58] sm:$0xff] %v735
  %768 = vst [vmem:[#allocation2 + $0x60] sm:$0xff] %v736
  %769 = vst [vmem:[#allocation2 + $0x68] sm:$0xff] %v737
  %770 = vst [vmem:[#allocation2 + $0x70] sm:$0xff] %v738
  %771 = vst [vmem:[#allocation2 + $0x78] sm:$0xff] %v739
  %772 = vst [vmem:[#allocation2 + $0x80] sm:$0xff] %v740
  %773 = vst [vmem:[#allocation2 + $0x88] sm:$0xff] %v741
  %774 = vst [vmem:[#allocation2 + $0x90] sm:$0xff] %v742
  %775 = vst [vmem:[#allocation2 + $0x98] sm:$0xff] %v743
  %776 = vst [vmem:[#allocation2 + $0xa0] sm:$0xff] %v744
  %777 = vst [vmem:[#allocation2 + $0xa8] sm:$0xff] %v745
  %778 = vst [vmem:[#allocation2 + $0xb0] sm:$0xff] %v746
  %779 = vst [vmem:[#allocation2 + $0xb8] sm:$0xff] %v747
  %780 = vst [vmem:[#allocation2 + $0xc0] sm:$0xff] %v748
  %781 = vst [vmem:[#allocation2 + $0xc8] sm:$0xff] %v749
  %782 = vst [vmem:[#allocation2 + $0xd0] sm:$0xff] %v750
  %783 = vst [vmem:[#allocation2 + $0xd8] sm:$0xff] %v751
  %784 = vst [vmem:[#allocation2 + $0xe0] sm:$0xff] %v752
  %785 = vst [vmem:[#allocation2 + $0xe8] sm:$0xff] %v753
  %786 = vst [vmem:[#allocation2 + $0xf0] sm:$0xff] %v754
  %787 = vst [vmem:[#allocation2 + $0xf8] sm:$0xff] %v755
  // Predicated region
  $region18: #{no_norm_discriminator.8} parent=0 // pred_check
    %p788 = pneg %p14
  $region19: #{no_norm_discriminator.8} parent=0 // pred_check_branch
    %790 = sbr.rel (%p788) target = $region21
  $region20: #{no_norm_discriminator.8} parent=0 // pred_region
    %v791 = vld [vmem:[#allocation2] sm:$0xff]
    %v792 = vld [vmem:[#allocation2 + $0x8] sm:$0xff]
    %v793 = vld [vmem:[#allocation2 + $0x10] sm:$0xff]
    %v794 = vld [vmem:[#allocation2 + $0x18] sm:$0xff]
    %v795 = vld [vmem:[#allocation2 + $0x20] sm:$0xff]
    %v796 = vld [vmem:[#allocation2 + $0x28] sm:$0xff]
    %v797 = vld [vmem:[#allocation2 + $0x30] sm:$0xff]
    %v798 = vld [vmem:[#allocation2 + $0x38] sm:$0xff]
    %v799 = vld [vmem:[#allocation2 + $0x40] sm:$0xff]
    %v800 = vld [vmem:[#allocation2 + $0x48] sm:$0xff]
    %v801 = vld [vmem:[#allocation2 + $0x50] sm:$0xff]
    %v802 = vld [vmem:[#allocation2 + $0x58] sm:$0xff]
    %v803 = vld [vmem:[#allocation2 + $0x60] sm:$0xff]
    %v804 = vld [vmem:[#allocation2 + $0x68] sm:$0xff]
    %v805 = vld [vmem:[#allocation2 + $0x70] sm:$0xff]
    %v806 = vld [vmem:[#allocation2 + $0x78] sm:$0xff]
    %v807 = vld [vmem:[#allocation2 + $0x80] sm:$0xff]
    %v808 = vld [vmem:[#allocation2 + $0x88] sm:$0xff]
    %v809 = vld [vmem:[#allocation2 + $0x90] sm:$0xff]
    %v810 = vld [vmem:[#allocation2 + $0x98] sm:$0xff]
    %v811 = vld [vmem:[#allocation2 + $0xa0] sm:$0xff]
    %v812 = vld [vmem:[#allocation2 + $0xa8] sm:$0xff]
    %v813 = vld [vmem:[#allocation2 + $0xb0] sm:$0xff]
    %v814 = vld [vmem:[#allocation2 + $0xb8] sm:$0xff]
    %v815 = vld [vmem:[#allocation2 + $0xc0] sm:$0xff]
    %v816 = vld [vmem:[#allocation2 + $0xc8] sm:$0xff]
    %v817 = vld [vmem:[#allocation2 + $0xd0] sm:$0xff]
    %v818 = vld [vmem:[#allocation2 + $0xd8] sm:$0xff]
    %v819 = vld [vmem:[#allocation2 + $0xe0] sm:$0xff]
    %v820 = vld [vmem:[#allocation2 + $0xe8] sm:$0xff]
    %v821 = vld [vmem:[#allocation2 + $0xf0] sm:$0xff]
    %v822 = vld [vmem:[#allocation2 + $0xf8] sm:$0xff]
    %v823 = vld [vmem:[%s2] sm:$0x1]
    %v825 = vlaneseq
    %v826 = vshrl.u32 %v825, 7
    %v827 = vsub.s32 0, %v826
    %v828 = vrot.slane %v823, %v827
    %v830 = vadd.f32 %v791, %v828
    %v831 = vadd.f32 %v792, %v828
    %v832 = vadd.f32 %v793, %v828
    %v833 = vadd.f32 %v794, %v828
    %v834 = vadd.f32 %v795, %v828
    %v835 = vadd.f32 %v796, %v828
    %v836 = vadd.f32 %v797, %v828
    %v837 = vadd.f32 %v798, %v828
    %v838 = vadd.f32 %v799, %v828
    %v839 = vadd.f32 %v800, %v828
    %v840 = vadd.f32 %v801, %v828
    %v841 = vadd.f32 %v802, %v828
    %v842 = vadd.f32 %v803, %v828
    %v843 = vadd.f32 %v804, %v828
    %v844 = vadd.f32 %v805, %v828
    %v845 = vadd.f32 %v806, %v828
    %v846 = vadd.f32 %v807, %v828
    %v847 = vadd.f32 %v808, %v828
    %v848 = vadd.f32 %v809, %v828
    %v849 = vadd.f32 %v810, %v828
    %v850 = vadd.f32 %v811, %v828
    %v851 = vadd.f32 %v812, %v828
    %v852 = vadd.f32 %v813, %v828
    %v853 = vadd.f32 %v814, %v828
    %v854 = vadd.f32 %v815, %v828
    %v855 = vadd.f32 %v816, %v828
    %v856 = vadd.f32 %v817, %v828
    %v857 = vadd.f32 %v818, %v828
    %v858 = vadd.f32 %v819, %v828
    %v859 = vadd.f32 %v820, %v828
    %v860 = vadd.f32 %v821, %v828
    %v861 = vadd.f32 %v822, %v828
    %vm862 = vcmp.ge.f32.partialorder %v830, 0.0
    %vm863 = vcmp.ge.f32.partialorder %v831, 0.0
    %vm864 = vcmp.ge.f32.partialorder %v832, 0.0
    %vm865 = vcmp.ge.f32.partialorder %v833, 0.0
    %vm866 = vcmp.ge.f32.partialorder %v834, 0.0
    %vm867 = vcmp.ge.f32.partialorder %v835, 0.0
    %vm868 = vcmp.ge.f32.partialorder %v836, 0.0
    %vm869 = vcmp.ge.f32.partialorder %v837, 0.0
    %vm870 = vcmp.ge.f32.partialorder %v838, 0.0
    %vm871 = vcmp.ge.f32.partialorder %v839, 0.0
    %vm872 = vcmp.ge.f32.partialorder %v840, 0.0
    %vm873 = vcmp.ge.f32.partialorder %v841, 0.0
    %vm874 = vcmp.ge.f32.partialorder %v842, 0.0
    %vm875 = vcmp.ge.f32.partialorder %v843, 0.0
    %vm876 = vcmp.ge.f32.partialorder %v844, 0.0
    %vm877 = vcmp.ge.f32.partialorder %v845, 0.0
    %vm878 = vcmp.ge.f32.partialorder %v846, 0.0
    %vm879 = vcmp.ge.f32.partialorder %v847, 0.0
    %vm880 = vcmp.ge.f32.partialorder %v848, 0.0
    %vm881 = vcmp.ge.f32.partialorder %v849, 0.0
    %vm882 = vcmp.ge.f32.partialorder %v850, 0.0
    %vm883 = vcmp.ge.f32.partialorder %v851, 0.0
    %vm884 = vcmp.ge.f32.partialorder %v852, 0.0
    %vm885 = vcmp.ge.f32.partialorder %v853, 0.0
    %vm886 = vcmp.ge.f32.partialorder %v854, 0.0
    %vm887 = vcmp.ge.f32.partialorder %v855, 0.0
    %vm888 = vcmp.ge.f32.partialorder %v856, 0.0
    %vm889 = vcmp.ge.f32.partialorder %v857, 0.0
    %vm890 = vcmp.ge.f32.partialorder %v858, 0.0
    %vm891 = vcmp.ge.f32.partialorder %v859, 0.0
    %vm892 = vcmp.ge.f32.partialorder %v860, 0.0
    %vm893 = vcmp.ge.f32.partialorder %v861, 0.0
    %v894 = vmul.f32 %v830, 0.2
    %v895 = vmul.f32 %v831, 0.2
    %v896 = vmul.f32 %v832, 0.2
    %v897 = vmul.f32 %v833, 0.2
    %v898 = vmul.f32 %v834, 0.2
    %v899 = vmul.f32 %v835, 0.2
    %v900 = vmul.f32 %v836, 0.2
    %v901 = vmul.f32 %v837, 0.2
    %v902 = vmul.f32 %v838, 0.2
    %v903 = vmul.f32 %v839, 0.2
    %v904 = vmul.f32 %v840, 0.2
    %v905 = vmul.f32 %v841, 0.2
    %v906 = vmul.f32 %v842, 0.2
    %v907 = vmul.f32 %v843, 0.2
    %v908 = vmul.f32 %v844, 0.2
    %v909 = vmul.f32 %v845, 0.2
    %v910 = vmul.f32 %v846, 0.2
    %v911 = vmul.f32 %v847, 0.2
    %v912 = vmul.f32 %v848, 0.2
    %v913 = vmul.f32 %v849, 0.2
    %v914 = vmul.f32 %v850, 0.2
    %v915 = vmul.f32 %v851, 0.2
    %v916 = vmul.f32 %v852, 0.2
    %v917 = vmul.f32 %v853, 0.2
    %v918 = vmul.f32 %v854, 0.2
    %v919 = vmul.f32 %v855, 0.2
    %v920 = vmul.f32 %v856, 0.2
    %v921 = vmul.f32 %v857, 0.2
    %v922 = vmul.f32 %v858, 0.2
    %v923 = vmul.f32 %v859, 0.2
    %v924 = vmul.f32 %v860, 0.2
    %v925 = vmul.f32 %v861, 0.2
    %v926 = vsel %vm862, %v830, %v894
    %v927 = vsel %vm863, %v831, %v895
    %v928 = vsel %vm864, %v832, %v896
    %v929 = vsel %vm865, %v833, %v897
    %v930 = vsel %vm866, %v834, %v898
    %v931 = vsel %vm867, %v835, %v899
    %v932 = vsel %vm868, %v836, %v900
    %v933 = vsel %vm869, %v837, %v901
    %v934 = vsel %vm870, %v838, %v902
    %v935 = vsel %vm871, %v839, %v903
    %v936 = vsel %vm872, %v840, %v904
    %v937 = vsel %vm873, %v841, %v905
    %v938 = vsel %vm874, %v842, %v906
    %v939 = vsel %vm875, %v843, %v907
    %v940 = vsel %vm876, %v844, %v908
    %v941 = vsel %vm877, %v845, %v909
    %v942 = vsel %vm878, %v846, %v910
    %v943 = vsel %vm879, %v847, %v911
    %v944 = vsel %vm880, %v848, %v912
    %v945 = vsel %vm881, %v849, %v913
    %v946 = vsel %vm882, %v850, %v914
    %v947 = vsel %vm883, %v851, %v915
    %v948 = vsel %vm884, %v852, %v916
    %v949 = vsel %vm885, %v853, %v917
    %v950 = vsel %vm886, %v854, %v918
    %v951 = vsel %vm887, %v855, %v919
    %v952 = vsel %vm888, %v856, %v920
    %v953 = vsel %vm889, %v857, %v921
    %v954 = vsel %vm890, %v858, %v922
    %v955 = vsel %vm891, %v859, %v923
    %v956 = vsel %vm892, %v860, %v924
    %v957 = vsel %vm893, %v861, %v925
    %958 = vst [vmem:[%s3] sm:$0xff] %v926
    %959 = vst [vmem:[%s3 + $0x8] sm:$0xff] %v927
    %960 = vst [vmem:[%s3 + $0x10] sm:$0xff] %v928
    %961 = vst [vmem:[%s3 + $0x18] sm:$0xff] %v929
    %962 = vst [vmem:[%s3 + $0x20] sm:$0xff] %v930
    %963 = vst [vmem:[%s3 + $0x28] sm:$0xff] %v931
    %964 = vst [vmem:[%s3 + $0x30] sm:$0xff] %v932
    %965 = vst [vmem:[%s3 + $0x38] sm:$0xff] %v933
    %966 = vst [vmem:[%s3 + $0x40] sm:$0xff] %v934
    %967 = vst [vmem:[%s3 + $0x48] sm:$0xff] %v935
    %968 = vst [vmem:[%s3 + $0x50] sm:$0xff] %v936
    %969 = vst [vmem:[%s3 + $0x58] sm:$0xff] %v937
    %970 = vst [vmem:[%s3 + $0x60] sm:$0xff] %v938
    %971 = vst [vmem:[%s3 + $0x68] sm:$0xff] %v939
    %972 = vst [vmem:[%s3 + $0x70] sm:$0xff] %v940
    %973 = vst [vmem:[%s3 + $0x78] sm:$0xff] %v941
    %974 = vst [vmem:[%s3 + $0x80] sm:$0xff] %v942
    %975 = vst [vmem:[%s3 + $0x88] sm:$0xff] %v943
    %976 = vst [vmem:[%s3 + $0x90] sm:$0xff] %v944
    %977 = vst [vmem:[%s3 + $0x98] sm:$0xff] %v945
    %978 = vst [vmem:[%s3 + $0xa0] sm:$0xff] %v946
    %979 = vst [vmem:[%s3 + $0xa8] sm:$0xff] %v947
    %980 = vst [vmem:[%s3 + $0xb0] sm:$0xff] %v948
    %981 = vst [vmem:[%s3 + $0xb8] sm:$0xff] %v949
    %982 = vst [vmem:[%s3 + $0xc0] sm:$0xff] %v950
    %983 = vst [vmem:[%s3 + $0xc8] sm:$0xff] %v951
    %984 = vst [vmem:[%s3 + $0xd0] sm:$0xff] %v952
    %985 = vst [vmem:[%s3 + $0xd8] sm:$0xff] %v953
    %986 = vst [vmem:[%s3 + $0xe0] sm:$0xff] %v954
    %987 = vst [vmem:[%s3 + $0xe8] sm:$0xff] %v955
    %988 = vst [vmem:[%s3 + $0xf0] sm:$0xff] %v956
    %989 = vst [vmem:[%s3 + $0xf8] sm:$0xff] %v957
  $region21: #{no_norm_discriminator.8} parent=0 // pred_fallthru
    _
  // Predicated region
  $region22: #{no_norm_discriminator.8} parent=0 // pred_check
    _
  $region23: #{no_norm_discriminator.8} parent=0 // pred_check_branch
    %991 = sbr.rel (0) target = $region25
  $region24: #{no_norm_discriminator.8} parent=0 // pred_region
    _
  $region25: #{no_norm_discriminator.8} parent=0 // pred_fallthru
    _
  // Predicated region
  $region26: #{no_norm_discriminator.8} parent=0 // pred_check
    _
  $region27: #{no_norm_discriminator.8} parent=0 // pred_check_branch
    %993 = sbr.rel (0) target = $region29
  $region28: #{no_norm_discriminator.8} parent=0 // pred_region
    _
  $region29: #{no_norm_discriminator.8} parent=0 // pred_fallthru
    _

// kernel: no_norm_discriminator.9
$region0: #{no_norm_discriminator.9}
  #allocation0 [shape = 'u32[]', space=smem, size = 0x4, offset = 0x4, fixed_abs, tag = 'smem constant byte address 0x4 - core index']
  #allocation1 [shape = 'u32[144,128]{1,0:T(1,128)}', space=vmem, size = 0x12000, scoped, tag = 'internal scratch']
  #allocation2 [shape = 'f32[256,128]{1,0:T(8,128)}', space=vmem, size = 0x20000, scoped, tag = 'scratch operand']
  %s0 = inlined_call_operand.vmem [shape: f32[256,1024], index: 0, kind: input, shape index: {}]
  %s1 = inlined_call_operand.vmem [shape: f32[1024,128], index: 1, kind: input, shape index: {}]
  %s2 = inlined_call_operand.vmem [shape: f32[1,128], index: 2, kind: input, shape index: {}]
  %s3 = inlined_call_operand.vmem [shape: f32[256,128], index: 3, kind: output, shape index: {}]
  %s4 = sld [smem:[#allocation0]]
  $region76: #{no_norm_discriminator.9} parent=0
    _
  %s6 = ssub.s32 1, %s4
  %s7 = scalar_select 0, %s6, %s4
  $region1: #{no_norm_discriminator.9} parent=0
    #allocation3 [shape = 'u8[1048576]{0}', space=vmem, size = 0x100000, scoped, tag = 'input window, operand 0']
    loop: start=0, step=1, limit=4
    $region2: #{no_norm_discriminator.9} parent=1 // loop_pre_header
      _
    $region3: #{no_norm_discriminator.9} parent=1 // loop_header
      %s9 = sphi 0, %s13
      %p10 = scmp.ge.s32.totalorder %s9, 4
      %s16 = sphi 0, %s35
      %s17 = sphi 0, %s31
      %s18 = sphi 0, %s27
      %s19 = sphi 0, %s16
      %s20 = sphi 0, %s17
      %s21 = sphi 0, %s18
      %s22 = sphi 0, %s19
      %s23 = sphi 0, %s20
      %s24 = sphi 0, %s21
      %s40 = sphi 0, %s42
      %s43 = sphi 0, %s40
      %s44 = sphi 0, %s43
      %s60 = sphi 0, %s44
      %s68 = sphi 0, %s70
      %s71 = sphi 0, %s68
      %s72 = sphi 0, %s71
      %s88 = sphi 0, %s72
      %s94 = sphi 0, %s96
      %s97 = sphi 0, %s94
      %s98 = sphi 0, %s97
      %s114 = sphi 0, %s98
      %s122 = sphi 0, %s124
      %s125 = sphi 0, %s122
      %s126 = sphi 0, %s125
      %s142 = sphi 0, %s126
    $region4: #{no_norm_discriminator.9} parent=1 // loop_header_branch
      %12 = sbr.rel (%p10) target = $region8
    $region5: #{no_norm_discriminator.9} parent=1 // loop_body
      %s14 = ssub.s32 %s9, 1
      %s15 = ssub.s32 %s9, 2
      %s25 = sadd.s32 1, %s18
      %p26 = scmp.ge.s32.totalorder %s25, 2
      %s27 = scalar_select %p26, 0, %s25
      %s28 = sadd.s32 1, %s17
      %s29 = scalar_select %p26, %s28, %s17
      %p30 = scmp.ge.s32.totalorder %s29, 1
      %s31 = scalar_select %p30, 0, %s29
      %s32 = sadd.s32 1, %s16
      %s33 = scalar_select %p30, %s32, %s16
      %p34 = scmp.ge.s32.totalorder %s33, 1
      %s35 = scalar_select %p34, 0, %s33
      %s36 = ssub.s32 %s16, %s35
      %s37 = ssub.s32 %s18, %s27
      %s38 = sor.u32 %s36, %s37
      %p39 = scmp.eq.s32.totalorder %s38, 0
      %s41 = sadd.s32 %s40, 1
      %s42 = scalar_select %p39, %s40, %s41
      %p45 = pneg %p39
      %p46 = scmp.eq.s32.totalorder %s9, 1
      %p47 = por %p45, %p46
      %p48 = scmp.ne.s32.totalorder %s40, %s43
      %p49 = scmp.eq.s32.totalorder %s9, 0
      %p50 = por %p48, %p49
      %p51 = scmp.ne.s32.totalorder %s40, %s43
      %p52 = scmp.eq.s32.totalorder %s14, 1
      %p53 = por %p51, %p52
      %p54 = scmp.ne.s32.totalorder %s43, %s44
      %p55 = scmp.eq.s32.totalorder %s14, 0
      %p56 = por %p54, %p55
      %p57 = scmp.ne.s32.totalorder %s43, %s44
      %p58 = scmp.eq.s32.totalorder %s15, 1
      %p59 = por %p57, %p58
      %p61 = scmp.ne.s32.totalorder %s44, %s60
      %p62 = scmp.eq.s32.totalorder %s15, 0
      %p63 = por %p61, %p62
      %s64 = ssub.s32 %s18, %s27
      %s65 = ssub.s32 %s17, %s31
      %s66 = sor.u32 %s64, %s65
      %p67 = scmp.eq.s32.totalorder %s66, 0
      %s69 = sadd.s32 %s68, 1
      %s70 = scalar_select %p67, %s68, %s69
      %p73 = pneg %p67
      %p74 = scmp.eq.s32.totalorder %s9, 1
      %p75 = por %p73, %p74
      %p76 = scmp.ne.s32.totalorder %s68, %s71
      %p77 = scmp.eq.s32.totalorder %s9, 0
      %p78 = por %p76, %p77
      %p79 = scmp.ne.s32.totalorder %s68, %s71
      %p80 = scmp.eq.s32.totalorder %s14, 1
      %p81 = por %p79, %p80
      %p82 = scmp.ne.s32.totalorder %s71, %s72
      %p83 = scmp.eq.s32.totalorder %s14, 0
      %p84 = por %p82, %p83
      %p85 = scmp.ne.s32.totalorder %s71, %s72
      %p86 = scmp.eq.s32.totalorder %s15, 1
      %p87 = por %p85, %p86
      %p89 = scmp.ne.s32.totalorder %s72, %s88
      %p90 = scmp.eq.s32.totalorder %s15, 0
      %p91 = por %p89, %p90
      %s92 = ssub.s32 %s17, %s31
      %p93 = scmp.eq.s32.totalorder %s92, 0
      %s95 = sadd.s32 %s94, 1
      %s96 = scalar_select %p93, %s94, %s95
      %p99 = pneg %p93
      %p100 = scmp.eq.s32.totalorder %s9, 1
      %p101 = por %p99, %p100
      %p102 = scmp.ne.s32.totalorder %s94, %s97
      %p103 = scmp.eq.s32.totalorder %s9, 0
      %p104 = por %p102, %p103
      %p105 = scmp.ne.s32.totalorder %s94, %s97
      %p106 = scmp.eq.s32.totalorder %s14, 1
      %p107 = por %p105, %p106
      %p108 = scmp.ne.s32.totalorder %s97, %s98
      %p109 = scmp.eq.s32.totalorder %s14, 0
      %p110 = por %p108, %p109
      %p111 = scmp.ne.s32.totalorder %s97, %s98
      %p112 = scmp.eq.s32.totalorder %s15, 1
      %p113 = por %p111, %p112
      %p115 = scmp.ne.s32.totalorder %s98, %s114
      %p116 = scmp.eq.s32.totalorder %s15, 0
      %p117 = por %p115, %p116
      %s118 = ssub.s32 %s16, %s35
      %s119 = ssub.s32 %s17, %s31
      %s120 = sor.u32 %s118, %s119
      %p121 = scmp.eq.s32.totalorder %s120, 0
      %s123 = sadd.s32 %s122, 1
      %s124 = scalar_select %p121, %s122, %s123
      %p127 = pneg %p121
      %p128 = scmp.eq.s32.totalorder %s9, 1
      %p129 = por %p127, %p128
      %p130 = scmp.ne.s32.totalorder %s122, %s125
      %p131 = scmp.eq.s32.totalorder %s9, 0
      %p132 = por %p130, %p131
      %p133 = scmp.ne.s32.totalorder %s122, %s125
      %p134 = scmp.eq.s32.totalorder %s14, 1
      %p135 = por %p133, %p134
      %p136 = scmp.ne.s32.totalorder %s125, %s126
      %p137 = scmp.eq.s32.totalorder %s14, 0
      %p138 = por %p136, %p137
      %p139 = scmp.ne.s32.totalorder %s125, %s126
      %p140 = scmp.eq.s32.totalorder %s15, 1
      %p141 = por %p139, %p140
      %p143 = scmp.ne.s32.totalorder %s126, %s142
      %p144 = scmp.eq.s32.totalorder %s15, 0
      %p145 = por %p143, %p144
      %p146 = scmp.le.s32.totalorder 1, %s9
      %p147 = scmp.lt.s32.totalorder %s9, 3
      %p148 = pnand %p146, %p147
      %p149 = pneg %p148
      // Predicated region
      $region9: #{no_norm_discriminator.9} parent=5 // pred_check
        _
      $region10: #{no_norm_discriminator.9} parent=5 // pred_check_branch
        %151 = sbr.rel (%p148) target = $region12
      $region11: #{no_norm_discriminator.9} parent=5 // pred_region
        %s152 = ssub.s32 %s9, 1
        // Predicated region
        $region13: #{no_norm_discriminator.9} parent=11 // pred_check
          %p153 = pneg %p110
        $region14: #{no_norm_discriminator.9} parent=11 // pred_check_branch
          %155 = sbr.rel (%p153) target = $region16
        $region15: #{no_norm_discriminator.9} parent=11 // pred_region
          %p156 = scmp.lt.s32.totalorder %s20, 0
          %s157 = scalar_select %p156, %s20, 0
          %s158 = scalar_lea.vmem %s2, %s157
        $region16: #{no_norm_discriminator.9} parent=11 // pred_fallthru
          _
      $region12: #{no_norm_discriminator.9} parent=5 // pred_fallthru
        _
      %p159 = scmp.lt.s32.totalorder %s9, 2
      // Predicated region
      $region17: #{no_norm_discriminator.9} parent=5 // pred_check
        %p160 = pneg %p159
      $region18: #{no_norm_discriminator.9} parent=5 // pred_check_branch
        %162 = sbr.rel (%p160) target = $region20
      $region19: #{no_norm_discriminator.9} parent=5 // pred_region
        // Predicated region
        $region21: #{no_norm_discriminator.9} parent=19 // pred_check
          %p163 = pneg %p50
        $region22: #{no_norm_discriminator.9} parent=19 // pred_check_branch
          %165 = sbr.rel (%p163) target = $region24
        $region23: #{no_norm_discriminator.9} parent=19 // pred_region
          %s166 = sand.u32 %s40, 1
          %s167 = sand.u32 %s40, 1
          %s168 = smul.addr %s167, 1024
          %s169 = scalar_lea.vmem [#allocation3], %s168
          %s170 = smul.u32 32, %s16
          %s171 = smul.u32 4, %s18
          %s172 = smul.addr %s170, 8
          %s173 = sadd.s32 %s171, %s172
          %s174 = smul.addr %s173, 8
          %s175 = scalar_lea.vmem %s0, %s174
          // Predicated region
          $region25: #{no_norm_discriminator.9} parent=23 // pred_check
            _
          $region26: #{no_norm_discriminator.9} parent=23 // pred_check_branch
            %177 = sbr.rel (0) target = $region28
          $region27: #{no_norm_discriminator.9} parent=23 // pred_region
            // Predicated region
            $region29: #{no_norm_discriminator.9} parent=27 // pred_check
              _
            $region30: #{no_norm_discriminator.9} parent=27 // pred_check_branch
              %179 = sbr.rel (0) target = $region32
            $region31: #{no_norm_discriminator.9} parent=27 // pred_region
              loop: start=0, step=1, limit=1
              $region33: #{no_norm_discriminator.9} parent=31 // loop_pre_header
                _
              $region34: #{no_norm_discriminator.9} parent=31 // loop_header
                %s181 = sphi 0, %s185
                %p182 = scmp.ge.s32.totalorder %s181, 1
                %s186 = sphi %s175, %s175
                %s187 = sphi %s169, %s169
              $region35: #{no_norm_discriminator.9} parent=31 // loop_header_branch
                %184 = sbr.rel (%p182) target = $region39
              $region36: #{no_norm_discriminator.9} parent=31 // loop_body
                %v188 = vld [vmem:[%s186] sm:$0xff]
                %189 = vst [vmem:[%s187] sm:$0xff] %v188
                %v190 = vld [vmem:[%s186 + $0x8] sm:$0xff]
                %191 = vst [vmem:[%s187 + $0x8] sm:$0xff] %v190
                %v192 = vld [vmem:[%s186 + $0x10] sm:$0xff]
                %193 = vst [vmem:[%s187 + $0x10] sm:$0xff] %v192
                %v194 = vld [vmem:[%s186 + $0x18] sm:$0xff]
                %195 = vst [vmem:[%s187 + $0x18] sm:$0xff] %v194
                %v196 = vld [vmem:[%s186 + $0x40] sm:$0xff]
                %197 = vst [vmem:[%s187 + $0x20] sm:$0xff] %v196
                %v198 = vld [vmem:[%s186 + $0x48] sm:$0xff]
                %199 = vst [vmem:[%s187 + $0x28] sm:$0xff] %v198
                %v200 = vld [vmem:[%s186 + $0x50] sm:$0xff]
                %201 = vst [vmem:[%s187 + $0x30] sm:$0xff] %v200
                %v202 = vld [vmem:[%s186 + $0x58] sm:$0xff]
                %203 = vst [vmem:[%s187 + $0x38] sm:$0xff] %v202
                %v204 = vld [vmem:[%s186 + $0x80] sm:$0xff]
                %205 = vst [vmem:[%s187 + $0x40] sm:$0xff] %v204
                %v206 = vld [vmem:[%s186 + $0x88] sm:$0xff]
                %207 = vst [vmem:[%s187 + $0x48] sm:$0xff] %v206
                %v208 = vld [vmem:[%s186 + $0x90] sm:$0xff]
                %209 = vst [vmem:[%s187 + $0x50] sm:$0xff] %v208
                %v210 = vld [vmem:[%s186 + $0x98] sm:$0xff]
                %211 = vst [vmem:[%s187 + $0x58] sm:$0xff] %v210
                %v212 = vld [vmem:[%s186 + $0xc0] sm:$0xff]
                %213 = vst [vmem:[%s187 + $0x60] sm:$0xff] %v212
                %v214 = vld [vmem:[%s186 + $0xc8] sm:$0xff]
                %215 = vst [vmem:[%s187 + $0x68] sm:$0xff] %v214
                %v216 = vld [vmem:[%s186 + $0xd0] sm:$0xff]
                %217 = vst [vmem:[%s187 + $0x70] sm:$0xff] %v216
                %v218 = vld [vmem:[%s186 + $0xd8] sm:$0xff]
                %219 = vst [vmem:[%s187 + $0x78] sm:$0xff] %v218
                %v220 = vld [vmem:[%s186 + $0x100] sm:$0xff]
                %221 = vst [vmem:[%s187 + $0x80] sm:$0xff] %v220
                %v222 = vld [vmem:[%s186 + $0x108] sm:$0xff]
                %223 = vst [vmem:[%s187 + $0x88] sm:$0xff] %v222
                %v224 = vld [vmem:[%s186 + $0x110] sm:$0xff]
                %225 = vst [vmem:[%s187 + $0x90] sm:$0xff] %v224
                %v226 = vld [vmem:[%s186 + $0x118] sm:$0xff]
                %227 = vst [vmem:[%s187 + $0x98] sm:$0xff] %v226
                %v228 = vld [vmem:[%s186 + $0x140] sm:$0xff]
                %229 = vst [vmem:[%s187 + $0xa0] sm:$0xff] %v228
                %v230 = vld [vmem:[%s186 + $0x148] sm:$0xff]
                %231 = vst [vmem:[%s187 + $0xa8] sm:$0xff] %v230
                %v232 = vld [vmem:[%s186 + $0x150] sm:$0xff]
                %233 = vst [vmem:[%s187 + $0xb0] sm:$0xff] %v232
                %v234 = vld [vmem:[%s186 + $0x158] sm:$0xff]
                %235 = vst [vmem:[%s187 + $0xb8] sm:$0xff] %v234
                %v236 = vld [vmem:[%s186 + $0x180] sm:$0xff]
                %237 = vst [vmem:[%s187 + $0xc0] sm:$0xff] %v236
                %v238 = vld [vmem:[%s186 + $0x188] sm:$0xff]
                %239 = vst [vmem:[%s187 + $0xc8] sm:$0xff] %v238
                %v240 = vld [vmem:[%s186 + $0x190] sm:$0xff]
                %241 = vst [vmem:[%s187 + $0xd0] sm:$0xff] %v240
                %v242 = vld [vmem:[%s186 + $0x198] sm:$0xff]
                %243 = vst [vmem:[%s187 + $0xd8] sm:$0xff] %v242
                %v244 = vld [vmem:[%s186 + $0x1c0] sm:$0xff]
                %245 = vst [vmem:[%s187 + $0xe0] sm:$0xff] %v244
                %v246 = vld [vmem:[%s186 + $0x1c8] sm:$0xff]
                %247 = vst [vmem:[%s187 + $0xe8] sm:$0xff] %v246
                %v248 = vld [vmem:[%s186 + $0x1d0] sm:$0xff]
                %249 = vst [vmem:[%s187 + $0xf0] sm:$0xff] %v248
                %v250 = vld [vmem:[%s186 + $0x1d8] sm:$0xff]
                %251 = vst [vmem:[%s187 + $0xf8] sm:$0xff] %v250
                %v252 = vld [vmem:[%s186 + $0x200] sm:$0xff]
                %253 = vst [vmem:[%s187 + $0x100] sm:$0xff] %v252
                %v254 = vld [vmem:[%s186 + $0x208] sm:$0xff]
                %255 = vst [vmem:[%s187 + $0x108] sm:$0xff] %v254
                %v256 = vld [vmem:[%s186 + $0x210] sm:$0xff]
                %257 = vst [vmem:[%s187 + $0x110] sm:$0xff] %v256
                %v258 = vld [vmem:[%s186 + $0x218] sm:$0xff]
                %259 = vst [vmem:[%s187 + $0x118] sm:$0xff] %v258
                %v260 = vld [vmem:[%s186 + $0x240] sm:$0xff]
                %261 = vst [vmem:[%s187 + $0x120] sm:$0xff] %v260
                %v262 = vld [vmem:[%s186 + $0x248] sm:$0xff]
                %263 = vst [vmem:[%s187 + $0x128] sm:$0xff] %v262
                %v264 = vld [vmem:[%s186 + $0x250] sm:$0xff]
                %265 = vst [vmem:[%s187 + $0x130] sm:$0xff] %v264
                %v266 = vld [vmem:[%s186 + $0x258] sm:$0xff]
                %267 = vst [vmem:[%s187 + $0x138] sm:$0xff] %v266
                %v268 = vld [vmem:[%s186 + $0x280] sm:$0xff]
                %269 = vst [vmem:[%s187 + $0x140] sm:$0xff] %v268
                %v270 = vld [vmem:[%s186 + $0x288] sm:$0xff]
                %271 = vst [vmem:[%s187 + $0x148] sm:$0xff] %v270
                %v272 = vld [vmem:[%s186 + $0x290] sm:$0xff]
                %273 = vst [vmem:[%s187 + $0x150] sm:$0xff] %v272
                %v274 = vld [vmem:[%s186 + $0x298] sm:$0xff]
                %275 = vst [vmem:[%s187 + $0x158] sm:$0xff] %v274
                %v276 = vld [vmem:[%s186 + $0x2c0] sm:$0xff]
                %277 = vst [vmem:[%s187 + $0x160] sm:$0xff] %v276
                %v278 = vld [vmem:[%s186 + $0x2c8] sm:$0xff]
                %279 = vst [vmem:[%s187 + $0x168] sm:$0xff] %v278
                %v280 = vld [vmem:[%s186 + $0x2d0] sm:$0xff]
                %281 = vst [vmem:[%s187 + $0x170] sm:$0xff] %v280
                %v282 = vld [vmem:[%s186 + $0x2d8] sm:$0xff]
                %283 = vst [vmem:[%s187 + $0x178] sm:$0xff] %v282
                %v284 = vld [vmem:[%s186 + $0x300] sm:$0xff]
                %285 = vst [vmem:[%s187 + $0x180] sm:$0xff] %v284
                %v286 = vld [vmem:[%s186 + $0x308] sm:$0xff]
                %287 = vst [vmem:[%s187 + $0x188] sm:$0xff] %v286
                %v288 = vld [vmem:[%s186 + $0x310] sm:$0xff]
                %289 = vst [vmem:[%s187 + $0x190] sm:$0xff] %v288
                %v290 = vld [vmem:[%s186 + $0x318] sm:$0xff]
                %291 = vst [vmem:[%s187 + $0x198] sm:$0xff] %v290
                %v292 = vld [vmem:[%s186 + $0x340] sm:$0xff]
                %293 = vst [vmem:[%s187 + $0x1a0] sm:$0xff] %v292
                %v294 = vld [vmem:[%s186 + $0x348] sm:$0xff]
                %295 = vst [vmem:[%s187 + $0x1a8] sm:$0xff] %v294
                %v296 = vld [vmem:[%s186 + $0x350] sm:$0xff]
                %297 = vst [vmem:[%s187 + $0x1b0] sm:$0xff] %v296
                %v298 = vld [vmem:[%s186 + $0x358] sm:$0xff]
                %299 = vst [vmem:[%s187 + $0x1b8] sm:$0xff] %v298
                %v300 = vld [vmem:[%s186 + $0x380] sm:$0xff]
                %301 = vst [vmem:[%s187 + $0x1c0] sm:$0xff] %v300
                %v302 = vld [vmem:[%s186 + $0x388] sm:$0xff]
                %303 = vst [vmem:[%s187 + $0x1c8] sm:$0xff] %v302
                %v304 = vld [vmem:[%s186 + $0x390] sm:$0xff]
                %305 = vst [vmem:[%s187 + $0x1d0] sm:$0xff] %v304
                %v306 = vld [vmem:[%s186 + $0x398] sm:$0xff]
                %307 = vst [vmem:[%s187 + $0x1d8] sm:$0xff] %v306
                %v308 = vld [vmem:[%s186 + $0x3c0] sm:$0xff]
                %309 = vst [vmem:[%s187 + $0x1e0] sm:$0xff] %v308
                %v310 = vld [vmem:[%s186 + $0x3c8] sm:$0xff]
                %311 = vst [vmem:[%s187 + $0x1e8] sm:$0xff] %v310
                %v312 = vld [vmem:[%s186 + $0x3d0] sm:$0xff]
                %313 = vst [vmem:[%s187 + $0x1f0] sm:$0xff] %v312
                %v314 = vld [vmem:[%s186 + $0x3d8] sm:$0xff]
                %315 = vst [vmem:[%s187 + $0x1f8] sm:$0xff] %v314
                %v316 = vld [vmem:[%s186 + $0x400] sm:$0xff]
                %317 = vst [vmem:[%s187 + $0x200] sm:$0xff] %v316
                %v318 = vld [vmem:[%s186 + $0x408] sm:$0xff]
                %319 = vst [vmem:[%s187 + $0x208] sm:$0xff] %v318
                %v320 = vld [vmem:[%s186 + $0x410] sm:$0xff]
                %321 = vst [vmem:[%s187 + $0x210] sm:$0xff] %v320
                %v322 = vld [vmem:[%s186 + $0x418] sm:$0xff]
                %323 = vst [vmem:[%s187 + $0x218] sm:$0xff] %v322
                %v324 = vld [vmem:[%s186 + $0x440] sm:$0xff]
                %325 = vst [vmem:[%s187 + $0x220] sm:$0xff] %v324
                %v326 = vld [vmem:[%s186 + $0x448] sm:$0xff]
                %327 = vst [vmem:[%s187 + $0x228] sm:$0xff] %v326
                %v328 = vld [vmem:[%s186 + $0x450] sm:$0xff]
                %329 = vst [vmem:[%s187 + $0x230] sm:$0xff] %v328
                %v330 = vld [vmem:[%s186 + $0x458] sm:$0xff]
                %331 = vst [vmem:[%s187 + $0x238] sm:$0xff] %v330
                %v332 = vld [vmem:[%s186 + $0x480] sm:$0xff]
                %333 = vst [vmem:[%s187 + $0x240] sm:$0xff] %v332
                %v334 = vld [vmem:[%s186 + $0x488] sm:$0xff]
                %335 = vst [vmem:[%s187 + $0x248] sm:$0xff] %v334
                %v336 = vld [vmem:[%s186 + $0x490] sm:$0xff]
                %337 = vst [vmem:[%s187 + $0x250] sm:$0xff] %v336
                %v338 = vld [vmem:[%s186 + $0x498] sm:$0xff]
                %339 = vst [vmem:[%s187 + $0x258] sm:$0xff] %v338
                %v340 = vld [vmem:[%s186 + $0x4c0] sm:$0xff]
                %341 = vst [vmem:[%s187 + $0x260] sm:$0xff] %v340
                %v342 = vld [vmem:[%s186 + $0x4c8] sm:$0xff]
                %343 = vst [vmem:[%s187 + $0x268] sm:$0xff] %v342
                %v344 = vld [vmem:[%s186 + $0x4d0] sm:$0xff]
                %345 = vst [vmem:[%s187 + $0x270] sm:$0xff] %v344
                %v346 = vld [vmem:[%s186 + $0x4d8] sm:$0xff]
                %347 = vst [vmem:[%s187 + $0x278] sm:$0xff] %v346
                %v348 = vld [vmem:[%s186 + $0x500] sm:$0xff]
                %349 = vst [vmem:[%s187 + $0x280] sm:$0xff] %v348
                %v350 = vld [vmem:[%s186 + $0x508] sm:$0xff]
                %351 = vst [vmem:[%s187 + $0x288] sm:$0xff] %v350
                %v352 = vld [vmem:[%s186 + $0x510] sm:$0xff]
                %353 = vst [vmem:[%s187 + $0x290] sm:$0xff] %v352
                %v354 = vld [vmem:[%s186 + $0x518] sm:$0xff]
                %355 = vst [vmem:[%s187 + $0x298] sm:$0xff] %v354
                %v356 = vld [vmem:[%s186 + $0x540] sm:$0xff]
                %357 = vst [vmem:[%s187 + $0x2a0] sm:$0xff] %v356
                %v358 = vld [vmem:[%s186 + $0x548] sm:$0xff]
                %359 = vst [vmem:[%s187 + $0x2a8] sm:$0xff] %v358
                %v360 = vld [vmem:[%s186 + $0x550] sm:$0xff]
                %361 = vst [vmem:[%s187 + $0x2b0] sm:$0xff] %v360
                %v362 = vld [vmem:[%s186 + $0x558] sm:$0xff]
                %363 = vst [vmem:[%s187 + $0x2b8] sm:$0xff] %v362
                %v364 = vld [vmem:[%s186 + $0x580] sm:$0xff]
                %365 = vst [vmem:[%s187 + $0x2c0] sm:$0xff] %v364
                %v366 = vld [vmem:[%s186 + $0x588] sm:$0xff]
                %367 = vst [vmem:[%s187 + $0x2c8] sm:$0xff] %v366
                %v368 = vld [vmem:[%s186 + $0x590] sm:$0xff]
                %369 = vst [vmem:[%s187 + $0x2d0] sm:$0xff] %v368
                %v370 = vld [vmem:[%s186 + $0x598] sm:$0xff]
                %371 = vst [vmem:[%s187 + $0x2d8] sm:$0xff] %v370
                %v372 = vld [vmem:[%s186 + $0x5c0] sm:$0xff]
                %373 = vst [vmem:[%s187 + $0x2e0] sm:$0xff] %v372
                %v374 = vld [vmem:[%s186 + $0x5c8] sm:$0xff]
                %375 = vst [vmem:[%s187 + $0x2e8] sm:$0xff] %v374
                %v376 = vld [vmem:[%s186 + $0x5d0] sm:$0xff]
                %377 = vst [vmem:[%s187 + $0x2f0] sm:$0xff] %v376
                %v378 = vld [vmem:[%s186 + $0x5d8] sm:$0xff]
                %379 = vst [vmem:[%s187 + $0x2f8] sm:$0xff] %v378
                %v380 = vld [vmem:[%s186 + $0x600] sm:$0xff]
                %381 = vst [vmem:[%s187 + $0x300] sm:$0xff] %v380
                %v382 = vld [vmem:[%s186 + $0x608] sm:$0xff]
                %383 = vst [vmem:[%s187 + $0x308] sm:$0xff] %v382
                %v384 = vld [vmem:[%s186 + $0x610] sm:$0xff]
                %385 = vst [vmem:[%s187 + $0x310] sm:$0xff] %v384
                %v386 = vld [vmem:[%s186 + $0x618] sm:$0xff]
                %387 = vst [vmem:[%s187 + $0x318] sm:$0xff] %v386
                %v388 = vld [vmem:[%s186 + $0x640] sm:$0xff]
                %389 = vst [vmem:[%s187 + $0x320] sm:$0xff] %v388
                %v390 = vld [vmem:[%s186 + $0x648] sm:$0xff]
                %391 = vst [vmem:[%s187 + $0x328] sm:$0xff] %v390
                %v392 = vld [vmem:[%s186 + $0x650] sm:$0xff]
                %393 = vst [vmem:[%s187 + $0x330] sm:$0xff] %v392
                %v394 = vld [vmem:[%s186 + $0x658] sm:$0xff]
                %395 = vst [vmem:[%s187 + $0x338] sm:$0xff] %v394
                %v396 = vld [vmem:[%s186 + $0x680] sm:$0xff]
                %397 = vst [vmem:[%s187 + $0x340] sm:$0xff] %v396
                %v398 = vld [vmem:[%s186 + $0x688] sm:$0xff]
                %399 = vst [vmem:[%s187 + $0x348] sm:$0xff] %v398
                %v400 = vld [vmem:[%s186 + $0x690] sm:$0xff]
                %401 = vst [vmem:[%s187 + $0x350] sm:$0xff] %v400
                %v402 = vld [vmem:[%s186 + $0x698] sm:$0xff]
                %403 = vst [vmem:[%s187 + $0x358] sm:$0xff] %v402
                %v404 = vld [vmem:[%s186 + $0x6c0] sm:$0xff]
                %405 = vst [vmem:[%s187 + $0x360] sm:$0xff] %v404
                %v406 = vld [vmem:[%s186 + $0x6c8] sm:$0xff]
                %407 = vst [vmem:[%s187 + $0x368] sm:$0xff] %v406
                %v408 = vld [vmem:[%s186 + $0x6d0] sm:$0xff]
                %409 = vst [vmem:[%s187 + $0x370] sm:$0xff] %v408
                %v410 = vld [vmem:[%s186 + $0x6d8] sm:$0xff]
                %411 = vst [vmem:[%s187 + $0x378] sm:$0xff] %v410
                %v412 = vld [vmem:[%s186 + $0x700] sm:$0xff]
                %413 = vst [vmem:[%s187 + $0x380] sm:$0xff] %v412
                %v414 = vld [vmem:[%s186 + $0x708] sm:$0xff]
                %415 = vst [vmem:[%s187 + $0x388] sm:$0xff] %v414
                %v416 = vld [vmem:[%s186 + $0x710] sm:$0xff]
                %417 = vst [vmem:[%s187 + $0x390] sm:$0xff] %v416
                %v418 = vld [vmem:[%s186 + $0x718] sm:$0xff]
                %419 = vst [vmem:[%s187 + $0x398] sm:$0xff] %v418
                %v420 = vld [vmem:[%s186 + $0x740] sm:$0xff]
                %421 = vst [vmem:[%s187 + $0x3a0] sm:$0xff] %v420
                %v422 = vld [vmem:[%s186 + $0x748] sm:$0xff]
                %423 = vst [vmem:[%s187 + $0x3a8] sm:$0xff] %v422
                %v424 = vld [vmem:[%s186 + $0x750] sm:$0xff]
                %425 = vst [vmem:[%s187 + $0x3b0] sm:$0xff] %v424
                %v426 = vld [vmem:[%s186 + $0x758] sm:$0xff]
                %427 = vst [vmem:[%s187 + $0x3b8] sm:$0xff] %v426
                %v428 = vld [vmem:[%s186 + $0x780] sm:$0xff]
                %429 = vst [vmem:[%s187 + $0x3c0] sm:$0xff] %v428
                %v430 = vld [vmem:[%s186 + $0x788] sm:$0xff]
                %431 = vst [vmem:[%s187 + $0x3c8] sm:$0xff] %v430
                %v432 = vld [vmem:[%s186 + $0x790] sm:$0xff]
                %433 = vst [vmem:[%s187 + $0x3d0] sm:$0xff] %v432
                %v434 = vld [vmem:[%s186 + $0x798] sm:$0xff]
                %435 = vst [vmem:[%s187 + $0x3d8] sm:$0xff] %v434
                %v436 = vld [vmem:[%s186 + $0x7c0] sm:$0xff]
                %437 = vst [vmem:[%s187 + $0x3e0] sm:$0xff] %v436
                %v438 = vld [vmem:[%s186 + $0x7c8] sm:$0xff]
                %439 = vst [vmem:[%s187 + $0x3e8] sm:$0xff] %v438
                %v440 = vld [vmem:[%s186 + $0x7d0] sm:$0xff]
                %441 = vst [vmem:[%s187 + $0x3f0] sm:$0xff] %v440
                %v442 = vld [vmem:[%s186 + $0x7d8] sm:$0xff]
                %443 = vst [vmem:[%s187 + $0x3f8] sm:$0xff] %v442
              $region37: #{no_norm_discriminator.9} parent=31 // loop_footer
                %s185 = sadd.s32 1, %s181
              $region38: #{no_norm_discriminator.9} parent=31 // loop_footer_branch
                %180 = sbr.rel target = $region34
              $region39: #{no_norm_discriminator.9} parent=31 // loop_exit
                _
            $region32: #{no_norm_discriminator.9} parent=27 // pred_fallthru
              _
            // Predicated region
            $region40: #{no_norm_discriminator.9} parent=27 // pred_check
              _
            $region41: #{no_norm_discriminator.9} parent=27 // pred_check_branch
              %445 = sbr.rel target = $region43
            $region42: #{no_norm_discriminator.9} parent=27 // pred_region
              _
            $region43: #{no_norm_discriminator.9} parent=27 // pred_fallthru
              _
          $region28: #{no_norm_discriminator.9} parent=23 // pred_fallthru
            _
          %446 = vnop
        $region24: #{no_norm_discriminator.9} parent=19 // pred_fallthru
          _
        // Predicated region
        $region44: #{no_norm_discriminator.9} parent=19 // pred_check
          %p447 = pneg %p78
        $region45: #{no_norm_discriminator.9} parent=19 // pred_check_branch
          %449 = sbr.rel (%p447) target = $region47
        $region46: #{no_norm_discriminator.9} parent=19 // pred_region
          %s450 = smul.u32 64, %s18
          %p451 = scmp.lt.s32.totalorder %s450, 127
          %s452 = scalar_select %p451, %s450, 127
          %p453 = scmp.lt.s32.totalorder %s17, 0
          %s454 = scalar_select %p453, %s17, 0
          %s455 = sadd.s32 %s454, %s452
          %s456 = smul.addr %s455, 8
          %s457 = scalar_lea.vmem %s1, %s456
          %s458 = smul.u32 64, %s18
        $region47: #{no_norm_discriminator.9} parent=19 // pred_fallthru
          _
      $region20: #{no_norm_discriminator.9} parent=5 // pred_fallthru
        _
      %p459 = scmp.le.s32.totalorder 1, %s9
      %p460 = scmp.lt.s32.totalorder %s9, 3
      %p461 = pnand %p459, %p460
      %p462 = pneg %p461
      // Predicated region
      $region48: #{no_norm_discriminator.9} parent=5 // pred_check
        _
      $region49: #{no_norm_discriminator.9} parent=5 // pred_check_branch
        %464 = sbr.rel (%p461) target = $region51
      $region50: #{no_norm_discriminator.9} parent=5 // pred_region
        %s465 = ssub.s32 %s9, 1
        %s466 = sand.u32 %s43, 1
        %s467 = sand.u32 %s43, 1
        %s468 = smul.addr %s467, 1024
        %s469 = scalar_lea.vmem [#allocation3], %s468
        // Predicated region
        $region52: #{no_norm_discriminator.9} parent=50 // pred_check
          %p470 = pneg %p56
        $region53: #{no_norm_discriminator.9} parent=50 // pred_check_branch
          %472 = sbr.rel (%p470) target = $region55
        $region54: #{no_norm_discriminator.9} parent=50 // pred_region
          _
        $region55: #{no_norm_discriminator.9} parent=50 // pred_fallthru
          _
        %s473 = sand.u32 %s43, 1
        %s474 = sand.u32 %s43, 1
        %s475 = smul.addr %s474, 1024
        %s476 = scalar_lea.vmem [#allocation3], %s475
        %p477 = pneg %p56
        %p478 = pneg %p53
        %s479 = smul.u32 64, %s21
        %p480 = scmp.lt.s32.totalorder %s479, 127
        %s481 = scalar_select %p480, %s479, 127
        %p482 = scmp.lt.s32.totalorder %s20, 0
        %s483 = scalar_select %p482, %s20, 0
        %s484 = sadd.s32 %s483, %s481
        %s485 = smul.addr %s484, 8
        %s486 = scalar_lea.vmem %s1, %s485
        %p487 = pneg %p84
        %p488 = pneg %p81
        %p489 = scmp.lt.s32.totalorder %s20, 0
        %s490 = scalar_select %p489, %s20, 0
        %s491 = scalar_lea.vmem %s2, %s490
        %p492 = pneg %p110
        %p493 = pneg %p107
        %p494 = pneg %p138
        %p495 = pneg %p135
        %s496 = smul.u32 32, %s19
        %p497 = scmp.lt.s32.totalorder %s496, 31
        %s498 = scalar_select %p497, %s496, 31
        %p499 = scmp.lt.s32.totalorder %s20, 0
        %s500 = scalar_select %p499, %s20, 0
        %s501 = sadd.s32 %s500, %s498
        %s502 = smul.addr %s501, 8
        %s503 = scalar_lea.vmem %s3, %s502
        %s504 = smul.u32 32, %s19
        %s505 = smul.u32 4, %s21
        %s506 = smul.u32 64, %s21
        %p507 = scmp.lt.s32.totalorder %s506, 127
        %s508 = scalar_select %p507, %s506, 127
        %p509 = scmp.lt.s32.totalorder %s20, 0
        %s510 = scalar_select %p509, %s20, 0
        %s511 = sadd.s32 %s510, %s508
        %s512 = smul.addr %s511, 8
        %s513 = scalar_lea.vmem %s1, %s512
        %s514 = smul.u32 64, %s21
        %p515 = scmp.lt.s32.totalorder %s20, 0
        %s516 = scalar_select %p515, %s20, 0
        %s517 = scalar_lea.vmem %s2, %s516
        %s518 = smul.u32 32, %s19
        %p519 = scmp.lt.s32.totalorder %s518, 31
        %s520 = scalar_select %p519, %s518, 31
        %p521 = scmp.lt.s32.totalorder %s20, 0
        %s522 = scalar_select %p521, %s20, 0
        %s523 = sadd.s32 %s522, %s520
        %s524 = smul.addr %s523, 8
        %s525 = scalar_lea.vmem %s3, %s524
        %s526 = smul.u32 32, %s19
        %p527 = scmp.eq.s32.totalorder %s21, 0
        // Predicated region
        $region56: #{no_norm_discriminator.9} parent=50 // pred_check
          %p528 = pneg %p527
        $region57: #{no_norm_discriminator.9} parent=50 // pred_check_branch
          %530 = sbr.rel (%p528) target = $region59
        $region58: #{no_norm_discriminator.9} parent=50 // pred_region
          %531 = vst [vmem:[#allocation2] sm:$0xff] 0.0
          %532 = vst [vmem:[#allocation2 + $0x8] sm:$0xff] 0.0
          %533 = vst [vmem:[#allocation2 + $0x10] sm:$0xff] 0.0
          %534 = vst [vmem:[#allocation2 + $0x18] sm:$0xff] 0.0
          %535 = vst [vmem:[#allocation2 + $0x20] sm:$0xff] 0.0
          %536 = vst [vmem:[#allocation2 + $0x28] sm:$0xff] 0.0
          %537 = vst [vmem:[#allocation2 + $0x30] sm:$0xff] 0.0
          %538 = vst [vmem:[#allocation2 + $0x38] sm:$0xff] 0.0
          %539 = vst [vmem:[#allocation2 + $0x40] sm:$0xff] 0.0
          %540 = vst [vmem:[#allocation2 + $0x48] sm:$0xff] 0.0
          %541 = vst [vmem:[#allocation2 + $0x50] sm:$0xff] 0.0
          %542 = vst [vmem:[#allocation2 + $0x58] sm:$0xff] 0.0
          %543 = vst [vmem:[#allocation2 + $0x60] sm:$0xff] 0.0
          %544 = vst [vmem:[#allocation2 + $0x68] sm:$0xff] 0.0
          %545 = vst [vmem:[#allocation2 + $0x70] sm:$0xff] 0.0
          %546 = vst [vmem:[#allocation2 + $0x78] sm:$0xff] 0.0
          %547 = vst [vmem:[#allocation2 + $0x80] sm:$0xff] 0.0
          %548 = vst [vmem:[#allocation2 + $0x88] sm:$0xff] 0.0
          %549 = vst [vmem:[#allocation2 + $0x90] sm:$0xff] 0.0
          %550 = vst [vmem:[#allocation2 + $0x98] sm:$0xff] 0.0
          %551 = vst [vmem:[#allocation2 + $0xa0] sm:$0xff] 0.0
          %552 = vst [vmem:[#allocation2 + $0xa8] sm:$0xff] 0.0
          %553 = vst [vmem:[#allocation2 + $0xb0] sm:$0xff] 0.0
          %554 = vst [vmem:[#allocation2 + $0xb8] sm:$0xff] 0.0
          %555 = vst [vmem:[#allocation2 + $0xc0] sm:$0xff] 0.0
          %556 = vst [vmem:[#allocation2 + $0xc8] sm:$0xff] 0.0
          %557 = vst [vmem:[#allocation2 + $0xd0] sm:$0xff] 0.0
          %558 = vst [vmem:[#allocation2 + $0xd8] sm:$0xff] 0.0
          %559 = vst [vmem:[#allocation2 + $0xe0] sm:$0xff] 0.0
          %560 = vst [vmem:[#allocation2 + $0xe8] sm:$0xff] 0.0
          %561 = vst [vmem:[#allocation2 + $0xf0] sm:$0xff] 0.0
          %562 = vst [vmem:[#allocation2 + $0xf8] sm:$0xff] 0.0
        $region59: #{no_norm_discriminator.9} parent=50 // pred_fallthru
          _
        %v563 = vld [vmem:[#allocation2] sm:$0xff]
        %v564 = vld [vmem:[#allocation2 + $0x8] sm:$0xff]
        %v565 = vld [vmem:[#allocation2 + $0x10] sm:$0xff]
        %v566 = vld [vmem:[#allocation2 + $0x18] sm:$0xff]
        %v567 = vld [vmem:[#allocation2 + $0x20] sm:$0xff]
        %v568 = vld [vmem:[#allocation2 + $0x28] sm:$0xff]
        %v569 = vld [vmem:[#allocation2 + $0x30] sm:$0xff]
        %v570 = vld [vmem:[#allocation2 + $0x38] sm:$0xff]
        %v571 = vld [vmem:[#allocation2 + $0x40] sm:$0xff]
        %v572 = vld [vmem:[#allocation2 + $0x48] sm:$0xff]
        %v573 = vld [vmem:[#allocation2 + $0x50] sm:$0xff]
        %v574 = vld [vmem:[#allocation2 + $0x58] sm:$0xff]
        %v575 = vld [vmem:[#allocation2 + $0x60] sm:$0xff]
        %v576 = vld [vmem:[#allocation2 + $0x68] sm:$0xff]
        %v577 = vld [vmem:[#allocation2 + $0x70] sm:$0xff]
        %v578 = vld [vmem:[#allocation2 + $0x78] sm:$0xff]
        %v579 = vld [vmem:[#allocation2 + $0x80] sm:$0xff]
        %v580 = vld [vmem:[#allocation2 + $0x88] sm:$0xff]
        %v581 = vld [vmem:[#allocation2 + $0x90] sm:$0xff]
        %v582 = vld [vmem:[#allocation2 + $0x98] sm:$0xff]
        %v583 = vld [vmem:[#allocation2 + $0xa0] sm:$0xff]
        %v584 = vld [vmem:[#allocation2 + $0xa8] sm:$0xff]
        %v585 = vld [vmem:[#allocation2 + $0xb0] sm:$0xff]
        %v586 = vld [vmem:[#allocation2 + $0xb8] sm:$0xff]
        %v587 = vld [vmem:[#allocation2 + $0xc0] sm:$0xff]
        %v588 = vld [vmem:[#allocation2 + $0xc8] sm:$0xff]
        %v589 = vld [vmem:[#allocation2 + $0xd0] sm:$0xff]
        %v590 = vld [vmem:[#allocation2 + $0xd8] sm:$0xff]
        %v591 = vld [vmem:[#allocation2 + $0xe0] sm:$0xff]
        %v592 = vld [vmem:[#allocation2 + $0xe8] sm:$0xff]
        %v593 = vld [vmem:[#allocation2 + $0xf0] sm:$0xff]
        %v594 = vld [vmem:[#allocation2 + $0xf8] sm:$0xff]
        %v595 = vld [vmem:[%s469] sm:$0xff]
        %v596 = vld [vmem:[%s469 + $0x8] sm:$0xff]
        %v597 = vld [vmem:[%s469 + $0x10] sm:$0xff]
        %v598 = vld [vmem:[%s469 + $0x18] sm:$0xff]
        %v599 = vld [vmem:[%s469 + $0x20] sm:$0xff]
        %v600 = vld [vmem:[%s469 + $0x28] sm:$0xff]
        %v601 = vld [vmem:[%s469 + $0x30] sm:$0xff]
        %v602 = vld [vmem:[%s469 + $0x38] sm:$0xff]
        %v603 = vld [vmem:[%s469 + $0x40] sm:$0xff]
        %v604 = vld [vmem:[%s469 + $0x48] sm:$0xff]
        %v605 = vld [vmem:[%s469 + $0x50] sm:$0xff]
        %v606 = vld [vmem:[%s469 + $0x58] sm:$0xff]
        %v607 = vld [vmem:[%s469 + $0x60] sm:$0xff]
        %v608 = vld [vmem:[%s469 + $0x68] sm:$0xff]
        %v609 = vld [vmem:[%s469 + $0x70] sm:$0xff]
        %v610 = vld [vmem:[%s469 + $0x78] sm:$0xff]
        %v611 = vld [vmem:[%s469 + $0x80] sm:$0xff]
        %v612 = vld [vmem:[%s469 + $0x88] sm:$0xff]
        %v613 = vld [vmem:[%s469 + $0x90] sm:$0xff]
        %v614 = vld [vmem:[%s469 + $0x98] sm:$0xff]
        %v615 = vld [vmem:[%s469 + $0xa0] sm:$0xff]
        %v616 = vld [vmem:[%s469 + $0xa8] sm:$0xff]
        %v617 = vld [vmem:[%s469 + $0xb0] sm:$0xff]
        %v618 = vld [vmem:[%s469 + $0xb8] sm:$0xff]
        %v619 = vld [vmem:[%s469 + $0xc0] sm:$0xff]
        %v620 = vld [vmem:[%s469 + $0xc8] sm:$0xff]
        %v621 = vld [vmem:[%s469 + $0xd0] sm:$0xff]
        %v622 = vld [vmem:[%s469 + $0xd8] sm:$0xff]
        %v623 = vld [vmem:[%s469 + $0xe0] sm:$0xff]
        %v624 = vld [vmem:[%s469 + $0xe8] sm:$0xff]
        %v625 = vld [vmem:[%s469 + $0xf0] sm:$0xff]
        %v626 = vld [vmem:[%s469 + $0xf8] sm:$0xff]
        %v627 = vld [vmem:[%s469 + $0x100] sm:$0xff]
        %v628 = vld [vmem:[%s469 + $0x108] sm:$0xff]
        %v629 = vld [vmem:[%s469 + $0x110] sm:$0xff]
        %v630 = vld [vmem:[%s469 + $0x118] sm:$0xff]
        %v631 = vld [vmem:[%s469 + $0x120] sm:$0xff]
        %v632 = vld [vmem:[%s469 + $0x128] sm:$0xff]
        %v633 = vld [vmem:[%s469 + $0x130] sm:$0xff]
        %v634 = vld [vmem:[%s469 + $0x138] sm:$0xff]
        %v635 = vld [vmem:[%s469 + $0x140] sm:$0xff]
        %v636 = vld [vmem:[%s469 + $0x148] sm:$0xff]
        %v637 = vld [vmem:[%s469 + $0x150] sm:$0xff]
        %v638 = vld [vmem:[%s469 + $0x158] sm:$0xff]
        %v639 = vld [vmem:[%s469 + $0x160] sm:$0xff]
        %v640 = vld [vmem:[%s469 + $0x168] sm:$0xff]
        %v641 = vld [vmem:[%s469 + $0x170] sm:$0xff]
        %v642 = vld [vmem:[%s469 + $0x178] sm:$0xff]
        %v643 = vld [vmem:[%s469 + $0x180] sm:$0xff]
        %v644 = vld [vmem:[%s469 + $0x188] sm:$0xff]
        %v645 = vld [vmem:[%s469 + $0x190] sm:$0xff]
        %v646 = vld [vmem:[%s469 + $0x198] sm:$0xff]
        %v647 = vld [vmem:[%s469 + $0x1a0] sm:$0xff]
        %v648 = vld [vmem:[%s469 + $0x1a8] sm:$0xff]
        %v649 = vld [vmem:[%s469 + $0x1b0] sm:$0xff]
        %v650 = vld [vmem:[%s469 + $0x1b8] sm:$0xff]
        %v651 = vld [vmem:[%s469 + $0x1c0] sm:$0xff]
        %v652 = vld [vmem:[%s469 + $0x1c8] sm:$0xff]
        %v653 = vld [vmem:[%s469 + $0x1d0] sm:$0xff]
        %v654 = vld [vmem:[%s469 + $0x1d8] sm:$0xff]
        %v655 = vld [vmem:[%s469 + $0x1e0] sm:$0xff]
        %v656 = vld [vmem:[%s469 + $0x1e8] sm:$0xff]
        %v657 = vld [vmem:[%s469 + $0x1f0] sm:$0xff]
        %v658 = vld [vmem:[%s469 + $0x1f8] sm:$0xff]
        %v659 = vld [vmem:[%s469 + $0x200] sm:$0xff]
        %v660 = vld [vmem:[%s469 + $0x208] sm:$0xff]
        %v661 = vld [vmem:[%s469 + $0x210] sm:$0xff]
        %v662 = vld [vmem:[%s469 + $0x218] sm:$0xff]
        %v663 = vld [vmem:[%s469 + $0x220] sm:$0xff]
        %v664 = vld [vmem:[%s469 + $0x228] sm:$0xff]
        %v665 = vld [vmem:[%s469 + $0x230] sm:$0xff]
        %v666 = vld [vmem:[%s469 + $0x238] sm:$0xff]
        %v667 = vld [vmem:[%s469 + $0x240] sm:$0xff]
        %v668 = vld [vmem:[%s469 + $0x248] sm:$0xff]
        %v669 = vld [vmem:[%s469 + $0x250] sm:$0xff]
        %v670 = vld [vmem:[%s469 + $0x258] sm:$0xff]
        %v671 = vld [vmem:[%s469 + $0x260] sm:$0xff]
        %v672 = vld [vmem:[%s469 + $0x268] sm:$0xff]
        %v673 = vld [vmem:[%s469 + $0x270] sm:$0xff]
        %v674 = vld [vmem:[%s469 + $0x278] sm:$0xff]
        %v675 = vld [vmem:[%s469 + $0x280] sm:$0xff]
        %v676 = vld [vmem:[%s469 + $0x288] sm:$0xff]
        %v677 = vld [vmem:[%s469 + $0x290] sm:$0xff]
        %v678 = vld [vmem:[%s469 + $0x298] sm:$0xff]
        %v679 = vld [vmem:[%s469 + $0x2a0] sm:$0xff]
        %v680 = vld [vmem:[%s469 + $0x2a8] sm:$0xff]
        %v681 = vld [vmem:[%s469 + $0x2b0] sm:$0xff]
        %v682 = vld [vmem:[%s469 + $0x2b8] sm:$0xff]
        %v683 = vld [vmem:[%s469 + $0x2c0] sm:$0xff]
        %v684 = vld [vmem:[%s469 + $0x2c8] sm:$0xff]
        %v685 = vld [vmem:[%s469 + $0x2d0] sm:$0xff]
        %v686 = vld [vmem:[%s469 + $0x2d8] sm:$0xff]
        %v687 = vld [vmem:[%s469 + $0x2e0] sm:$0xff]
        %v688 = vld [vmem:[%s469 + $0x2e8] sm:$0xff]
        %v689 = vld [vmem:[%s469 + $0x2f0] sm:$0xff]
        %v690 = vld [vmem:[%s469 + $0x2f8] sm:$0xff]
        %v691 = vld [vmem:[%s469 + $0x300] sm:$0xff]
        %v692 = vld [vmem:[%s469 + $0x308] sm:$0xff]
        %v693 = vld [vmem:[%s469 + $0x310] sm:$0xff]
        %v694 = vld [vmem:[%s469 + $0x318] sm:$0xff]
        %v695 = vld [vmem:[%s469 + $0x320] sm:$0xff]
        %v696 = vld [vmem:[%s469 + $0x328] sm:$0xff]
        %v697 = vld [vmem:[%s469 + $0x330] sm:$0xff]
        %v698 = vld [vmem:[%s469 + $0x338] sm:$0xff]
        %v699 = vld [vmem:[%s469 + $0x340] sm:$0xff]
        %v700 = vld [vmem:[%s469 + $0x348] sm:$0xff]
        %v701 = vld [vmem:[%s469 + $0x350] sm:$0xff]
        %v702 = vld [vmem:[%s469 + $0x358] sm:$0xff]
        %v703 = vld [vmem:[%s469 + $0x360] sm:$0xff]
        %v704 = vld [vmem:[%s469 + $0x368] sm:$0xff]
        %v705 = vld [vmem:[%s469 + $0x370] sm:$0xff]
        %v706 = vld [vmem:[%s469 + $0x378] sm:$0xff]
        %v707 = vld [vmem:[%s469 + $0x380] sm:$0xff]
        %v708 = vld [vmem:[%s469 + $0x388] sm:$0xff]
        %v709 = vld [vmem:[%s469 + $0x390] sm:$0xff]
        %v710 = vld [vmem:[%s469 + $0x398] sm:$0xff]
        %v711 = vld [vmem:[%s469 + $0x3a0] sm:$0xff]
        %v712 = vld [vmem:[%s469 + $0x3a8] sm:$0xff]
        %v713 = vld [vmem:[%s469 + $0x3b0] sm:$0xff]
        %v714 = vld [vmem:[%s469 + $0x3b8] sm:$0xff]
        %v715 = vld [vmem:[%s469 + $0x3c0] sm:$0xff]
        %v716 = vld [vmem:[%s469 + $0x3c8] sm:$0xff]
        %v717 = vld [vmem:[%s469 + $0x3d0] sm:$0xff]
        %v718 = vld [vmem:[%s469 + $0x3d8] sm:$0xff]
        %v719 = vld [vmem:[%s469 + $0x3e0] sm:$0xff]
        %v720 = vld [vmem:[%s469 + $0x3e8] sm:$0xff]
        %v721 = vld [vmem:[%s469 + $0x3f0] sm:$0xff]
        %v722 = vld [vmem:[%s469 + $0x3f8] sm:$0xff]
        %v723 = vld [vmem:[%s513] sm:$0xff]
        %v724 = vld [vmem:[%s513 + $0x8] sm:$0xff]
        %v725 = vld [vmem:[%s513 + $0x10] sm:$0xff]
        %v726 = vld [vmem:[%s513 + $0x18] sm:$0xff]
        %v727 = vld [vmem:[%s513 + $0x20] sm:$0xff]
        %v728 = vld [vmem:[%s513 + $0x28] sm:$0xff]
        %v729 = vld [vmem:[%s513 + $0x30] sm:$0xff]
        %v730 = vld [vmem:[%s513 + $0x38] sm:$0xff]
        %v731 = vld [vmem:[%s513 + $0x40] sm:$0xff]
        %v732 = vld [vmem:[%s513 + $0x48] sm:$0xff]
        %v733 = vld [vmem:[%s513 + $0x50] sm:$0xff]
        %v734 = vld [vmem:[%s513 + $0x58] sm:$0xff]
        %v735 = vld [vmem:[%s513 + $0x60] sm:$0xff]
        %v736 = vld [vmem:[%s513 + $0x68] sm:$0xff]
        %v737 = vld [vmem:[%s513 + $0x70] sm:$0xff]
        %v738 = vld [vmem:[%s513 + $0x78] sm:$0xff]
        %v739 = vld [vmem:[%s513 + $0x80] sm:$0xff]
        %v740 = vld [vmem:[%s513 + $0x88] sm:$0xff]
        %v741 = vld [vmem:[%s513 + $0x90] sm:$0xff]
        %v742 = vld [vmem:[%s513 + $0x98] sm:$0xff]
        %v743 = vld [vmem:[%s513 + $0xa0] sm:$0xff]
        %v744 = vld [vmem:[%s513 + $0xa8] sm:$0xff]
        %v745 = vld [vmem:[%s513 + $0xb0] sm:$0xff]
        %v746 = vld [vmem:[%s513 + $0xb8] sm:$0xff]
        %v747 = vld [vmem:[%s513 + $0xc0] sm:$0xff]
        %v748 = vld [vmem:[%s513 + $0xc8] sm:$0xff]
        %v749 = vld [vmem:[%s513 + $0xd0] sm:$0xff]
        %v750 = vld [vmem:[%s513 + $0xd8] sm:$0xff]
        %v751 = vld [vmem:[%s513 + $0xe0] sm:$0xff]
        %v752 = vld [vmem:[%s513 + $0xe8] sm:$0xff]
        %v753 = vld [vmem:[%s513 + $0xf0] sm:$0xff]
        %v754 = vld [vmem:[%s513 + $0xf8] sm:$0xff]
        %v755 = vld [vmem:[%s513 + $0x100] sm:$0xff]
        %v756 = vld [vmem:[%s513 + $0x108] sm:$0xff]
        %v757 = vld [vmem:[%s513 + $0x110] sm:$0xff]
        %v758 = vld [vmem:[%s513 + $0x118] sm:$0xff]
        %v759 = vld [vmem:[%s513 + $0x120] sm:$0xff]
        %v760 = vld [vmem:[%s513 + $0x128] sm:$0xff]
        %v761 = vld [vmem:[%s513 + $0x130] sm:$0xff]
        %v762 = vld [vmem:[%s513 + $0x138] sm:$0xff]
        %v763 = vld [vmem:[%s513 + $0x140] sm:$0xff]
        %v764 = vld [vmem:[%s513 + $0x148] sm:$0xff]
        %v765 = vld [vmem:[%s513 + $0x150] sm:$0xff]
        %v766 = vld [vmem:[%s513 + $0x158] sm:$0xff]
        %v767 = vld [vmem:[%s513 + $0x160] sm:$0xff]
        %v768 = vld [vmem:[%s513 + $0x168] sm:$0xff]
        %v769 = vld [vmem:[%s513 + $0x170] sm:$0xff]
        %v770 = vld [vmem:[%s513 + $0x178] sm:$0xff]
        %v771 = vld [vmem:[%s513 + $0x180] sm:$0xff]
        %v772 = vld [vmem:[%s513 + $0x188] sm:$0xff]
        %v773 = vld [vmem:[%s513 + $0x190] sm:$0xff]
        %v774 = vld [vmem:[%s513 + $0x198] sm:$0xff]
        %v775 = vld [vmem:[%s513 + $0x1a0] sm:$0xff]
        %v776 = vld [vmem:[%s513 + $0x1a8] sm:$0xff]
        %v777 = vld [vmem:[%s513 + $0x1b0] sm:$0xff]
        %v778 = vld [vmem:[%s513 + $0x1b8] sm:$0xff]
        %v779 = vld [vmem:[%s513 + $0x1c0] sm:$0xff]
        %v780 = vld [vmem:[%s513 + $0x1c8] sm:$0xff]
        %v781 = vld [vmem:[%s513 + $0x1d0] sm:$0xff]
        %v782 = vld [vmem:[%s513 + $0x1d8] sm:$0xff]
        %v783 = vld [vmem:[%s513 + $0x1e0] sm:$0xff]
        %v784 = vld [vmem:[%s513 + $0x1e8] sm:$0xff]
        %v785 = vld [vmem:[%s513 + $0x1f0] sm:$0xff]
        %v786 = vld [vmem:[%s513 + $0x1f8] sm:$0xff]
        %787 = vmatprep.subr.mxu0 0.0
        %788 = vmatpush1.msra.mxu0 %v723
        %789 = vmatprep.subr.mxu0 0.0
        %790 = vmatpush1.msra.mxu0 %v724
        %791 = vmatprep.subr.mxu0 0.0
        %792 = vmatpush1.msra.mxu0 %v725
        %793 = vmatprep.subr.mxu0 0.0
        %794 = vmatpush1.msra.mxu0 %v726
        %795 = vmatprep.subr.mxu0 0.0
        %796 = vmatpush1.msra.mxu0 %v727
        %797 = vmatprep.subr.mxu0 0.0
        %798 = vmatpush1.msra.mxu0 %v728
        %799 = vmatprep.subr.mxu0 0.0
        %800 = vmatpush1.msra.mxu0 %v729
        %801 = vmatprep.subr.mxu0 0.0
        %802 = vmatpush1.msra.mxu0 %v730
        %803 = vmatprep.subr.mxu0 0.0
        %804 = vmatpush1.msra.mxu0 %v731
        %805 = vmatprep.subr.mxu0 0.0
        %806 = vmatpush1.msra.mxu0 %v732
        %807 = vmatprep.subr.mxu0 0.0
        %808 = vmatpush1.msra.mxu0 %v733
        %809 = vmatprep.subr.mxu0 0.0
        %810 = vmatpush1.msra.mxu0 %v734
        %811 = vmatprep.subr.mxu0 0.0
        %812 = vmatpush1.msra.mxu0 %v735
        %813 = vmatprep.subr.mxu0 0.0
        %814 = vmatpush1.msra.mxu0 %v736
        %815 = vmatprep.subr.mxu0 0.0
        %816 = vmatpush1.msra.mxu0 %v737
        %817 = vmatprep.subr.mxu0 0.0
        %818 = vmatpush1.msra.mxu0 %v738
        %819 = vmatprep.subr.mxu0 0.0
        %820 = vmatpush1.msra.mxu0 %v739
        %821 = vmatprep.subr.mxu0 0.0
        %822 = vmatpush1.msra.mxu0 %v740
        %823 = vmatprep.subr.mxu0 0.0
        %824 = vmatpush1.msra.mxu0 %v741
        %825 = vmatprep.subr.mxu0 0.0
        %826 = vmatpush1.msra.mxu0 %v742
        %827 = vmatprep.subr.mxu0 0.0
        %828 = vmatpush1.msra.mxu0 %v743
        %829 = vmatprep.subr.mxu0 0.0
        %830 = vmatpush1.msra.mxu0 %v744
        %831 = vmatprep.subr.mxu0 0.0
        %832 = vmatpush1.msra.mxu0 %v745
        %833 = vmatprep.subr.mxu0 0.0
        %834 = vmatpush1.msra.mxu0 %v746
        %835 = vmatprep.subr.mxu0 0.0
        %836 = vmatpush1.msra.mxu0 %v747
        %837 = vmatprep.subr.mxu0 0.0
        %838 = vmatpush1.msra.mxu0 %v748
        %839 = vmatprep.subr.mxu0 0.0
        %840 = vmatpush1.msra.mxu0 %v749
        %841 = vmatprep.subr.mxu0 0.0
        %842 = vmatpush1.msra.mxu0 %v750
        %843 = vmatprep.subr.mxu0 0.0
        %844 = vmatpush1.msra.mxu0 %v751
        %845 = vmatprep.subr.mxu0 0.0
        %846 = vmatpush1.msra.mxu0 %v752
        %847 = vmatprep.subr.mxu0 0.0
        %848 = vmatpush1.msra.mxu0 %v753
        %849 = vmatprep.subr.mxu0 0.0
        %850 = vmatpush1.msra.mxu0 %v754
        %851 = vmatprep.mubr.f32.mxu0 %v596
        %852 = vmatmul.mubr.f32.gmra.mrb[0].mxu0 %v595
        %v853 = vpop.f32.mrb[0].mxu0
        %v854 = vadd.f32 0.0, %v853
        %v855 = vpop.f32.mrb[0].mxu0
        %856 = vmatprep.mubr.f32.mxu0 %v600
        %857 = vmatmul.mubr.f32.gmra.mrb[0].mxu0 %v599
        %v858 = vpop.f32.mrb[0].mxu0
        %v859 = vadd.f32 0.0, %v858
        %v860 = vpop.f32.mrb[0].mxu0
        %861 = vmatprep.mubr.f32.mxu0 %v604
        %862 = vmatmul.mubr.f32.gmra.mrb[0].mxu0 %v603
        %v863 = vpop.f32.mrb[0].mxu0
        %v864 = vadd.f32 0.0, %v863
        %v865 = vpop.f32.mrb[0].mxu0
        %866 = vmatprep.mubr.f32.mxu0 %v608
        %867 = vmatmul.mubr.f32.gmra.mrb[0].mxu0 %v607
        %v868 = vpop.f32.mrb[0].mxu0
        %v869 = vadd.f32 0.0, %v868
        %v870 = vpop.f32.mrb[0].mxu0
        %871 = vmatprep.mubr.f32.mxu0 %v612
        %872 = vmatmul.mubr.f32.gmra.mrb[0].mxu0 %v611
        %v873 = vpop.f32.mrb[0].mxu0
        %v874 = vadd.f32 0.0, %v873
        %v875 = vpop.f32.mrb[0].mxu0
        %876 = vmatprep.mubr.f32.mxu0 %v616
        %877 = vmatmul.mubr.f32.gmra.mrb[0].mxu0 %v615
        %v878 = vpop.f32.mrb[0].mxu0
        %v879 = vadd.f32 0.0, %v878
        %v880 = vpop.f32.mrb[0].mxu0
        %881 = vmatprep.mubr.f32.mxu0 %v620
        %882 = vmatmul.mubr.f32.gmra.mrb[0].mxu0 %v619
        %v883 = vpop.f32.mrb[0].mxu0
        %v884 = vadd.f32 0.0, %v883
        %v885 = vpop.f32.mrb[0].mxu0
        %886 = vmatprep.mubr.f32.mxu0 %v624
        %887 = vmatmul.mubr.f32.gmra.mrb[0].mxu0 %v623
        %v888 = vpop.f32.mrb[0].mxu0
        %v889 = vadd.f32 0.0, %v888
        %v890 = vpop.f32.mrb[0].mxu0
        %891 = vmatprep.mubr.f32.mxu0 %v628
        %892 = vmatmul.mubr.f32.gmra.mrb[0].mxu0 %v627
        %v893 = vpop.f32.mrb[0].mxu0
        %v894 = vadd.f32 0.0, %v893
        %v895 = vpop.f32.mrb[0].mxu0
        %896 = vmatprep.mubr.f32.mxu0 %v632
        %897 = vmatmul.mubr.f32.gmra.mrb[0].mxu0 %v631
        %v898 = vpop.f32.mrb[0].mxu0
        %v899 = vadd.f32 0.0, %v898
        %v900 = vpop.f32.mrb[0].mxu0
        %901 = vmatprep.mubr.f32.mxu0 %v636
        %902 = vmatmul.mubr.f32.gmra.mrb[0].mxu0 %v635
        %v903 = vpop.f32.mrb[0].mxu0
        %v904 = vadd.f32 0.0, %v903
        %v905 = vpop.f32.mrb[0].mxu0
        %906 = vmatprep.mubr.f32.mxu0 %v640
        %907 = vmatmul.mubr.f32.gmra.mrb[0].mxu0 %v639
        %v908 = vpop.f32.mrb[0].mxu0
        %v909 = vadd.f32 0.0, %v908
        %v910 = vpop.f32.mrb[0].mxu0
        %911 = vmatprep.mubr.f32.mxu0 %v644
        %912 = vmatmul.mubr.f32.gmra.mrb[0].mxu0 %v643
        %v913 = vpop.f32.mrb[0].mxu0
        %v914 = vadd.f32 0.0, %v913
        %v915 = vpop.f32.mrb[0].mxu0
        %916 = vmatprep.mubr.f32.mxu0 %v648
        %917 = vmatmul.mubr.f32.gmra.mrb[0].mxu0 %v647
        %v918 = vpop.f32.mrb[0].mxu0
        %v919 = vadd.f32 0.0, %v918
        %v920 = vpop.f32.mrb[0].mxu0
        %921 = vmatprep.mubr.f32.mxu0 %v652
        %922 = vmatmul.mubr.f32.gmra.mrb[0].mxu0 %v651
        %v923 = vpop.f32.mrb[0].mxu0
        %v924 = vadd.f32 0.0, %v923
        %v925 = vpop.f32.mrb[0].mxu0
        %926 = vmatprep.mubr.f32.mxu0 %v656
        %927 = vmatmul.mubr.f32.gmra.mrb[0].mxu0 %v655
        %v928 = vpop.f32.mrb[0].mxu0
        %v929 = vadd.f32 0.0, %v928
        %v930 = vpop.f32.mrb[0].mxu0
        %931 = vmatprep.mubr.f32.mxu0 %v660
        %932 = vmatmul.mubr.f32.gmra.mrb[0].mxu0 %v659
        %v933 = vpop.f32.mrb[0].mxu0
        %v934 = vadd.f32 0.0, %v933
        %v935 = vpop.f32.mrb[0].mxu0
        %936 = vmatprep.mubr.f32.mxu0 %v664
        %937 = vmatmul.mubr.f32.gmra.mrb[0].mxu0 %v663
        %v938 = vpop.f32.mrb[0].mxu0
        %v939 = vadd.f32 0.0, %v938
        %v940 = vpop.f32.mrb[0].mxu0
        %941 = vmatprep.mubr.f32.mxu0 %v668
        %942 = vmatmul.mubr.f32.gmra.mrb[0].mxu0 %v667
        %v943 = vpop.f32.mrb[0].mxu0
        %v944 = vadd.f32 0.0, %v943
        %v945 = vpop.f32.mrb[0].mxu0
        %946 = vmatprep.mubr.f32.mxu0 %v672
        %947 = vmatmul.mubr.f32.gmra.mrb[0].mxu0 %v671
        %v948 = vpop.f32.mrb[0].mxu0
        %v949 = vadd.f32 0.0, %v948
        %v950 = vpop.f32.mrb[0].mxu0
        %951 = vmatprep.mubr.f32.mxu0 %v676
        %952 = vmatmul.mubr.f32.gmra.mrb[0].mxu0 %v675
        %v953 = vpop.f32.mrb[0].mxu0
        %v954 = vadd.f32 0.0, %v953
        %v955 = vpop.f32.mrb[0].mxu0
        %956 = vmatprep.mubr.f32.mxu0 %v680
        %957 = vmatmul.mubr.f32.gmra.mrb[0].mxu0 %v679
        %v958 = vpop.f32.mrb[0].mxu0
        %v959 = vadd.f32 0.0, %v958
        %v960 = vpop.f32.mrb[0].mxu0
        %961 = vmatprep.mubr.f32.mxu0 %v684
        %962 = vmatmul.mubr.f32.gmra.mrb[0].mxu0 %v683
        %v963 = vpop.f32.mrb[0].mxu0
        %v964 = vadd.f32 0.0, %v963
        %v965 = vpop.f32.mrb[0].mxu0
        %966 = vmatprep.mubr.f32.mxu0 %v688
        %967 = vmatmul.mubr.f32.gmra.mrb[0].mxu0 %v687
        %v968 = vpop.f32.mrb[0].mxu0
        %v969 = vadd.f32 0.0, %v968
        %v970 = vpop.f32.mrb[0].mxu0
        %971 = vmatprep.mubr.f32.mxu0 %v692
        %972 = vmatmul.mubr.f32.gmra.mrb[0].mxu0 %v691
        %v973 = vpop.f32.mrb[0].mxu0
        %v974 = vadd.f32 0.0, %v973
        %v975 = vpop.f32.mrb[0].mxu0
        %976 = vmatprep.mubr.f32.mxu0 %v696
        %977 = vmatmul.mubr.f32.gmra.mrb[0].mxu0 %v695
        %v978 = vpop.f32.mrb[0].mxu0
        %v979 = vadd.f32 0.0, %v978
        %v980 = vpop.f32.mrb[0].mxu0
        %981 = vmatprep.mubr.f32.mxu0 %v700
        %982 = vmatmul.mubr.f32.gmra.mrb[0].mxu0 %v699
        %v983 = vpop.f32.mrb[0].mxu0
        %v984 = vadd.f32 0.0, %v983
        %v985 = vpop.f32.mrb[0].mxu0
        %986 = vmatprep.mubr.f32.mxu0 %v704
        %987 = vmatmul.mubr.f32.gmra.mrb[0].mxu0 %v703
        %v988 = vpop.f32.mrb[0].mxu0
        %v989 = vadd.f32 0.0, %v988
        %v990 = vpop.f32.mrb[0].mxu0
        %991 = vmatprep.mubr.f32.mxu0 %v708
        %992 = vmatmul.mubr.f32.gmra.mrb[0].mxu0 %v707
        %v993 = vpop.f32.mrb[0].mxu0
        %v994 = vadd.f32 0.0, %v993
        %v995 = vpop.f32.mrb[0].mxu0
        %996 = vmatprep.mubr.f32.mxu0 %v712
        %997 = vmatmul.mubr.f32.gmra.mrb[0].mxu0 %v711
        %v998 = vpop.f32.mrb[0].mxu0
        %v999 = vadd.f32 0.0, %v998
        %v1000 = vpop.f32.mrb[0].mxu0
        %1001 = vmatprep.mubr.f32.mxu0 %v716
        %1002 = vmatmul.mubr.f32.gmra.mrb[0].mxu0 %v715
        %v1003 = vpop.f32.mrb[0].mxu0
        %v1004 = vadd.f32 0.0, %v1003
        %v1005 = vpop.f32.mrb[0].mxu0
        %1006 = vmatprep.mubr.f32.mxu0 %v720
        %1007 = vmatmul.mubr.f32.gmra.mrb[0].mxu0 %v719
        %v1008 = vpop.f32.mrb[0].mxu0
        %v1009 = vadd.f32 0.0, %v1008
        %v1010 = vpop.f32.mrb[0].mxu0
        %1011 = vdwg.mxu0
        %1012 = vmatprep.subr.mxu0 0.0
        %1013 = vmatpush1.msra.mxu0 %v755
        %1014 = vmatprep.subr.mxu0 0.0
        %1015 = vmatpush1.msra.mxu0 %v756
        %1016 = vmatprep.subr.mxu0 0.0
        %1017 = vmatpush1.msra.mxu0 %v757
        %1018 = vmatprep.subr.mxu0 0.0
        %1019 = vmatpush1.msra.mxu0 %v758
        %1020 = vmatprep.subr.mxu0 0.0
        %1021 = vmatpush1.msra.mxu0 %v759
        %1022 = vmatprep.subr.mxu0 0.0
        %1023 = vmatpush1.msra.mxu0 %v760
        %1024 = vmatprep.subr.mxu0 0.0
        %1025 = vmatpush1.msra.mxu0 %v761
        %1026 = vmatprep.subr.mxu0 0.0
        %1027 = vmatpush1.msra.mxu0 %v762
        %1028 = vmatprep.subr.mxu0 0.0
        %1029 = vmatpush1.msra.mxu0 %v763
        %1030 = vmatprep.subr.mxu0 0.0
        %1031 = vmatpush1.msra.mxu0 %v764
        %1032 = vmatprep.subr.mxu0 0.0
        %1033 = vmatpush1.msra.mxu0 %v765
        %1034 = vmatprep.subr.mxu0 0.0
        %1035 = vmatpush1.msra.mxu0 %v766
        %1036 = vmatprep.subr.mxu0 0.0
        %1037 = vmatpush1.msra.mxu0 %v767
        %1038 = vmatprep.subr.mxu0 0.0
        %1039 = vmatpush1.msra.mxu0 %v768
        %1040 = vmatprep.subr.mxu0 0.0
        %1041 = vmatpush1.msra.mxu0 %v769
        %1042 = vmatprep.subr.mxu0 0.0
        %1043 = vmatpush1.msra.mxu0 %v770
        %1044 = vmatprep.subr.mxu0 0.0
        %1045 = vmatpush1.msra.mxu0 %v771
        %1046 = vmatprep.subr.mxu0 0.0
        %1047 = vmatpush1.msra.mxu0 %v772
        %1048 = vmatprep.subr.mxu0 0.0
        %1049 = vmatpush1.msra.mxu0 %v773
        %1050 = vmatprep.subr.mxu0 0.0
        %1051 = vmatpush1.msra.mxu0 %v774
        %1052 = vmatprep.subr.mxu0 0.0
        %1053 = vmatpush1.msra.mxu0 %v775
        %1054 = vmatprep.subr.mxu0 0.0
        %1055 = vmatpush1.msra.mxu0 %v776
        %1056 = vmatprep.subr.mxu0 0.0
        %1057 = vmatpush1.msra.mxu0 %v777
        %1058 = vmatprep.subr.mxu0 0.0
        %1059 = vmatpush1.msra.mxu0 %v778
        %1060 = vmatprep.subr.mxu0 0.0
        %1061 = vmatpush1.msra.mxu0 %v779
        %1062 = vmatprep.subr.mxu0 0.0
        %1063 = vmatpush1.msra.mxu0 %v780
        %1064 = vmatprep.subr.mxu0 0.0
        %1065 = vmatpush1.msra.mxu0 %v781
        %1066 = vmatprep.subr.mxu0 0.0
        %1067 = vmatpush1.msra.mxu0 %v782
        %1068 = vmatprep.subr.mxu0 0.0
        %1069 = vmatpush1.msra.mxu0 %v783
        %1070 = vmatprep.subr.mxu0 0.0
        %1071 = vmatpush1.msra.mxu0 %v784
        %1072 = vmatprep.subr.mxu0 0.0
        %1073 = vmatpush1.msra.mxu0 %v785
        %1074 = vmatprep.subr.mxu0 0.0
        %1075 = vmatpush1.msra.mxu0 %v786
        %1076 = vmatprep.mubr.f32.mxu0 %v598
        %1077 = vmatmul.mubr.f32.gmra.mrb[0].mxu0 %v597
        %v1078 = vpop.f32.mrb[0].mxu0
        %v1079 = vadd.f32 %v854, %v1078
        %v1080 = vpop.f32.mrb[0].mxu0
        %1081 = vmatprep.mubr.f32.mxu0 %v602
        %1082 = vmatmul.mubr.f32.gmra.mrb[0].mxu0 %v601
        %v1083 = vpop.f32.mrb[0].mxu0
        %v1084 = vadd.f32 %v859, %v1083
        %v1085 = vpop.f32.mrb[0].mxu0
        %1086 = vmatprep.mubr.f32.mxu0 %v606
        %1087 = vmatmul.mubr.f32.gmra.mrb[0].mxu0 %v605
        %v1088 = vpop.f32.mrb[0].mxu0
        %v1089 = vadd.f32 %v864, %v1088
        %v1090 = vpop.f32.mrb[0].mxu0
        %1091 = vmatprep.mubr.f32.mxu0 %v610
        %1092 = vmatmul.mubr.f32.gmra.mrb[0].mxu0 %v609
        %v1093 = vpop.f32.mrb[0].mxu0
        %v1094 = vadd.f32 %v869, %v1093
        %v1095 = vpop.f32.mrb[0].mxu0
        %1096 = vmatprep.mubr.f32.mxu0 %v614
        %1097 = vmatmul.mubr.f32.gmra.mrb[0].mxu0 %v613
        %v1098 = vpop.f32.mrb[0].mxu0
        %v1099 = vadd.f32 %v874, %v1098
        %v1100 = vpop.f32.mrb[0].mxu0
        %1101 = vmatprep.mubr.f32.mxu0 %v618
        %1102 = vmatmul.mubr.f32.gmra.mrb[0].mxu0 %v617
        %v1103 = vpop.f32.mrb[0].mxu0
        %v1104 = vadd.f32 %v879, %v1103
        %v1105 = vpop.f32.mrb[0].mxu0
        %1106 = vmatprep.mubr.f32.mxu0 %v622
        %1107 = vmatmul.mubr.f32.gmra.mrb[0].mxu0 %v621
        %v1108 = vpop.f32.mrb[0].mxu0
        %v1109 = vadd.f32 %v884, %v1108
        %v1110 = vpop.f32.mrb[0].mxu0
        %1111 = vmatprep.mubr.f32.mxu0 %v626
        %1112 = vmatmul.mubr.f32.gmra.mrb[0].mxu0 %v625
        %v1113 = vpop.f32.mrb[0].mxu0
        %v1114 = vadd.f32 %v889, %v1113
        %v1115 = vpop.f32.mrb[0].mxu0
        %1116 = vmatprep.mubr.f32.mxu0 %v630
        %1117 = vmatmul.mubr.f32.gmra.mrb[0].mxu0 %v629
        %v1118 = vpop.f32.mrb[0].mxu0
        %v1119 = vadd.f32 %v894, %v1118
        %v1120 = vpop.f32.mrb[0].mxu0
        %1121 = vmatprep.mubr.f32.mxu0 %v634
        %1122 = vmatmul.mubr.f32.gmra.mrb[0].mxu0 %v633
        %v1123 = vpop.f32.mrb[0].mxu0
        %v1124 = vadd.f32 %v899, %v1123
        %v1125 = vpop.f32.mrb[0].mxu0
        %1126 = vmatprep.mubr.f32.mxu0 %v638
        %1127 = vmatmul.mubr.f32.gmra.mrb[0].mxu0 %v637
        %v1128 = vpop.f32.mrb[0].mxu0
        %v1129 = vadd.f32 %v904, %v1128
        %v1130 = vpop.f32.mrb[0].mxu0
        %1131 = vmatprep.mubr.f32.mxu0 %v642
        %1132 = vmatmul.mubr.f32.gmra.mrb[0].mxu0 %v641
        %v1133 = vpop.f32.mrb[0].mxu0
        %v1134 = vadd.f32 %v909, %v1133
        %v1135 = vpop.f32.mrb[0].mxu0
        %1136 = vmatprep.mubr.f32.mxu0 %v646
        %1137 = vmatmul.mubr.f32.gmra.mrb[0].mxu0 %v645
        %v1138 = vpop.f32.mrb[0].mxu0
        %v1139 = vadd.f32 %v914, %v1138
        %v1140 = vpop.f32.mrb[0].mxu0
        %1141 = vmatprep.mubr.f32.mxu0 %v650
        %1142 = vmatmul.mubr.f32.gmra.mrb[0].mxu0 %v649
        %v1143 = vpop.f32.mrb[0].mxu0
        %v1144 = vadd.f32 %v919, %v1143
        %v1145 = vpop.f32.mrb[0].mxu0
        %1146 = vmatprep.mubr.f32.mxu0 %v654
        %1147 = vmatmul.mubr.f32.gmra.mrb[0].mxu0 %v653
        %v1148 = vpop.f32.mrb[0].mxu0
        %v1149 = vadd.f32 %v924, %v1148
        %v1150 = vpop.f32.mrb[0].mxu0
        %1151 = vmatprep.mubr.f32.mxu0 %v658
        %1152 = vmatmul.mubr.f32.gmra.mrb[0].mxu0 %v657
        %v1153 = vpop.f32.mrb[0].mxu0
        %v1154 = vadd.f32 %v929, %v1153
        %v1155 = vpop.f32.mrb[0].mxu0
        %1156 = vmatprep.mubr.f32.mxu0 %v662
        %1157 = vmatmul.mubr.f32.gmra.mrb[0].mxu0 %v661
        %v1158 = vpop.f32.mrb[0].mxu0
        %v1159 = vadd.f32 %v934, %v1158
        %v1160 = vpop.f32.mrb[0].mxu0
        %1161 = vmatprep.mubr.f32.mxu0 %v666
        %1162 = vmatmul.mubr.f32.gmra.mrb[0].mxu0 %v665
        %v1163 = vpop.f32.mrb[0].mxu0
        %v1164 = vadd.f32 %v939, %v1163
        %v1165 = vpop.f32.mrb[0].mxu0
        %1166 = vmatprep.mubr.f32.mxu0 %v670
        %1167 = vmatmul.mubr.f32.gmra.mrb[0].mxu0 %v669
        %v1168 = vpop.f32.mrb[0].mxu0
        %v1169 = vadd.f32 %v944, %v1168
        %v1170 = vpop.f32.mrb[0].mxu0
        %1171 = vmatprep.mubr.f32.mxu0 %v674
        %1172 = vmatmul.mubr.f32.gmra.mrb[0].mxu0 %v673
        %v1173 = vpop.f32.mrb[0].mxu0
        %v1174 = vadd.f32 %v949, %v1173
        %v1175 = vpop.f32.mrb[0].mxu0
        %1176 = vmatprep.mubr.f32.mxu0 %v678
        %1177 = vmatmul.mubr.f32.gmra.mrb[0].mxu0 %v677
        %v1178 = vpop.f32.mrb[0].mxu0
        %v1179 = vadd.f32 %v954, %v1178
        %v1180 = vpop.f32.mrb[0].mxu0
        %1181 = vmatprep.mubr.f32.mxu0 %v682
        %1182 = vmatmul.mubr.f32.gmra.mrb[0].mxu0 %v681
        %v1183 = vpop.f32.mrb[0].mxu0
        %v1184 = vadd.f32 %v959, %v1183
        %v1185 = vpop.f32.mrb[0].mxu0
        %1186 = vmatprep.mubr.f32.mxu0 %v686
        %1187 = vmatmul.mubr.f32.gmra.mrb[0].mxu0 %v685
        %v1188 = vpop.f32.mrb[0].mxu0
        %v1189 = vadd.f32 %v964, %v1188
        %v1190 = vpop.f32.mrb[0].mxu0
        %1191 = vmatprep.mubr.f32.mxu0 %v690
        %1192 = vmatmul.mubr.f32.gmra.mrb[0].mxu0 %v689
        %v1193 = vpop.f32.mrb[0].mxu0
        %v1194 = vadd.f32 %v969, %v1193
        %v1195 = vpop.f32.mrb[0].mxu0
        %1196 = vmatprep.mubr.f32.mxu0 %v694
        %1197 = vmatmul.mubr.f32.gmra.mrb[0].mxu0 %v693
        %v1198 = vpop.f32.mrb[0].mxu0
        %v1199 = vadd.f32 %v974, %v1198
        %v1200 = vpop.f32.mrb[0].mxu0
        %1201 = vmatprep.mubr.f32.mxu0 %v698
        %1202 = vmatmul.mubr.f32.gmra.mrb[0].mxu0 %v697
        %v1203 = vpop.f32.mrb[0].mxu0
        %v1204 = vadd.f32 %v979, %v1203
        %v1205 = vpop.f32.mrb[0].mxu0
        %1206 = vmatprep.mubr.f32.mxu0 %v702
        %1207 = vmatmul.mubr.f32.gmra.mrb[0].mxu0 %v701
        %v1208 = vpop.f32.mrb[0].mxu0
        %v1209 = vadd.f32 %v984, %v1208
        %v1210 = vpop.f32.mrb[0].mxu0
        %1211 = vmatprep.mubr.f32.mxu0 %v706
        %1212 = vmatmul.mubr.f32.gmra.mrb[0].mxu0 %v705
        %v1213 = vpop.f32.mrb[0].mxu0
        %v1214 = vadd.f32 %v989, %v1213
        %v1215 = vpop.f32.mrb[0].mxu0
        %1216 = vmatprep.mubr.f32.mxu0 %v710
        %1217 = vmatmul.mubr.f32.gmra.mrb[0].mxu0 %v709
        %v1218 = vpop.f32.mrb[0].mxu0
        %v1219 = vadd.f32 %v994, %v1218
        %v1220 = vpop.f32.mrb[0].mxu0
        %1221 = vmatprep.mubr.f32.mxu0 %v714
        %1222 = vmatmul.mubr.f32.gmra.mrb[0].mxu0 %v713
        %v1223 = vpop.f32.mrb[0].mxu0
        %v1224 = vadd.f32 %v999, %v1223
        %v1225 = vpop.f32.mrb[0].mxu0
        %1226 = vmatprep.mubr.f32.mxu0 %v718
        %1227 = vmatmul.mubr.f32.gmra.mrb[0].mxu0 %v717
        %v1228 = vpop.f32.mrb[0].mxu0
        %v1229 = vadd.f32 %v1004, %v1228
        %v1230 = vpop.f32.mrb[0].mxu0
        %1231 = vmatprep.mubr.f32.mxu0 %v722
        %1232 = vmatmul.mubr.f32.gmra.mrb[0].mxu0 %v721
        %v1233 = vpop.f32.mrb[0].mxu0
        %v1234 = vadd.f32 %v1009, %v1233
        %v1235 = vpop.f32.mrb[0].mxu0
        %1236 = vdwg.mxu0
        %v1237 = vadd.f32 %v563, %v1079
        %v1238 = vadd.f32 %v564, %v1084
        %v1239 = vadd.f32 %v565, %v1089
        %v1240 = vadd.f32 %v566, %v1094
        %v1241 = vadd.f32 %v567, %v1099
        %v1242 = vadd.f32 %v568, %v1104
        %v1243 = vadd.f32 %v569, %v1109
        %v1244 = vadd.f32 %v570, %v1114
        %v1245 = vadd.f32 %v571, %v1119
        %v1246 = vadd.f32 %v572, %v1124
        %v1247 = vadd.f32 %v573, %v1129
        %v1248 = vadd.f32 %v574, %v1134
        %v1249 = vadd.f32 %v575, %v1139
        %v1250 = vadd.f32 %v576, %v1144
        %v1251 = vadd.f32 %v577, %v1149
        %v1252 = vadd.f32 %v578, %v1154
        %v1253 = vadd.f32 %v579, %v1159
        %v1254 = vadd.f32 %v580, %v1164
        %v1255 = vadd.f32 %v581, %v1169
        %v1256 = vadd.f32 %v582, %v1174
        %v1257 = vadd.f32 %v583, %v1179
        %v1258 = vadd.f32 %v584, %v1184
        %v1259 = vadd.f32 %v585, %v1189
        %v1260 = vadd.f32 %v586, %v1194
        %v1261 = vadd.f32 %v587, %v1199
        %v1262 = vadd.f32 %v588, %v1204
        %v1263 = vadd.f32 %v589, %v1209
        %v1264 = vadd.f32 %v590, %v1214
        %v1265 = vadd.f32 %v591, %v1219
        %v1266 = vadd.f32 %v592, %v1224
        %v1267 = vadd.f32 %v593, %v1229
        %v1268 = vadd.f32 %v594, %v1234
        %1269 = vst [vmem:[#allocation2] sm:$0xff] %v1237
        %1270 = vst [vmem:[#allocation2 + $0x8] sm:$0xff] %v1238
        %1271 = vst [vmem:[#allocation2 + $0x10] sm:$0xff] %v1239
        %1272 = vst [vmem:[#allocation2 + $0x18] sm:$0xff] %v1240
        %1273 = vst [vmem:[#allocation2 + $0x20] sm:$0xff] %v1241
        %1274 = vst [vmem:[#allocation2 + $0x28] sm:$0xff] %v1242
        %1275 = vst [vmem:[#allocation2 + $0x30] sm:$0xff] %v1243
        %1276 = vst [vmem:[#allocation2 + $0x38] sm:$0xff] %v1244
        %1277 = vst [vmem:[#allocation2 + $0x40] sm:$0xff] %v1245
        %1278 = vst [vmem:[#allocation2 + $0x48] sm:$0xff] %v1246
        %1279 = vst [vmem:[#allocation2 + $0x50] sm:$0xff] %v1247
        %1280 = vst [vmem:[#allocation2 + $0x58] sm:$0xff] %v1248
        %1281 = vst [vmem:[#allocation2 + $0x60] sm:$0xff] %v1249
        %1282 = vst [vmem:[#allocation2 + $0x68] sm:$0xff] %v1250
        %1283 = vst [vmem:[#allocation2 + $0x70] sm:$0xff] %v1251
        %1284 = vst [vmem:[#allocation2 + $0x78] sm:$0xff] %v1252
        %1285 = vst [vmem:[#allocation2 + $0x80] sm:$0xff] %v1253
        %1286 = vst [vmem:[#allocation2 + $0x88] sm:$0xff] %v1254
        %1287 = vst [vmem:[#allocation2 + $0x90] sm:$0xff] %v1255
        %1288 = vst [vmem:[#allocation2 + $0x98] sm:$0xff] %v1256
        %1289 = vst [vmem:[#allocation2 + $0xa0] sm:$0xff] %v1257
        %1290 = vst [vmem:[#allocation2 + $0xa8] sm:$0xff] %v1258
        %1291 = vst [vmem:[#allocation2 + $0xb0] sm:$0xff] %v1259
        %1292 = vst [vmem:[#allocation2 + $0xb8] sm:$0xff] %v1260
        %1293 = vst [vmem:[#allocation2 + $0xc0] sm:$0xff] %v1261
        %1294 = vst [vmem:[#allocation2 + $0xc8] sm:$0xff] %v1262
        %1295 = vst [vmem:[#allocation2 + $0xd0] sm:$0xff] %v1263
        %1296 = vst [vmem:[#allocation2 + $0xd8] sm:$0xff] %v1264
        %1297 = vst [vmem:[#allocation2 + $0xe0] sm:$0xff] %v1265
        %1298 = vst [vmem:[#allocation2 + $0xe8] sm:$0xff] %v1266
        %1299 = vst [vmem:[#allocation2 + $0xf0] sm:$0xff] %v1267
        %1300 = vst [vmem:[#allocation2 + $0xf8] sm:$0xff] %v1268
        %p1301 = scmp.eq.s32.totalorder %s21, 1
        // Predicated region
        $region60: #{no_norm_discriminator.9} parent=50 // pred_check
          %p1302 = pneg %p1301
        $region61: #{no_norm_discriminator.9} parent=50 // pred_check_branch
          %1304 = sbr.rel (%p1302) target = $region63
        $region62: #{no_norm_discriminator.9} parent=50 // pred_region
          %v1305 = vld [vmem:[#allocation2] sm:$0xff]
          %v1306 = vld [vmem:[#allocation2 + $0x8] sm:$0xff]
          %v1307 = vld [vmem:[#allocation2 + $0x10] sm:$0xff]
          %v1308 = vld [vmem:[#allocation2 + $0x18] sm:$0xff]
          %v1309 = vld [vmem:[#allocation2 + $0x20] sm:$0xff]
          %v1310 = vld [vmem:[#allocation2 + $0x28] sm:$0xff]
          %v1311 = vld [vmem:[#allocation2 + $0x30] sm:$0xff]
          %v1312 = vld [vmem:[#allocation2 + $0x38] sm:$0xff]
          %v1313 = vld [vmem:[#allocation2 + $0x40] sm:$0xff]
          %v1314 = vld [vmem:[#allocation2 + $0x48] sm:$0xff]
          %v1315 = vld [vmem:[#allocation2 + $0x50] sm:$0xff]
          %v1316 = vld [vmem:[#allocation2 + $0x58] sm:$0xff]
          %v1317 = vld [vmem:[#allocation2 + $0x60] sm:$0xff]
          %v1318 = vld [vmem:[#allocation2 + $0x68] sm:$0xff]
          %v1319 = vld [vmem:[#allocation2 + $0x70] sm:$0xff]
          %v1320 = vld [vmem:[#allocation2 + $0x78] sm:$0xff]
          %v1321 = vld [vmem:[#allocation2 + $0x80] sm:$0xff]
          %v1322 = vld [vmem:[#allocation2 + $0x88] sm:$0xff]
          %v1323 = vld [vmem:[#allocation2 + $0x90] sm:$0xff]
          %v1324 = vld [vmem:[#allocation2 + $0x98] sm:$0xff]
          %v1325 = vld [vmem:[#allocation2 + $0xa0] sm:$0xff]
          %v1326 = vld [vmem:[#allocation2 + $0xa8] sm:$0xff]
          %v1327 = vld [vmem:[#allocation2 + $0xb0] sm:$0xff]
          %v1328 = vld [vmem:[#allocation2 + $0xb8] sm:$0xff]
          %v1329 = vld [vmem:[#allocation2 + $0xc0] sm:$0xff]
          %v1330 = vld [vmem:[#allocation2 + $0xc8] sm:$0xff]
          %v1331 = vld [vmem:[#allocation2 + $0xd0] sm:$0xff]
          %v1332 = vld [vmem:[#allocation2 + $0xd8] sm:$0xff]
          %v1333 = vld [vmem:[#allocation2 + $0xe0] sm:$0xff]
          %v1334 = vld [vmem:[#allocation2 + $0xe8] sm:$0xff]
          %v1335 = vld [vmem:[#allocation2 + $0xf0] sm:$0xff]
          %v1336 = vld [vmem:[#allocation2 + $0xf8] sm:$0xff]
          %v1337 = vld [vmem:[%s517] sm:$0x1]
          %v1339 = vlaneseq
          %v1340 = vshrl.u32 %v1339, 7
          %v1341 = vsub.s32 0, %v1340
          %v1342 = vrot.slane %v1337, %v1341
          %v1344 = vadd.f32 %v1305, %v1342
          %v1345 = vadd.f32 %v1306, %v1342
          %v1346 = vadd.f32 %v1307, %v1342
          %v1347 = vadd.f32 %v1308, %v1342
          %v1348 = vadd.f32 %v1309, %v1342
          %v1349 = vadd.f32 %v1310, %v1342
          %v1350 = vadd.f32 %v1311, %v1342
          %v1351 = vadd.f32 %v1312, %v1342
          %v1352 = vadd.f32 %v1313, %v1342
          %v1353 = vadd.f32 %v1314, %v1342
          %v1354 = vadd.f32 %v1315, %v1342
          %v1355 = vadd.f32 %v1316, %v1342
          %v1356 = vadd.f32 %v1317, %v1342
          %v1357 = vadd.f32 %v1318, %v1342
          %v1358 = vadd.f32 %v1319, %v1342
          %v1359 = vadd.f32 %v1320, %v1342
          %v1360 = vadd.f32 %v1321, %v1342
          %v1361 = vadd.f32 %v1322, %v1342
          %v1362 = vadd.f32 %v1323, %v1342
          %v1363 = vadd.f32 %v1324, %v1342
          %v1364 = vadd.f32 %v1325, %v1342
          %v1365 = vadd.f32 %v1326, %v1342
          %v1366 = vadd.f32 %v1327, %v1342
          %v1367 = vadd.f32 %v1328, %v1342
          %v1368 = vadd.f32 %v1329, %v1342
          %v1369 = vadd.f32 %v1330, %v1342
          %v1370 = vadd.f32 %v1331, %v1342
          %v1371 = vadd.f32 %v1332, %v1342
          %v1372 = vadd.f32 %v1333, %v1342
          %v1373 = vadd.f32 %v1334, %v1342
          %v1374 = vadd.f32 %v1335, %v1342
          %v1375 = vadd.f32 %v1336, %v1342
          %1376 = vst [vmem:[%s525] sm:$0xff] %v1344
          %1377 = vst [vmem:[%s525 + $0x8] sm:$0xff] %v1345
          %1378 = vst [vmem:[%s525 + $0x10] sm:$0xff] %v1346
          %1379 = vst [vmem:[%s525 + $0x18] sm:$0xff] %v1347
          %1380 = vst [vmem:[%s525 + $0x20] sm:$0xff] %v1348
          %1381 = vst [vmem:[%s525 + $0x28] sm:$0xff] %v1349
          %1382 = vst [vmem:[%s525 + $0x30] sm:$0xff] %v1350
          %1383 = vst [vmem:[%s525 + $0x38] sm:$0xff] %v1351
          %1384 = vst [vmem:[%s525 + $0x40] sm:$0xff] %v1352
          %1385 = vst [vmem:[%s525 + $0x48] sm:$0xff] %v1353
          %1386 = vst [vmem:[%s525 + $0x50] sm:$0xff] %v1354
          %1387 = vst [vmem:[%s525 + $0x58] sm:$0xff] %v1355
          %1388 = vst [vmem:[%s525 + $0x60] sm:$0xff] %v1356
          %1389 = vst [vmem:[%s525 + $0x68] sm:$0xff] %v1357
          %1390 = vst [vmem:[%s525 + $0x70] sm:$0xff] %v1358
          %1391 = vst [vmem:[%s525 + $0x78] sm:$0xff] %v1359
          %1392 = vst [vmem:[%s525 + $0x80] sm:$0xff] %v1360
          %1393 = vst [vmem:[%s525 + $0x88] sm:$0xff] %v1361
          %1394 = vst [vmem:[%s525 + $0x90] sm:$0xff] %v1362
          %1395 = vst [vmem:[%s525 + $0x98] sm:$0xff] %v1363
          %1396 = vst [vmem:[%s525 + $0xa0] sm:$0xff] %v1364
          %1397 = vst [vmem:[%s525 + $0xa8] sm:$0xff] %v1365
          %1398 = vst [vmem:[%s525 + $0xb0] sm:$0xff] %v1366
          %1399 = vst [vmem:[%s525 + $0xb8] sm:$0xff] %v1367
          %1400 = vst [vmem:[%s525 + $0xc0] sm:$0xff] %v1368
          %1401 = vst [vmem:[%s525 + $0xc8] sm:$0xff] %v1369
          %1402 = vst [vmem:[%s525 + $0xd0] sm:$0xff] %v1370
          %1403 = vst [vmem:[%s525 + $0xd8] sm:$0xff] %v1371
          %1404 = vst [vmem:[%s525 + $0xe0] sm:$0xff] %v1372
          %1405 = vst [vmem:[%s525 + $0xe8] sm:$0xff] %v1373
          %1406 = vst [vmem:[%s525 + $0xf0] sm:$0xff] %v1374
          %1407 = vst [vmem:[%s525 + $0xf8] sm:$0xff] %v1375
        $region63: #{no_norm_discriminator.9} parent=50 // pred_fallthru
          _
        %s1408 = smul.u32 32, %s19
        %p1409 = scmp.lt.s32.totalorder %s1408, 31
        %s1410 = scalar_select %p1409, %s1408, 31
        %p1411 = scmp.lt.s32.totalorder %s20, 0
        %s1412 = scalar_select %p1411, %s20, 0
        %s1413 = sadd.s32 %s1412, %s1410
        %s1414 = smul.addr %s1413, 8
        %s1415 = scalar_lea.vmem %s3, %s1414
        // Predicated region
        $region64: #{no_norm_discriminator.9} parent=50 // pred_check
          %p1416 = pneg %p135
        $region65: #{no_norm_discriminator.9} parent=50 // pred_check_branch
          %1418 = sbr.rel (%p1416) target = $region67
        $region66: #{no_norm_discriminator.9} parent=50 // pred_region
          %s1419 = smul.u32 32, %s19
        $region67: #{no_norm_discriminator.9} parent=50 // pred_fallthru
          _
        // Predicated region
        $region68: #{no_norm_discriminator.9} parent=50 // pred_check
          %p1420 = pneg %p135
        $region69: #{no_norm_discriminator.9} parent=50 // pred_check_branch
          %1422 = sbr.rel (%p1420) target = $region71
        $region70: #{no_norm_discriminator.9} parent=50 // pred_region
          %s1423 = smul.u32 32, %s19
          %p1424 = scmp.lt.s32.totalorder %s1423, 31
          %s1425 = scalar_select %p1424, %s1423, 31
          %p1426 = scmp.lt.s32.totalorder %s20, 0
          %s1427 = scalar_select %p1426, %s20, 0
          %s1428 = sadd.s32 %s1427, %s1425
          %s1429 = smul.addr %s1428, 8
          %s1430 = scalar_lea.vmem %s3, %s1429
        $region71: #{no_norm_discriminator.9} parent=50 // pred_fallthru
          _
      $region51: #{no_norm_discriminator.9} parent=5 // pred_fallthru
        _
      %p1431 = scmp.le.s32.totalorder 2, %s9
      // Predicated region
      $region72: #{no_norm_discriminator.9} parent=5 // pred_check
        %p1432 = pneg %p1431
      $region73: #{no_norm_discriminator.9} parent=5 // pred_check_branch
        %1434 = sbr.rel (%p1432) target = $region75
      $region74: #{no_norm_discriminator.9} parent=5 // pred_region
        %s1435 = ssub.s32 %s9, 2
      $region75: #{no_norm_discriminator.9} parent=5 // pred_fallthru
        _
    $region6: #{no_norm_discriminator.9} parent=1 // loop_footer
      %s13 = sadd.s32 1, %s9
    $region7: #{no_norm_discriminator.9} parent=1 // loop_footer_branch
      %8 = sbr.rel target = $region3
    $region8: #{no_norm_discriminator.9} parent=1 // loop_exit
      _

</llo_original>
